<compile_context>
chip_gen: v6e
topology: v6e:2x2x1
jax: 0.10.0
libtpu: 0.0.40
codegen_flags: <defaults>
</compile_context>

<pallas_src>
import math

import jax
import jax.numpy as jnp
from jax.experimental import pallas as pl
from jax.experimental.pallas import tpu as pltpu

# ---- small, deterministic hyper-parameters consistent with the module ----
TS      = 4            # config.trans_size
L       = TS * TS      # tokens per stream (16)
LP1     = L + 1        # +1 sos/pad position (17)
T       = 2 * LP1      # full sequence length (cond + target) = 34
TP      = 40           # sequence padded to a sublane multiple (8 | 40)
D       = 32           # n_embd
H       = 2            # n_head
HD      = D // H       # head dim (16)
N_LAYER = 2
VOCAB_C = 32
VOCAB_Z = 48
V_PAD   = 128          # lane-dense padded head width (>= VOCAB_C + VOCAB_Z)
LN_EPS  = 1e-5
NEG_INF = -1e9


# ---------------------------------------------------------------------------
# Fused forward kernel: N transformer blocks (LN -> masked MHA -> LN -> MLP)
# + final LN + fused vocab heads, all batch-flattened into matmul rows.
# ---------------------------------------------------------------------------
def fused_forward_kernel(x_ref, bias_ref, wattn_ref, wfc1_ref, wfc2_ref,
                         bmisc_ref, lnvec_ref, headw_ref, headb_ref, lnf_ref,
                         out_ref):
    B = bias_ref.shape[0]
    scale = 1.0 / math.sqrt(HD)

    def layer_norm(y, g, b):
        mu = jnp.mean(y, axis=-1, keepdims=True)
        var = jnp.mean(jnp.square(y - mu), axis=-1, keepdims=True)
        return (y - mu) * jax.lax.rsqrt(var + LN_EPS) * g + b

    x = x_ref[...]                                        # (B*TP, D) f32

    for lyr in range(N_LAYER):                            # static unroll (2 layers)
        wa = wattn_ref[lyr]                               # (D, 4D) bf16: [Wq|Wk|Wv|Wp(rows=heads)]
        w1 = wfc1_ref[lyr]                                # (D, 4D) bf16
        w2 = wfc2_ref[lyr]                                # (4D, D) bf16
        bm = bmisc_ref[lyr]                               # (3, 4D) f32: [bq|bk|bv|bp], b1, [b2|0]
        lv = lnvec_ref[lyr]                               # (4, D)  f32: ln1_g, ln1_b, ln2_g, ln2_b

        # ---- masked multi-head attention (QKV batched over all rows) --------
        h = layer_norm(x, lv[0:1, :], lv[1:2, :])
        qkv = (jnp.dot(h.astype(jnp.bfloat16), wa[:, 0:3 * D],
                       preferred_element_type=jnp.float32)
               + bm[0:1, 0:3 * D])                        # (B*TP, 3D) f32

        attn_rows = []
        for b in range(B):                                # static unroll (tiny batch)
            bias_b = bias_ref[b]                          # (TP, TP) additive bias, f32
            acc = None
            for hh in range(H):                           # static unroll over heads
                q = qkv[b * TP:(b + 1) * TP, hh * HD:(hh + 1) * HD]
                k = qkv[b * TP:(b + 1) * TP, D + hh * HD:D + (hh + 1) * HD]
                v = qkv[b * TP:(b + 1) * TP, 2 * D + hh * HD:2 * D + (hh + 1) * HD]
                s = jax.lax.dot_general(
                    q.astype(jnp.bfloat16), k.astype(jnp.bfloat16),
                    (((1,), (1,)), ((), ())),
                    preferred_element_type=jnp.float32)   # (TP, TP)
                s = s * scale + bias_b                    # masked_fill(mask==0, -inf)
                s = s - jnp.max(s, axis=-1, keepdims=True)
                p = jnp.exp(s)
                p = p / jnp.sum(p, axis=-1, keepdims=True)      # exact softmax divide
                ctx = jnp.dot(p.astype(jnp.bfloat16), v.astype(jnp.bfloat16),
                              preferred_element_type=jnp.float32)     # (TP, HD)
                # per-head project-and-accumulate (== concat(heads) @ Wproj)
                proj = jnp.dot(ctx.astype(jnp.bfloat16),
                               wa[hh * HD:(hh + 1) * HD, 3 * D:4 * D],
                               preferred_element_type=jnp.float32)    # (TP, D)
                acc = proj if acc is None else acc + proj
            attn_rows.append(acc)
        attn = jnp.concatenate(attn_rows, axis=0) + bm[0:1, 3 * D:4 * D]   # (B*TP, D)
        x = x + attn

        # ---- MLP (batched over all rows) -------------------------------------
        h2 = layer_norm(x, lv[2:3, :], lv[3:4, :])
        u = (jnp.dot(h2.astype(jnp.bfloat16), w1,
                     preferred_element_type=jnp.float32) + bm[1:2, :])     # (B*TP, 4D)
        # tanh-approximate GELU (f32)
        g = 0.5 * u * (1.0 + jnp.tanh(0.7978845608028654 * (u + 0.044715 * u * u * u)))
        mlp = (jnp.dot(g.astype(jnp.bfloat16), w2,
                       preferred_element_type=jnp.float32) + bm[2:3, 0:D])
        x = x + mlp

    # ---- final LN + fused (lane-dense, 128-wide) vocab heads -----------------
    lnf = lnf_ref[...]                                   # (2, D) f32
    xn = layer_norm(x, lnf[0:1, :], lnf[1:2, :])
    out_ref[...] = (jnp.dot(xn.astype(jnp.bfloat16), headw_ref[...],
                            preferred_element_type=jnp.float32)
                    + headb_ref[...])                    # (B*TP, 128) f32


# ---------------------------------------------------------------------------
# pallas_call plumbing
# ---------------------------------------------------------------------------
def _vmem_spec():
    return pl.BlockSpec(memory_space=pltpu.MemorySpace.VMEM)


def run_fused_forward(x_flat, bias, packed):
    args = (x_flat, bias,
            packed['w_attn'], packed['w_fc1'], packed['w_fc2'],
            packed['b_misc'], packed['lnvec'],
            packed['head_w'], packed['head_b'], packed['lnf'])
    BT = x_flat.shape[0]
    B = bias.shape[0]

    # advisory cost estimate for the XLA scheduler
    flops_layer = (2 * BT * D * 3 * D                       # fused QKV projection
                   + B * H * (2 * 2 * TP * TP * HD          # scores + P@V
                              + 2 * TP * HD * D)            # per-head output proj
                   + 2 * 2 * BT * D * 4 * D)                # fc1 + fc2
    flops = N_LAYER * flops_layer + 2 * BT * D * V_PAD      # + vocab heads
    transc = N_LAYER * (B * H * TP * TP + BT * 4 * D)       # exp + tanh
    bytes_accessed = int(sum(int(a.size) * a.dtype.itemsize for a in args)
                         + BT * V_PAD * 4)

    return pl.pallas_call(
        fused_forward_kernel,
        out_shape=jax.ShapeDtypeStruct((BT, V_PAD), jnp.float32),
        in_specs=[_vmem_spec() for _ in args],
        out_specs=_vmem_spec(),
        cost_estimate=pl.CostEstimate(flops=int(flops),
                                      transcendentals=int(transc),
                                      bytes_accessed=bytes_accessed),
    )(*args)


# ---------------------------------------------------------------------------
# build_mask + mc blend -> additive attention bias (plain-JAX, hoisted out of
# the kernel per performance review).  Mirrors GETransformer.build_mask.
# ---------------------------------------------------------------------------
def build_trans_bias(mask, mc, B):
    m = 1.0 - mask.reshape(B, 1, L).astype(jnp.float32)                 # (B,1,L)
    pad = jnp.ones((B, 1, 1), jnp.float32)
    m = jnp.concatenate([pad, m], axis=2)                               # (B,1,L+1)
    m_t = jnp.tile(jnp.transpose(m, (0, 2, 1)), (1, 1, LP1))            # (B,L+1,L+1)
    m_r = jnp.tile(m, (1, LP1, 1))                                      # (B,L+1,L+1)
    m_t = m_t * m_r + (1.0 - m_t)
    tril = jnp.tril(jnp.ones((LP1, LP1), jnp.float32))
    M = jnp.clip(m_r + tril * m_t, 0.0, 1.0)                            # torch.clamp(.,0,1)
    ones = jnp.ones_like(M)
    zeros = jnp.zeros_like(M)
    plm = jnp.concatenate([jnp.concatenate([ones, zeros], axis=2),
                           jnp.concatenate([ones, M], axis=2)], axis=1)       # (B,T,T)
    if mc is None:
        trans_mask = plm                                                # mc=None path
    else:
        tril_b = jnp.broadcast_to(tril, M.shape)
        lm = jnp.concatenate([jnp.concatenate([ones, zeros], axis=2),
                              jnp.concatenate([ones, tril_b], axis=2)], axis=1)
        mcr = mc.reshape(B, 1, 1).astype(jnp.float32)
        trans_mask = lm * mcr + plm * (1.0 - mcr)
    bias = jnp.where(trans_mask > 0.0, 0.0, NEG_INF)
    # pad to (B, TP, TP): padded key columns must be NEG_INF; padded query rows
    # are discarded by the wrapper slice, NEG_INF there keeps softmax finite.
    bias = jnp.pad(bias, ((0, 0), (0, TP - T), (0, TP - T)),
                   constant_values=NEG_INF)
    return bias


def ge_transformer_forward(packed, z_indices, c_indices, mask, mc=None):
    """Mirrors GETransformer.forward(z_indices, c_indices, mask, mc)."""
    B = z_indices.shape[0]
    bias = build_trans_bias(mask, mc, B)                                # (B, TP, TP)

    # token embeddings + sos + positional embedding (plain-JAX glue)
    tok_c = jnp.concatenate(
        [jnp.broadcast_to(packed['sos_c'], (B, 1, D)), packed['c_emb'][c_indices]], axis=1)
    tok_z = jnp.concatenate(
        [jnp.broadcast_to(packed['sos_z'], (B, 1, D)), packed['z_emb'][z_indices]], axis=1)
    x = (jnp.concatenate([tok_c, tok_z], axis=1) + packed['pos_emb']).astype(jnp.float32)
    x = jnp.pad(x, ((0, 0), (0, TP - T), (0, 0)))                       # (B, TP, D)

    out = run_fused_forward(x.reshape(B * TP, D), bias, packed)         # (B*TP, 128)
    out = out.reshape(B, TP, V_PAD)
    logits_c = out[:, :LP1, :VOCAB_C]                                   # [B, L+1, VOCAB_C]
    logits_z = out[:, LP1:T, VOCAB_C:VOCAB_C + VOCAB_Z]                 # [B, L+1, VOCAB_Z]
    return logits_c, logits_z


# ---------------------------------------------------------------------------
# Deterministic synthetic parameters (+ packing into contiguous slabs)
# ---------------------------------------------------------------------------
def init_params(key):
    ks = jax.random.split(key, 64)
    it = iter(ks)

    def nrm(shape, scale=0.02):
        return (scale * jax.random.normal(next(it), shape)).astype(jnp.float32)

    params = {
        'c_emb': nrm((VOCAB_C, D)),
        'z_emb': nrm((VOCAB_Z, D)),
        'sos_c': nrm((1, 1, D)),
        'sos_z': nrm((1, 1, D)),
        'pos_emb': nrm((1, T, D)),
        'lnf_g': jnp.ones((1, D), jnp.float32),
        'lnf_b': jnp.zeros((1, D), jnp.float32),
        'head_c_w': nrm((D, VOCAB_C)),
        'head_c_b': jnp.zeros((1, VOCAB_C), jnp.float32),
        'head_z_w': nrm((D, VOCAB_Z)),
        'head_z_b': jnp.zeros((1, VOCAB_Z), jnp.float32),
        'layers': [],
    }
    for _ in range(N_LAYER):
        params['layers'].append({
            'ln1_g': jnp.ones((1, D), jnp.float32),
            'ln1_b': jnp.zeros((1, D), jnp.float32),
            'wq': nrm((H, D, HD)), 'bq': jnp.zeros((H, 1, HD), jnp.float32),
            'wk': nrm((H, D, HD)), 'bk': jnp.zeros((H, 1, HD), jnp.float32),
            'wv': nrm((H, D, HD)), 'bv': jnp.zeros((H, 1, HD), jnp.float32),
            'wp': nrm((H, HD, D)), 'bp': jnp.zeros((1, D), jnp.float32),
            'ln2_g': jnp.ones((1, D), jnp.float32),
            'ln2_b': jnp.zeros((1, D), jnp.float32),
            'w1': nrm((D, 4 * D)), 'b1': jnp.zeros((1, 4 * D), jnp.float32),
            'w2': nrm((4 * D, D)), 'b2': jnp.zeros((1, D), jnp.float32),
        })
    return params


def pack_params(params):
    """Pack per-layer weights into contiguous VMEM-friendly slabs (weights bf16)."""
    def fuse_heads_cols(w):            # (H, D, HD) -> (D, H*HD), head-major columns
        return jnp.transpose(w, (1, 0, 2)).reshape(D, H * HD)

    w_attn, w_fc1, w_fc2, b_misc, lnvec = [], [], [], [], []
    for lp in params['layers']:
        wq = fuse_heads_cols(lp['wq'])
        wk = fuse_heads_cols(lp['wk'])
        wv = fuse_heads_cols(lp['wv'])
        wproj = lp['wp'].reshape(H * HD, D)                      # rows = concat(heads)
        w_attn.append(jnp.concatenate([wq, wk, wv, wproj], axis=1)
                      .astype(jnp.bfloat16))                     # (D, 4D) bf16
        w_fc1.append(lp['w1'].astype(jnp.bfloat16))              # (D, 4D) bf16
        w_fc2.append(lp['w2'].astype(jnp.bfloat16))              # (4D, D) bf16

        bq = lp['bq'].reshape(1, H * HD)
        bk = lp['bk'].reshape(1, H * HD)
        bv = lp['bv'].reshape(1, H * HD)
        row0 = jnp.concatenate([bq, bk, bv, lp['bp']], axis=1)           # (1, 4D)
        row1 = lp['b1']                                                  # (1, 4D)
        row2 = jnp.concatenate([lp['b2'],
                                jnp.zeros((1, 3 * D), jnp.float32)], axis=1)
        b_misc.append(jnp.concatenate([row0, row1, row2], axis=0))       # (3, 4D) f32
        lnvec.append(jnp.concatenate(
            [lp['ln1_g'], lp['ln1_b'], lp['ln2_g'], lp['ln2_b']], axis=0))  # (4, D) f32

    pad = V_PAD - VOCAB_C - VOCAB_Z
    head_w = jnp.concatenate(
        [params['head_c_w'], params['head_z_w'], jnp.zeros((D, pad), jnp.float32)], axis=1)
    head_b = jnp.concatenate(
        [params['head_c_b'], params['head_z_b'], jnp.zeros((1, pad), jnp.float32)], axis=1)

    return {
        'c_emb': params['c_emb'], 'z_emb': params['z_emb'],
        'sos_c': params['sos_c'], 'sos_z': params['sos_z'],
        'pos_emb': params['pos_emb'],
        'w_attn': jnp.stack(w_attn),            # (N_LAYER, D, 4D)   bf16
        'w_fc1': jnp.stack(w_fc1),              # (N_LAYER, D, 4D)   bf16
        'w_fc2': jnp.stack(w_fc2),              # (N_LAYER, 4D, D)   bf16
        'b_misc': jnp.stack(b_misc),            # (N_LAYER, 3, 4D)   f32
        'lnvec': jnp.stack(lnvec),              # (N_LAYER, 4, D)    f32
        'head_w': head_w.astype(jnp.bfloat16),  # (D, 128)           bf16
        'head_b': head_b,                       # (1, 128)           f32
        'lnf': jnp.concatenate([params['lnf_g'], params['lnf_b']], axis=0),  # (2, D) f32
    }


if __name__ == "__main__":
    key = jax.random.PRNGKey(0)
    kp, kz, kc, km, kmc = jax.random.split(key, 5)
    packed = pack_params(init_params(kp))

    B = 2
    z_indices = jax.random.randint(kz, (B, L), 0, VOCAB_Z, dtype=jnp.int32)
    c_indices = jax.random.randint(kc, (B, L), 0, VOCAB_C, dtype=jnp.int32)
    # pooled pixel mask (NCHW): [B, 1, TS, TS] of {0, 1}
    mask = (jax.random.uniform(km, (B, 1, TS, TS)) > 0.5).astype(jnp.float32)
    mc = jax.random.bernoulli(kmc, 0.5, (B,)).astype(jnp.float32)

    fwd = jax.jit(ge_transformer_forward)
    logits_c, logits_z = fwd(packed, z_indices, c_indices, mask, mc)
    jax.block_until_ready((logits_c, logits_z))

    assert logits_c.shape == (B, LP1, VOCAB_C)
    assert logits_z.shape == (B, LP1, VOCAB_Z)
    assert bool(jnp.all(jnp.isfinite(logits_c))) and bool(jnp.all(jnp.isfinite(logits_z)))
    print("KERNEL_OK")
</pallas_src>

<mosaic_0001>
module attributes {stable_mosaic.version = 11 : i64} {
  func.func @fused_forward_kernel(%arg0: memref<80x32xf32, #tpu.memory_space<vmem>>, %arg1: memref<2x40x40xf32, #tpu.memory_space<vmem>>, %arg2: memref<2x32x128xbf16, #tpu.memory_space<vmem>>, %arg3: memref<2x32x128xbf16, #tpu.memory_space<vmem>>, %arg4: memref<2x128x32xbf16, #tpu.memory_space<vmem>>, %arg5: memref<2x3x128xf32, #tpu.memory_space<vmem>>, %arg6: memref<2x4x32xf32, #tpu.memory_space<vmem>>, %arg7: memref<32x128xbf16, #tpu.memory_space<vmem>>, %arg8: memref<1x128xf32, #tpu.memory_space<vmem>>, %arg9: memref<2x32xf32, #tpu.memory_space<vmem>>, %arg10: memref<80x128xf32, #tpu.memory_space<vmem>>) attributes {dimension_semantics = [], scalar_prefetch = 0 : i64, scratch_operands = 0 : i64, tpu.core_type = #tpu.core_type<tc>} {
    %c0 = arith.constant 0 : index
    %c0_0 = arith.constant 0 : index
    %0 = vector.load %arg0[%c0, %c0_0] : memref<80x32xf32, #tpu.memory_space<vmem>>, vector<80x32xf32>
    %c0_1 = arith.constant 0 : index
    %c0_2 = arith.constant 0 : index
    %c0_3 = arith.constant 0 : index
    %1 = vector.load %arg2[%c0_1, %c0_2, %c0_3] : memref<2x32x128xbf16, #tpu.memory_space<vmem>>, vector<1x32x128xbf16>
    %2 = vector.shape_cast %1 : vector<1x32x128xbf16> to vector<32x128xbf16>
    %c0_4 = arith.constant 0 : index
    %c0_5 = arith.constant 0 : index
    %c0_6 = arith.constant 0 : index
    %3 = vector.load %arg3[%c0_4, %c0_5, %c0_6] : memref<2x32x128xbf16, #tpu.memory_space<vmem>>, vector<1x32x128xbf16>
    %4 = vector.shape_cast %3 : vector<1x32x128xbf16> to vector<32x128xbf16>
    %c0_7 = arith.constant 0 : index
    %c0_8 = arith.constant 0 : index
    %c0_9 = arith.constant 0 : index
    %5 = vector.load %arg4[%c0_7, %c0_8, %c0_9] : memref<2x128x32xbf16, #tpu.memory_space<vmem>>, vector<1x128x32xbf16>
    %6 = vector.shape_cast %5 : vector<1x128x32xbf16> to vector<128x32xbf16>
    %c0_10 = arith.constant 0 : index
    %c0_11 = arith.constant 0 : index
    %c0_12 = arith.constant 0 : index
    %7 = vector.load %arg5[%c0_10, %c0_11, %c0_12] : memref<2x3x128xf32, #tpu.memory_space<vmem>>, vector<1x3x128xf32>
    %8 = vector.shape_cast %7 : vector<1x3x128xf32> to vector<3x128xf32>
    %c0_13 = arith.constant 0 : index
    %c0_14 = arith.constant 0 : index
    %c0_15 = arith.constant 0 : index
    %9 = vector.load %arg6[%c0_13, %c0_14, %c0_15] : memref<2x4x32xf32, #tpu.memory_space<vmem>>, vector<1x4x32xf32>
    %10 = vector.shape_cast %9 : vector<1x4x32xf32> to vector<4x32xf32>
    %11 = vector.extract_strided_slice %10 {offsets = [0, 0], sizes = [1, 32], strides = [1, 1]} : vector<4x32xf32> to vector<1x32xf32>
    %12 = vector.extract_strided_slice %10 {offsets = [1, 0], sizes = [1, 32], strides = [1, 1]} : vector<4x32xf32> to vector<1x32xf32>
    %cst = arith.constant dense<0.000000e+00> : vector<80xf32>
    %13 = vector.multi_reduction <add>, %0, %cst [1] : vector<80x32xf32> to vector<80xf32>
    %14 = vector.shape_cast %13 : vector<80xf32> to vector<80x1xf32>
    %cst_16 = arith.constant 3.200000e+01 : f32
    %15 = vector.broadcast %cst_16 : f32 to vector<80x1xf32>
    %16 = arith.divf %14, %15 : vector<80x1xf32>
    %17 = vector.broadcast %16 : vector<80x1xf32> to vector<80x32xf32>
    %18 = arith.subf %0, %17 : vector<80x32xf32>
    %19 = arith.mulf %18, %18 : vector<80x32xf32>
    %cst_17 = arith.constant dense<0.000000e+00> : vector<80xf32>
    %20 = vector.multi_reduction <add>, %19, %cst_17 [1] : vector<80x32xf32> to vector<80xf32>
    %21 = vector.shape_cast %20 : vector<80xf32> to vector<80x1xf32>
    %cst_18 = arith.constant 3.200000e+01 : f32
    %22 = vector.broadcast %cst_18 : f32 to vector<80x1xf32>
    %23 = arith.divf %21, %22 : vector<80x1xf32>
    %24 = vector.broadcast %16 : vector<80x1xf32> to vector<80x32xf32>
    %25 = arith.subf %0, %24 : vector<80x32xf32>
    %cst_19 = arith.constant 9.99999974E-6 : f32
    %26 = vector.broadcast %cst_19 : f32 to vector<80x1xf32>
    %27 = arith.addf %23, %26 : vector<80x1xf32>
    %28 = math.rsqrt %27 : vector<80x1xf32>
    %29 = vector.broadcast %28 : vector<80x1xf32> to vector<80x32xf32>
    %30 = arith.mulf %25, %29 : vector<80x32xf32>
    %31 = vector.broadcast %11 : vector<1x32xf32> to vector<80x32xf32>
    %32 = arith.mulf %30, %31 : vector<80x32xf32>
    %33 = vector.broadcast %12 : vector<1x32xf32> to vector<80x32xf32>
    %34 = arith.addf %32, %33 : vector<80x32xf32>
    %35 = arith.truncf %34 : vector<80x32xf32> to vector<80x32xbf16>
    %36 = vector.extract_strided_slice %2 {offsets = [0, 0], sizes = [32, 96], strides = [1, 1]} : vector<32x128xbf16> to vector<32x96xbf16>
    %cst_20 = arith.constant dense<0.000000e+00> : vector<80x96xf32>
    %37 = tpu.matmul %35, %36, %cst_20 {dimension_numbers = #tpu.dot_dimension_numbers<[1], [0], [0], [1], [0, 0, 1, 1], [], []>} : vector<80x32xbf16>, vector<32x96xbf16>, vector<80x96xf32> -> vector<80x96xf32>
    %38 = vector.extract_strided_slice %8 {offsets = [0, 0], sizes = [1, 96], strides = [1, 1]} : vector<3x128xf32> to vector<1x96xf32>
    %39 = vector.broadcast %38 : vector<1x96xf32> to vector<80x96xf32>
    %40 = arith.addf %37, %39 : vector<80x96xf32>
    %c0_21 = arith.constant 0 : index
    %c0_22 = arith.constant 0 : index
    %c0_23 = arith.constant 0 : index
    %41 = vector.load %arg1[%c0_21, %c0_22, %c0_23] : memref<2x40x40xf32, #tpu.memory_space<vmem>>, vector<1x40x40xf32>
    %42 = vector.shape_cast %41 : vector<1x40x40xf32> to vector<40x40xf32>
    %43 = vector.extract_strided_slice %40 {offsets = [0, 0], sizes = [40, 16], strides = [1, 1]} : vector<80x96xf32> to vector<40x16xf32>
    %44 = vector.extract_strided_slice %40 {offsets = [0, 32], sizes = [40, 16], strides = [1, 1]} : vector<80x96xf32> to vector<40x16xf32>
    %45 = vector.extract_strided_slice %40 {offsets = [0, 64], sizes = [40, 16], strides = [1, 1]} : vector<80x96xf32> to vector<40x16xf32>
    %46 = arith.truncf %43 : vector<40x16xf32> to vector<40x16xbf16>
    %47 = arith.truncf %44 : vector<40x16xf32> to vector<40x16xbf16>
    %cst_24 = arith.constant dense<0.000000e+00> : vector<40x40xf32>
    %48 = tpu.matmul %46, %47, %cst_24 {dimension_numbers = #tpu.dot_dimension_numbers<[1], [1], [0], [0], [0, 0, 1, 0], [], []>} : vector<40x16xbf16>, vector<40x16xbf16>, vector<40x40xf32> -> vector<40x40xf32>
    %cst_25 = arith.constant 2.500000e-01 : f32
    %49 = vector.broadcast %cst_25 : f32 to vector<40x40xf32>
    %50 = arith.mulf %48, %49 : vector<40x40xf32>
    %51 = arith.addf %50, %42 : vector<40x40xf32>
    %cst_26 = arith.constant dense<0xFF800000> : vector<40xf32>
    %52 = vector.multi_reduction <maximumf>, %51, %cst_26 [1] : vector<40x40xf32> to vector<40xf32>
    %53 = vector.shape_cast %52 : vector<40xf32> to vector<40x1xf32>
    %54 = vector.broadcast %53 : vector<40x1xf32> to vector<40x40xf32>
    %55 = arith.subf %51, %54 : vector<40x40xf32>
    %56 = math.exp %55 : vector<40x40xf32>
    %cst_27 = arith.constant dense<0.000000e+00> : vector<40xf32>
    %57 = vector.multi_reduction <add>, %56, %cst_27 [1] : vector<40x40xf32> to vector<40xf32>
    %58 = vector.shape_cast %57 : vector<40xf32> to vector<40x1xf32>
    %59 = vector.broadcast %58 : vector<40x1xf32> to vector<40x40xf32>
    %60 = arith.divf %56, %59 : vector<40x40xf32>
    %61 = arith.truncf %60 : vector<40x40xf32> to vector<40x40xbf16>
    %62 = arith.truncf %45 : vector<40x16xf32> to vector<40x16xbf16>
    %cst_28 = arith.constant dense<0.000000e+00> : vector<40x16xf32>
    %63 = tpu.matmul %61, %62, %cst_28 {dimension_numbers = #tpu.dot_dimension_numbers<[1], [0], [0], [1], [0, 0, 1, 1], [], []>} : vector<40x40xbf16>, vector<40x16xbf16>, vector<40x16xf32> -> vector<40x16xf32>
    %64 = arith.truncf %63 : vector<40x16xf32> to vector<40x16xbf16>
    %65 = vector.extract_strided_slice %2 {offsets = [0, 96], sizes = [16, 32], strides = [1, 1]} : vector<32x128xbf16> to vector<16x32xbf16>
    %cst_29 = arith.constant dense<0.000000e+00> : vector<40x32xf32>
    %66 = tpu.matmul %64, %65, %cst_29 {dimension_numbers = #tpu.dot_dimension_numbers<[1], [0], [0], [1], [0, 0, 1, 1], [], []>} : vector<40x16xbf16>, vector<16x32xbf16>, vector<40x32xf32> -> vector<40x32xf32>
    %67 = vector.extract_strided_slice %40 {offsets = [0, 16], sizes = [40, 16], strides = [1, 1]} : vector<80x96xf32> to vector<40x16xf32>
    %68 = vector.extract_strided_slice %40 {offsets = [0, 48], sizes = [40, 16], strides = [1, 1]} : vector<80x96xf32> to vector<40x16xf32>
    %69 = vector.extract_strided_slice %40 {offsets = [0, 80], sizes = [40, 16], strides = [1, 1]} : vector<80x96xf32> to vector<40x16xf32>
    %70 = arith.truncf %67 : vector<40x16xf32> to vector<40x16xbf16>
    %71 = arith.truncf %68 : vector<40x16xf32> to vector<40x16xbf16>
    %cst_30 = arith.constant dense<0.000000e+00> : vector<40x40xf32>
    %72 = tpu.matmul %70, %71, %cst_30 {dimension_numbers = #tpu.dot_dimension_numbers<[1], [1], [0], [0], [0, 0, 1, 0], [], []>} : vector<40x16xbf16>, vector<40x16xbf16>, vector<40x40xf32> -> vector<40x40xf32>
    %cst_31 = arith.constant 2.500000e-01 : f32
    %73 = vector.broadcast %cst_31 : f32 to vector<40x40xf32>
    %74 = arith.mulf %72, %73 : vector<40x40xf32>
    %75 = arith.addf %74, %42 : vector<40x40xf32>
    %cst_32 = arith.constant dense<0xFF800000> : vector<40xf32>
    %76 = vector.multi_reduction <maximumf>, %75, %cst_32 [1] : vector<40x40xf32> to vector<40xf32>
    %77 = vector.shape_cast %76 : vector<40xf32> to vector<40x1xf32>
    %78 = vector.broadcast %77 : vector<40x1xf32> to vector<40x40xf32>
    %79 = arith.subf %75, %78 : vector<40x40xf32>
    %80 = math.exp %79 : vector<40x40xf32>
    %cst_33 = arith.constant dense<0.000000e+00> : vector<40xf32>
    %81 = vector.multi_reduction <add>, %80, %cst_33 [1] : vector<40x40xf32> to vector<40xf32>
    %82 = vector.shape_cast %81 : vector<40xf32> to vector<40x1xf32>
    %83 = vector.broadcast %82 : vector<40x1xf32> to vector<40x40xf32>
    %84 = arith.divf %80, %83 : vector<40x40xf32>
    %85 = arith.truncf %84 : vector<40x40xf32> to vector<40x40xbf16>
    %86 = arith.truncf %69 : vector<40x16xf32> to vector<40x16xbf16>
    %cst_34 = arith.constant dense<0.000000e+00> : vector<40x16xf32>
    %87 = tpu.matmul %85, %86, %cst_34 {dimension_numbers = #tpu.dot_dimension_numbers<[1], [0], [0], [1], [0, 0, 1, 1], [], []>} : vector<40x40xbf16>, vector<40x16xbf16>, vector<40x16xf32> -> vector<40x16xf32>
    %88 = arith.truncf %87 : vector<40x16xf32> to vector<40x16xbf16>
    %89 = vector.extract_strided_slice %2 {offsets = [16, 96], sizes = [16, 32], strides = [1, 1]} : vector<32x128xbf16> to vector<16x32xbf16>
    %cst_35 = arith.constant dense<0.000000e+00> : vector<40x32xf32>
    %90 = tpu.matmul %88, %89, %cst_35 {dimension_numbers = #tpu.dot_dimension_numbers<[1], [0], [0], [1], [0, 0, 1, 1], [], []>} : vector<40x16xbf16>, vector<16x32xbf16>, vector<40x32xf32> -> vector<40x32xf32>
    %91 = arith.addf %66, %90 : vector<40x32xf32>
    %c1 = arith.constant 1 : index
    %c0_36 = arith.constant 0 : index
    %c0_37 = arith.constant 0 : index
    %92 = vector.load %arg1[%c1, %c0_36, %c0_37] : memref<2x40x40xf32, #tpu.memory_space<vmem>>, vector<1x40x40xf32>
    %93 = vector.shape_cast %92 : vector<1x40x40xf32> to vector<40x40xf32>
    %94 = vector.extract_strided_slice %40 {offsets = [40, 0], sizes = [40, 16], strides = [1, 1]} : vector<80x96xf32> to vector<40x16xf32>
    %95 = vector.extract_strided_slice %40 {offsets = [40, 32], sizes = [40, 16], strides = [1, 1]} : vector<80x96xf32> to vector<40x16xf32>
    %96 = vector.extract_strided_slice %40 {offsets = [40, 64], sizes = [40, 16], strides = [1, 1]} : vector<80x96xf32> to vector<40x16xf32>
    %97 = arith.truncf %94 : vector<40x16xf32> to vector<40x16xbf16>
    %98 = arith.truncf %95 : vector<40x16xf32> to vector<40x16xbf16>
    %cst_38 = arith.constant dense<0.000000e+00> : vector<40x40xf32>
    %99 = tpu.matmul %97, %98, %cst_38 {dimension_numbers = #tpu.dot_dimension_numbers<[1], [1], [0], [0], [0, 0, 1, 0], [], []>} : vector<40x16xbf16>, vector<40x16xbf16>, vector<40x40xf32> -> vector<40x40xf32>
    %cst_39 = arith.constant 2.500000e-01 : f32
    %100 = vector.broadcast %cst_39 : f32 to vector<40x40xf32>
    %101 = arith.mulf %99, %100 : vector<40x40xf32>
    %102 = arith.addf %101, %93 : vector<40x40xf32>
    %cst_40 = arith.constant dense<0xFF800000> : vector<40xf32>
    %103 = vector.multi_reduction <maximumf>, %102, %cst_40 [1] : vector<40x40xf32> to vector<40xf32>
    %104 = vector.shape_cast %103 : vector<40xf32> to vector<40x1xf32>
    %105 = vector.broadcast %104 : vector<40x1xf32> to vector<40x40xf32>
    %106 = arith.subf %102, %105 : vector<40x40xf32>
    %107 = math.exp %106 : vector<40x40xf32>
    %cst_41 = arith.constant dense<0.000000e+00> : vector<40xf32>
    %108 = vector.multi_reduction <add>, %107, %cst_41 [1] : vector<40x40xf32> to vector<40xf32>
    %109 = vector.shape_cast %108 : vector<40xf32> to vector<40x1xf32>
    %110 = vector.broadcast %109 : vector<40x1xf32> to vector<40x40xf32>
    %111 = arith.divf %107, %110 : vector<40x40xf32>
    %112 = arith.truncf %111 : vector<40x40xf32> to vector<40x40xbf16>
    %113 = arith.truncf %96 : vector<40x16xf32> to vector<40x16xbf16>
    %cst_42 = arith.constant dense<0.000000e+00> : vector<40x16xf32>
    %114 = tpu.matmul %112, %113, %cst_42 {dimension_numbers = #tpu.dot_dimension_numbers<[1], [0], [0], [1], [0, 0, 1, 1], [], []>} : vector<40x40xbf16>, vector<40x16xbf16>, vector<40x16xf32> -> vector<40x16xf32>
    %115 = arith.truncf %114 : vector<40x16xf32> to vector<40x16xbf16>
    %116 = vector.extract_strided_slice %2 {offsets = [0, 96], sizes = [16, 32], strides = [1, 1]} : vector<32x128xbf16> to vector<16x32xbf16>
    %cst_43 = arith.constant dense<0.000000e+00> : vector<40x32xf32>
    %117 = tpu.matmul %115, %116, %cst_43 {dimension_numbers = #tpu.dot_dimension_numbers<[1], [0], [0], [1], [0, 0, 1, 1], [], []>} : vector<40x16xbf16>, vector<16x32xbf16>, vector<40x32xf32> -> vector<40x32xf32>
    %118 = vector.extract_strided_slice %40 {offsets = [40, 16], sizes = [40, 16], strides = [1, 1]} : vector<80x96xf32> to vector<40x16xf32>
    %119 = vector.extract_strided_slice %40 {offsets = [40, 48], sizes = [40, 16], strides = [1, 1]} : vector<80x96xf32> to vector<40x16xf32>
    %120 = vector.extract_strided_slice %40 {offsets = [40, 80], sizes = [40, 16], strides = [1, 1]} : vector<80x96xf32> to vector<40x16xf32>
    %121 = arith.truncf %118 : vector<40x16xf32> to vector<40x16xbf16>
    %122 = arith.truncf %119 : vector<40x16xf32> to vector<40x16xbf16>
    %cst_44 = arith.constant dense<0.000000e+00> : vector<40x40xf32>
    %123 = tpu.matmul %121, %122, %cst_44 {dimension_numbers = #tpu.dot_dimension_numbers<[1], [1], [0], [0], [0, 0, 1, 0], [], []>} : vector<40x16xbf16>, vector<40x16xbf16>, vector<40x40xf32> -> vector<40x40xf32>
    %cst_45 = arith.constant 2.500000e-01 : f32
    %124 = vector.broadcast %cst_45 : f32 to vector<40x40xf32>
    %125 = arith.mulf %123, %124 : vector<40x40xf32>
    %126 = arith.addf %125, %93 : vector<40x40xf32>
    %cst_46 = arith.constant dense<0xFF800000> : vector<40xf32>
    %127 = vector.multi_reduction <maximumf>, %126, %cst_46 [1] : vector<40x40xf32> to vector<40xf32>
    %128 = vector.shape_cast %127 : vector<40xf32> to vector<40x1xf32>
    %129 = vector.broadcast %128 : vector<40x1xf32> to vector<40x40xf32>
    %130 = arith.subf %126, %129 : vector<40x40xf32>
    %131 = math.exp %130 : vector<40x40xf32>
    %cst_47 = arith.constant dense<0.000000e+00> : vector<40xf32>
    %132 = vector.multi_reduction <add>, %131, %cst_47 [1] : vector<40x40xf32> to vector<40xf32>
    %133 = vector.shape_cast %132 : vector<40xf32> to vector<40x1xf32>
    %134 = vector.broadcast %133 : vector<40x1xf32> to vector<40x40xf32>
    %135 = arith.divf %131, %134 : vector<40x40xf32>
    %136 = arith.truncf %135 : vector<40x40xf32> to vector<40x40xbf16>
    %137 = arith.truncf %120 : vector<40x16xf32> to vector<40x16xbf16>
    %cst_48 = arith.constant dense<0.000000e+00> : vector<40x16xf32>
    %138 = tpu.matmul %136, %137, %cst_48 {dimension_numbers = #tpu.dot_dimension_numbers<[1], [0], [0], [1], [0, 0, 1, 1], [], []>} : vector<40x40xbf16>, vector<40x16xbf16>, vector<40x16xf32> -> vector<40x16xf32>
    %139 = arith.truncf %138 : vector<40x16xf32> to vector<40x16xbf16>
    %140 = vector.extract_strided_slice %2 {offsets = [16, 96], sizes = [16, 32], strides = [1, 1]} : vector<32x128xbf16> to vector<16x32xbf16>
    %cst_49 = arith.constant dense<0.000000e+00> : vector<40x32xf32>
    %141 = tpu.matmul %139, %140, %cst_49 {dimension_numbers = #tpu.dot_dimension_numbers<[1], [0], [0], [1], [0, 0, 1, 1], [], []>} : vector<40x16xbf16>, vector<16x32xbf16>, vector<40x32xf32> -> vector<40x32xf32>
    %142 = arith.addf %117, %141 : vector<40x32xf32>
    %143 = tpu.concatenate %91, %142 in 0 : vector<40x32xf32>, vector<40x32xf32> -> vector<80x32xf32>
    %144 = vector.extract_strided_slice %8 {offsets = [0, 96], sizes = [1, 32], strides = [1, 1]} : vector<3x128xf32> to vector<1x32xf32>
    %145 = vector.broadcast %144 : vector<1x32xf32> to vector<80x32xf32>
    %146 = arith.addf %143, %145 : vector<80x32xf32>
    %147 = arith.addf %0, %146 : vector<80x32xf32>
    %148 = vector.extract_strided_slice %10 {offsets = [2, 0], sizes = [1, 32], strides = [1, 1]} : vector<4x32xf32> to vector<1x32xf32>
    %149 = vector.extract_strided_slice %10 {offsets = [3, 0], sizes = [1, 32], strides = [1, 1]} : vector<4x32xf32> to vector<1x32xf32>
    %cst_50 = arith.constant dense<0.000000e+00> : vector<80xf32>
    %150 = vector.multi_reduction <add>, %147, %cst_50 [1] : vector<80x32xf32> to vector<80xf32>
    %151 = vector.shape_cast %150 : vector<80xf32> to vector<80x1xf32>
    %cst_51 = arith.constant 3.200000e+01 : f32
    %152 = vector.broadcast %cst_51 : f32 to vector<80x1xf32>
    %153 = arith.divf %151, %152 : vector<80x1xf32>
    %154 = vector.broadcast %153 : vector<80x1xf32> to vector<80x32xf32>
    %155 = arith.subf %147, %154 : vector<80x32xf32>
    %156 = arith.mulf %155, %155 : vector<80x32xf32>
    %cst_52 = arith.constant dense<0.000000e+00> : vector<80xf32>
    %157 = vector.multi_reduction <add>, %156, %cst_52 [1] : vector<80x32xf32> to vector<80xf32>
    %158 = vector.shape_cast %157 : vector<80xf32> to vector<80x1xf32>
    %cst_53 = arith.constant 3.200000e+01 : f32
    %159 = vector.broadcast %cst_53 : f32 to vector<80x1xf32>
    %160 = arith.divf %158, %159 : vector<80x1xf32>
    %161 = vector.broadcast %153 : vector<80x1xf32> to vector<80x32xf32>
    %162 = arith.subf %147, %161 : vector<80x32xf32>
    %cst_54 = arith.constant 9.99999974E-6 : f32
    %163 = vector.broadcast %cst_54 : f32 to vector<80x1xf32>
    %164 = arith.addf %160, %163 : vector<80x1xf32>
    %165 = math.rsqrt %164 : vector<80x1xf32>
    %166 = vector.broadcast %165 : vector<80x1xf32> to vector<80x32xf32>
    %167 = arith.mulf %162, %166 : vector<80x32xf32>
    %168 = vector.broadcast %148 : vector<1x32xf32> to vector<80x32xf32>
    %169 = arith.mulf %167, %168 : vector<80x32xf32>
    %170 = vector.broadcast %149 : vector<1x32xf32> to vector<80x32xf32>
    %171 = arith.addf %169, %170 : vector<80x32xf32>
    %172 = arith.truncf %171 : vector<80x32xf32> to vector<80x32xbf16>
    %cst_55 = arith.constant dense<0.000000e+00> : vector<80x128xf32>
    %173 = tpu.matmul %172, %4, %cst_55 {dimension_numbers = #tpu.dot_dimension_numbers<[1], [0], [0], [1], [0, 0, 1, 1], [], []>} : vector<80x32xbf16>, vector<32x128xbf16>, vector<80x128xf32> -> vector<80x128xf32>
    %174 = vector.extract_strided_slice %8 {offsets = [1, 0], sizes = [1, 128], strides = [1, 1]} : vector<3x128xf32> to vector<1x128xf32>
    %175 = vector.broadcast %174 : vector<1x128xf32> to vector<80x128xf32>
    %176 = arith.addf %173, %175 : vector<80x128xf32>
    %cst_56 = arith.constant 5.000000e-01 : f32
    %177 = vector.broadcast %cst_56 : f32 to vector<80x128xf32>
    %178 = arith.mulf %177, %176 : vector<80x128xf32>
    %cst_57 = arith.constant 4.471500e-02 : f32
    %179 = vector.broadcast %cst_57 : f32 to vector<80x128xf32>
    %180 = arith.mulf %179, %176 : vector<80x128xf32>
    %181 = arith.mulf %180, %176 : vector<80x128xf32>
    %182 = arith.mulf %181, %176 : vector<80x128xf32>
    %183 = arith.addf %176, %182 : vector<80x128xf32>
    %cst_58 = arith.constant 0.797884583 : f32
    %184 = vector.broadcast %cst_58 : f32 to vector<80x128xf32>
    %185 = arith.mulf %184, %183 : vector<80x128xf32>
    %186 = math.tanh %185 : vector<80x128xf32>
    %cst_59 = arith.constant 1.000000e+00 : f32
    %187 = vector.broadcast %cst_59 : f32 to vector<80x128xf32>
    %188 = arith.addf %187, %186 : vector<80x128xf32>
    %189 = arith.mulf %178, %188 : vector<80x128xf32>
    %190 = arith.truncf %189 : vector<80x128xf32> to vector<80x128xbf16>
    %cst_60 = arith.constant dense<0.000000e+00> : vector<80x32xf32>
    %191 = tpu.matmul %190, %6, %cst_60 {dimension_numbers = #tpu.dot_dimension_numbers<[1], [0], [0], [1], [0, 0, 1, 1], [], []>} : vector<80x128xbf16>, vector<128x32xbf16>, vector<80x32xf32> -> vector<80x32xf32>
    %192 = vector.extract_strided_slice %8 {offsets = [2, 0], sizes = [1, 32], strides = [1, 1]} : vector<3x128xf32> to vector<1x32xf32>
    %193 = vector.broadcast %192 : vector<1x32xf32> to vector<80x32xf32>
    %194 = arith.addf %191, %193 : vector<80x32xf32>
    %195 = arith.addf %147, %194 : vector<80x32xf32>
    %c1_61 = arith.constant 1 : index
    %c0_62 = arith.constant 0 : index
    %c0_63 = arith.constant 0 : index
    %196 = vector.load %arg2[%c1_61, %c0_62, %c0_63] : memref<2x32x128xbf16, #tpu.memory_space<vmem>>, vector<1x32x128xbf16>
    %197 = vector.shape_cast %196 : vector<1x32x128xbf16> to vector<32x128xbf16>
    %c1_64 = arith.constant 1 : index
    %c0_65 = arith.constant 0 : index
    %c0_66 = arith.constant 0 : index
    %198 = vector.load %arg3[%c1_64, %c0_65, %c0_66] : memref<2x32x128xbf16, #tpu.memory_space<vmem>>, vector<1x32x128xbf16>
    %199 = vector.shape_cast %198 : vector<1x32x128xbf16> to vector<32x128xbf16>
    %c1_67 = arith.constant 1 : index
    %c0_68 = arith.constant 0 : index
    %c0_69 = arith.constant 0 : index
    %200 = vector.load %arg4[%c1_67, %c0_68, %c0_69] : memref<2x128x32xbf16, #tpu.memory_space<vmem>>, vector<1x128x32xbf16>
    %201 = vector.shape_cast %200 : vector<1x128x32xbf16> to vector<128x32xbf16>
    %c1_70 = arith.constant 1 : index
    %c0_71 = arith.constant 0 : index
    %c0_72 = arith.constant 0 : index
    %202 = vector.load %arg5[%c1_70, %c0_71, %c0_72] : memref<2x3x128xf32, #tpu.memory_space<vmem>>, vector<1x3x128xf32>
    %203 = vector.shape_cast %202 : vector<1x3x128xf32> to vector<3x128xf32>
    %c1_73 = arith.constant 1 : index
    %c0_74 = arith.constant 0 : index
    %c0_75 = arith.constant 0 : index
    %204 = vector.load %arg6[%c1_73, %c0_74, %c0_75] : memref<2x4x32xf32, #tpu.memory_space<vmem>>, vector<1x4x32xf32>
    %205 = vector.shape_cast %204 : vector<1x4x32xf32> to vector<4x32xf32>
    %206 = vector.extract_strided_slice %205 {offsets = [0, 0], sizes = [1, 32], strides = [1, 1]} : vector<4x32xf32> to vector<1x32xf32>
    %207 = vector.extract_strided_slice %205 {offsets = [1, 0], sizes = [1, 32], strides = [1, 1]} : vector<4x32xf32> to vector<1x32xf32>
    %cst_76 = arith.constant dense<0.000000e+00> : vector<80xf32>
    %208 = vector.multi_reduction <add>, %195, %cst_76 [1] : vector<80x32xf32> to vector<80xf32>
    %209 = vector.shape_cast %208 : vector<80xf32> to vector<80x1xf32>
    %cst_77 = arith.constant 3.200000e+01 : f32
    %210 = vector.broadcast %cst_77 : f32 to vector<80x1xf32>
    %211 = arith.divf %209, %210 : vector<80x1xf32>
    %212 = vector.broadcast %211 : vector<80x1xf32> to vector<80x32xf32>
    %213 = arith.subf %195, %212 : vector<80x32xf32>
    %214 = arith.mulf %213, %213 : vector<80x32xf32>
    %cst_78 = arith.constant dense<0.000000e+00> : vector<80xf32>
    %215 = vector.multi_reduction <add>, %214, %cst_78 [1] : vector<80x32xf32> to vector<80xf32>
    %216 = vector.shape_cast %215 : vector<80xf32> to vector<80x1xf32>
    %cst_79 = arith.constant 3.200000e+01 : f32
    %217 = vector.broadcast %cst_79 : f32 to vector<80x1xf32>
    %218 = arith.divf %216, %217 : vector<80x1xf32>
    %219 = vector.broadcast %211 : vector<80x1xf32> to vector<80x32xf32>
    %220 = arith.subf %195, %219 : vector<80x32xf32>
    %cst_80 = arith.constant 9.99999974E-6 : f32
    %221 = vector.broadcast %cst_80 : f32 to vector<80x1xf32>
    %222 = arith.addf %218, %221 : vector<80x1xf32>
    %223 = math.rsqrt %222 : vector<80x1xf32>
    %224 = vector.broadcast %223 : vector<80x1xf32> to vector<80x32xf32>
    %225 = arith.mulf %220, %224 : vector<80x32xf32>
    %226 = vector.broadcast %206 : vector<1x32xf32> to vector<80x32xf32>
    %227 = arith.mulf %225, %226 : vector<80x32xf32>
    %228 = vector.broadcast %207 : vector<1x32xf32> to vector<80x32xf32>
    %229 = arith.addf %227, %228 : vector<80x32xf32>
    %230 = arith.truncf %229 : vector<80x32xf32> to vector<80x32xbf16>
    %231 = vector.extract_strided_slice %197 {offsets = [0, 0], sizes = [32, 96], strides = [1, 1]} : vector<32x128xbf16> to vector<32x96xbf16>
    %cst_81 = arith.constant dense<0.000000e+00> : vector<80x96xf32>
    %232 = tpu.matmul %230, %231, %cst_81 {dimension_numbers = #tpu.dot_dimension_numbers<[1], [0], [0], [1], [0, 0, 1, 1], [], []>} : vector<80x32xbf16>, vector<32x96xbf16>, vector<80x96xf32> -> vector<80x96xf32>
    %233 = vector.extract_strided_slice %203 {offsets = [0, 0], sizes = [1, 96], strides = [1, 1]} : vector<3x128xf32> to vector<1x96xf32>
    %234 = vector.broadcast %233 : vector<1x96xf32> to vector<80x96xf32>
    %235 = arith.addf %232, %234 : vector<80x96xf32>
    %c0_82 = arith.constant 0 : index
    %c0_83 = arith.constant 0 : index
    %c0_84 = arith.constant 0 : index
    %236 = vector.load %arg1[%c0_82, %c0_83, %c0_84] : memref<2x40x40xf32, #tpu.memory_space<vmem>>, vector<1x40x40xf32>
    %237 = vector.shape_cast %236 : vector<1x40x40xf32> to vector<40x40xf32>
    %238 = vector.extract_strided_slice %235 {offsets = [0, 0], sizes = [40, 16], strides = [1, 1]} : vector<80x96xf32> to vector<40x16xf32>
    %239 = vector.extract_strided_slice %235 {offsets = [0, 32], sizes = [40, 16], strides = [1, 1]} : vector<80x96xf32> to vector<40x16xf32>
    %240 = vector.extract_strided_slice %235 {offsets = [0, 64], sizes = [40, 16], strides = [1, 1]} : vector<80x96xf32> to vector<40x16xf32>
    %241 = arith.truncf %238 : vector<40x16xf32> to vector<40x16xbf16>
    %242 = arith.truncf %239 : vector<40x16xf32> to vector<40x16xbf16>
    %cst_85 = arith.constant dense<0.000000e+00> : vector<40x40xf32>
    %243 = tpu.matmul %241, %242, %cst_85 {dimension_numbers = #tpu.dot_dimension_numbers<[1], [1], [0], [0], [0, 0, 1, 0], [], []>} : vector<40x16xbf16>, vector<40x16xbf16>, vector<40x40xf32> -> vector<40x40xf32>
    %cst_86 = arith.constant 2.500000e-01 : f32
    %244 = vector.broadcast %cst_86 : f32 to vector<40x40xf32>
    %245 = arith.mulf %243, %244 : vector<40x40xf32>
    %246 = arith.addf %245, %237 : vector<40x40xf32>
    %cst_87 = arith.constant dense<0xFF800000> : vector<40xf32>
    %247 = vector.multi_reduction <maximumf>, %246, %cst_87 [1] : vector<40x40xf32> to vector<40xf32>
    %248 = vector.shape_cast %247 : vector<40xf32> to vector<40x1xf32>
    %249 = vector.broadcast %248 : vector<40x1xf32> to vector<40x40xf32>
    %250 = arith.subf %246, %249 : vector<40x40xf32>
    %251 = math.exp %250 : vector<40x40xf32>
    %cst_88 = arith.constant dense<0.000000e+00> : vector<40xf32>
    %252 = vector.multi_reduction <add>, %251, %cst_88 [1] : vector<40x40xf32> to vector<40xf32>
    %253 = vector.shape_cast %252 : vector<40xf32> to vector<40x1xf32>
    %254 = vector.broadcast %253 : vector<40x1xf32> to vector<40x40xf32>
    %255 = arith.divf %251, %254 : vector<40x40xf32>
    %256 = arith.truncf %255 : vector<40x40xf32> to vector<40x40xbf16>
    %257 = arith.truncf %240 : vector<40x16xf32> to vector<40x16xbf16>
    %cst_89 = arith.constant dense<0.000000e+00> : vector<40x16xf32>
    %258 = tpu.matmul %256, %257, %cst_89 {dimension_numbers = #tpu.dot_dimension_numbers<[1], [0], [0], [1], [0, 0, 1, 1], [], []>} : vector<40x40xbf16>, vector<40x16xbf16>, vector<40x16xf32> -> vector<40x16xf32>
    %259 = arith.truncf %258 : vector<40x16xf32> to vector<40x16xbf16>
    %260 = vector.extract_strided_slice %197 {offsets = [0, 96], sizes = [16, 32], strides = [1, 1]} : vector<32x128xbf16> to vector<16x32xbf16>
    %cst_90 = arith.constant dense<0.000000e+00> : vector<40x32xf32>
    %261 = tpu.matmul %259, %260, %cst_90 {dimension_numbers = #tpu.dot_dimension_numbers<[1], [0], [0], [1], [0, 0, 1, 1], [], []>} : vector<40x16xbf16>, vector<16x32xbf16>, vector<40x32xf32> -> vector<40x32xf32>
    %262 = vector.extract_strided_slice %235 {offsets = [0, 16], sizes = [40, 16], strides = [1, 1]} : vector<80x96xf32> to vector<40x16xf32>
    %263 = vector.extract_strided_slice %235 {offsets = [0, 48], sizes = [40, 16], strides = [1, 1]} : vector<80x96xf32> to vector<40x16xf32>
    %264 = vector.extract_strided_slice %235 {offsets = [0, 80], sizes = [40, 16], strides = [1, 1]} : vector<80x96xf32> to vector<40x16xf32>
    %265 = arith.truncf %262 : vector<40x16xf32> to vector<40x16xbf16>
    %266 = arith.truncf %263 : vector<40x16xf32> to vector<40x16xbf16>
    %cst_91 = arith.constant dense<0.000000e+00> : vector<40x40xf32>
    %267 = tpu.matmul %265, %266, %cst_91 {dimension_numbers = #tpu.dot_dimension_numbers<[1], [1], [0], [0], [0, 0, 1, 0], [], []>} : vector<40x16xbf16>, vector<40x16xbf16>, vector<40x40xf32> -> vector<40x40xf32>
    %cst_92 = arith.constant 2.500000e-01 : f32
    %268 = vector.broadcast %cst_92 : f32 to vector<40x40xf32>
    %269 = arith.mulf %267, %268 : vector<40x40xf32>
    %270 = arith.addf %269, %237 : vector<40x40xf32>
    %cst_93 = arith.constant dense<0xFF800000> : vector<40xf32>
    %271 = vector.multi_reduction <maximumf>, %270, %cst_93 [1] : vector<40x40xf32> to vector<40xf32>
    %272 = vector.shape_cast %271 : vector<40xf32> to vector<40x1xf32>
    %273 = vector.broadcast %272 : vector<40x1xf32> to vector<40x40xf32>
    %274 = arith.subf %270, %273 : vector<40x40xf32>
    %275 = math.exp %274 : vector<40x40xf32>
    %cst_94 = arith.constant dense<0.000000e+00> : vector<40xf32>
    %276 = vector.multi_reduction <add>, %275, %cst_94 [1] : vector<40x40xf32> to vector<40xf32>
    %277 = vector.shape_cast %276 : vector<40xf32> to vector<40x1xf32>
    %278 = vector.broadcast %277 : vector<40x1xf32> to vector<40x40xf32>
    %279 = arith.divf %275, %278 : vector<40x40xf32>
    %280 = arith.truncf %279 : vector<40x40xf32> to vector<40x40xbf16>
    %281 = arith.truncf %264 : vector<40x16xf32> to vector<40x16xbf16>
    %cst_95 = arith.constant dense<0.000000e+00> : vector<40x16xf32>
    %282 = tpu.matmul %280, %281, %cst_95 {dimension_numbers = #tpu.dot_dimension_numbers<[1], [0], [0], [1], [0, 0, 1, 1], [], []>} : vector<40x40xbf16>, vector<40x16xbf16>, vector<40x16xf32> -> vector<40x16xf32>
    %283 = arith.truncf %282 : vector<40x16xf32> to vector<40x16xbf16>
    %284 = vector.extract_strided_slice %197 {offsets = [16, 96], sizes = [16, 32], strides = [1, 1]} : vector<32x128xbf16> to vector<16x32xbf16>
    %cst_96 = arith.constant dense<0.000000e+00> : vector<40x32xf32>
    %285 = tpu.matmul %283, %284, %cst_96 {dimension_numbers = #tpu.dot_dimension_numbers<[1], [0], [0], [1], [0, 0, 1, 1], [], []>} : vector<40x16xbf16>, vector<16x32xbf16>, vector<40x32xf32> -> vector<40x32xf32>
    %286 = arith.addf %261, %285 : vector<40x32xf32>
    %c1_97 = arith.constant 1 : index
    %c0_98 = arith.constant 0 : index
    %c0_99 = arith.constant 0 : index
    %287 = vector.load %arg1[%c1_97, %c0_98, %c0_99] : memref<2x40x40xf32, #tpu.memory_space<vmem>>, vector<1x40x40xf32>
    %288 = vector.shape_cast %287 : vector<1x40x40xf32> to vector<40x40xf32>
    %289 = vector.extract_strided_slice %235 {offsets = [40, 0], sizes = [40, 16], strides = [1, 1]} : vector<80x96xf32> to vector<40x16xf32>
    %290 = vector.extract_strided_slice %235 {offsets = [40, 32], sizes = [40, 16], strides = [1, 1]} : vector<80x96xf32> to vector<40x16xf32>
    %291 = vector.extract_strided_slice %235 {offsets = [40, 64], sizes = [40, 16], strides = [1, 1]} : vector<80x96xf32> to vector<40x16xf32>
    %292 = arith.truncf %289 : vector<40x16xf32> to vector<40x16xbf16>
    %293 = arith.truncf %290 : vector<40x16xf32> to vector<40x16xbf16>
    %cst_100 = arith.constant dense<0.000000e+00> : vector<40x40xf32>
    %294 = tpu.matmul %292, %293, %cst_100 {dimension_numbers = #tpu.dot_dimension_numbers<[1], [1], [0], [0], [0, 0, 1, 0], [], []>} : vector<40x16xbf16>, vector<40x16xbf16>, vector<40x40xf32> -> vector<40x40xf32>
    %cst_101 = arith.constant 2.500000e-01 : f32
    %295 = vector.broadcast %cst_101 : f32 to vector<40x40xf32>
    %296 = arith.mulf %294, %295 : vector<40x40xf32>
    %297 = arith.addf %296, %288 : vector<40x40xf32>
    %cst_102 = arith.constant dense<0xFF800000> : vector<40xf32>
    %298 = vector.multi_reduction <maximumf>, %297, %cst_102 [1] : vector<40x40xf32> to vector<40xf32>
    %299 = vector.shape_cast %298 : vector<40xf32> to vector<40x1xf32>
    %300 = vector.broadcast %299 : vector<40x1xf32> to vector<40x40xf32>
    %301 = arith.subf %297, %300 : vector<40x40xf32>
    %302 = math.exp %301 : vector<40x40xf32>
    %cst_103 = arith.constant dense<0.000000e+00> : vector<40xf32>
    %303 = vector.multi_reduction <add>, %302, %cst_103 [1] : vector<40x40xf32> to vector<40xf32>
    %304 = vector.shape_cast %303 : vector<40xf32> to vector<40x1xf32>
    %305 = vector.broadcast %304 : vector<40x1xf32> to vector<40x40xf32>
    %306 = arith.divf %302, %305 : vector<40x40xf32>
    %307 = arith.truncf %306 : vector<40x40xf32> to vector<40x40xbf16>
    %308 = arith.truncf %291 : vector<40x16xf32> to vector<40x16xbf16>
    %cst_104 = arith.constant dense<0.000000e+00> : vector<40x16xf32>
    %309 = tpu.matmul %307, %308, %cst_104 {dimension_numbers = #tpu.dot_dimension_numbers<[1], [0], [0], [1], [0, 0, 1, 1], [], []>} : vector<40x40xbf16>, vector<40x16xbf16>, vector<40x16xf32> -> vector<40x16xf32>
    %310 = arith.truncf %309 : vector<40x16xf32> to vector<40x16xbf16>
    %311 = vector.extract_strided_slice %197 {offsets = [0, 96], sizes = [16, 32], strides = [1, 1]} : vector<32x128xbf16> to vector<16x32xbf16>
    %cst_105 = arith.constant dense<0.000000e+00> : vector<40x32xf32>
    %312 = tpu.matmul %310, %311, %cst_105 {dimension_numbers = #tpu.dot_dimension_numbers<[1], [0], [0], [1], [0, 0, 1, 1], [], []>} : vector<40x16xbf16>, vector<16x32xbf16>, vector<40x32xf32> -> vector<40x32xf32>
    %313 = vector.extract_strided_slice %235 {offsets = [40, 16], sizes = [40, 16], strides = [1, 1]} : vector<80x96xf32> to vector<40x16xf32>
    %314 = vector.extract_strided_slice %235 {offsets = [40, 48], sizes = [40, 16], strides = [1, 1]} : vector<80x96xf32> to vector<40x16xf32>
    %315 = vector.extract_strided_slice %235 {offsets = [40, 80], sizes = [40, 16], strides = [1, 1]} : vector<80x96xf32> to vector<40x16xf32>
    %316 = arith.truncf %313 : vector<40x16xf32> to vector<40x16xbf16>
    %317 = arith.truncf %314 : vector<40x16xf32> to vector<40x16xbf16>
    %cst_106 = arith.constant dense<0.000000e+00> : vector<40x40xf32>
    %318 = tpu.matmul %316, %317, %cst_106 {dimension_numbers = #tpu.dot_dimension_numbers<[1], [1], [0], [0], [0, 0, 1, 0], [], []>} : vector<40x16xbf16>, vector<40x16xbf16>, vector<40x40xf32> -> vector<40x40xf32>
    %cst_107 = arith.constant 2.500000e-01 : f32
    %319 = vector.broadcast %cst_107 : f32 to vector<40x40xf32>
    %320 = arith.mulf %318, %319 : vector<40x40xf32>
    %321 = arith.addf %320, %288 : vector<40x40xf32>
    %cst_108 = arith.constant dense<0xFF800000> : vector<40xf32>
    %322 = vector.multi_reduction <maximumf>, %321, %cst_108 [1] : vector<40x40xf32> to vector<40xf32>
    %323 = vector.shape_cast %322 : vector<40xf32> to vector<40x1xf32>
    %324 = vector.broadcast %323 : vector<40x1xf32> to vector<40x40xf32>
    %325 = arith.subf %321, %324 : vector<40x40xf32>
    %326 = math.exp %325 : vector<40x40xf32>
    %cst_109 = arith.constant dense<0.000000e+00> : vector<40xf32>
    %327 = vector.multi_reduction <add>, %326, %cst_109 [1] : vector<40x40xf32> to vector<40xf32>
    %328 = vector.shape_cast %327 : vector<40xf32> to vector<40x1xf32>
    %329 = vector.broadcast %328 : vector<40x1xf32> to vector<40x40xf32>
    %330 = arith.divf %326, %329 : vector<40x40xf32>
    %331 = arith.truncf %330 : vector<40x40xf32> to vector<40x40xbf16>
    %332 = arith.truncf %315 : vector<40x16xf32> to vector<40x16xbf16>
    %cst_110 = arith.constant dense<0.000000e+00> : vector<40x16xf32>
    %333 = tpu.matmul %331, %332, %cst_110 {dimension_numbers = #tpu.dot_dimension_numbers<[1], [0], [0], [1], [0, 0, 1, 1], [], []>} : vector<40x40xbf16>, vector<40x16xbf16>, vector<40x16xf32> -> vector<40x16xf32>
    %334 = arith.truncf %333 : vector<40x16xf32> to vector<40x16xbf16>
    %335 = vector.extract_strided_slice %197 {offsets = [16, 96], sizes = [16, 32], strides = [1, 1]} : vector<32x128xbf16> to vector<16x32xbf16>
    %cst_111 = arith.constant dense<0.000000e+00> : vector<40x32xf32>
    %336 = tpu.matmul %334, %335, %cst_111 {dimension_numbers = #tpu.dot_dimension_numbers<[1], [0], [0], [1], [0, 0, 1, 1], [], []>} : vector<40x16xbf16>, vector<16x32xbf16>, vector<40x32xf32> -> vector<40x32xf32>
    %337 = arith.addf %312, %336 : vector<40x32xf32>
    %338 = tpu.concatenate %286, %337 in 0 : vector<40x32xf32>, vector<40x32xf32> -> vector<80x32xf32>
    %339 = vector.extract_strided_slice %203 {offsets = [0, 96], sizes = [1, 32], strides = [1, 1]} : vector<3x128xf32> to vector<1x32xf32>
    %340 = vector.broadcast %339 : vector<1x32xf32> to vector<80x32xf32>
    %341 = arith.addf %338, %340 : vector<80x32xf32>
    %342 = arith.addf %195, %341 : vector<80x32xf32>
    %343 = vector.extract_strided_slice %205 {offsets = [2, 0], sizes = [1, 32], strides = [1, 1]} : vector<4x32xf32> to vector<1x32xf32>
    %344 = vector.extract_strided_slice %205 {offsets = [3, 0], sizes = [1, 32], strides = [1, 1]} : vector<4x32xf32> to vector<1x32xf32>
    %cst_112 = arith.constant dense<0.000000e+00> : vector<80xf32>
    %345 = vector.multi_reduction <add>, %342, %cst_112 [1] : vector<80x32xf32> to vector<80xf32>
    %346 = vector.shape_cast %345 : vector<80xf32> to vector<80x1xf32>
    %cst_113 = arith.constant 3.200000e+01 : f32
    %347 = vector.broadcast %cst_113 : f32 to vector<80x1xf32>
    %348 = arith.divf %346, %347 : vector<80x1xf32>
    %349 = vector.broadcast %348 : vector<80x1xf32> to vector<80x32xf32>
    %350 = arith.subf %342, %349 : vector<80x32xf32>
    %351 = arith.mulf %350, %350 : vector<80x32xf32>
    %cst_114 = arith.constant dense<0.000000e+00> : vector<80xf32>
    %352 = vector.multi_reduction <add>, %351, %cst_114 [1] : vector<80x32xf32> to vector<80xf32>
    %353 = vector.shape_cast %352 : vector<80xf32> to vector<80x1xf32>
    %cst_115 = arith.constant 3.200000e+01 : f32
    %354 = vector.broadcast %cst_115 : f32 to vector<80x1xf32>
    %355 = arith.divf %353, %354 : vector<80x1xf32>
    %356 = vector.broadcast %348 : vector<80x1xf32> to vector<80x32xf32>
    %357 = arith.subf %342, %356 : vector<80x32xf32>
    %cst_116 = arith.constant 9.99999974E-6 : f32
    %358 = vector.broadcast %cst_116 : f32 to vector<80x1xf32>
    %359 = arith.addf %355, %358 : vector<80x1xf32>
    %360 = math.rsqrt %359 : vector<80x1xf32>
    %361 = vector.broadcast %360 : vector<80x1xf32> to vector<80x32xf32>
    %362 = arith.mulf %357, %361 : vector<80x32xf32>
    %363 = vector.broadcast %343 : vector<1x32xf32> to vector<80x32xf32>
    %364 = arith.mulf %362, %363 : vector<80x32xf32>
    %365 = vector.broadcast %344 : vector<1x32xf32> to vector<80x32xf32>
    %366 = arith.addf %364, %365 : vector<80x32xf32>
    %367 = arith.truncf %366 : vector<80x32xf32> to vector<80x32xbf16>
    %cst_117 = arith.constant dense<0.000000e+00> : vector<80x128xf32>
    %368 = tpu.matmul %367, %199, %cst_117 {dimension_numbers = #tpu.dot_dimension_numbers<[1], [0], [0], [1], [0, 0, 1, 1], [], []>} : vector<80x32xbf16>, vector<32x128xbf16>, vector<80x128xf32> -> vector<80x128xf32>
    %369 = vector.extract_strided_slice %203 {offsets = [1, 0], sizes = [1, 128], strides = [1, 1]} : vector<3x128xf32> to vector<1x128xf32>
    %370 = vector.broadcast %369 : vector<1x128xf32> to vector<80x128xf32>
    %371 = arith.addf %368, %370 : vector<80x128xf32>
    %cst_118 = arith.constant 5.000000e-01 : f32
    %372 = vector.broadcast %cst_118 : f32 to vector<80x128xf32>
    %373 = arith.mulf %372, %371 : vector<80x128xf32>
    %cst_119 = arith.constant 4.471500e-02 : f32
    %374 = vector.broadcast %cst_119 : f32 to vector<80x128xf32>
    %375 = arith.mulf %374, %371 : vector<80x128xf32>
    %376 = arith.mulf %375, %371 : vector<80x128xf32>
    %377 = arith.mulf %376, %371 : vector<80x128xf32>
    %378 = arith.addf %371, %377 : vector<80x128xf32>
    %cst_120 = arith.constant 0.797884583 : f32
    %379 = vector.broadcast %cst_120 : f32 to vector<80x128xf32>
    %380 = arith.mulf %379, %378 : vector<80x128xf32>
    %381 = math.tanh %380 : vector<80x128xf32>
    %cst_121 = arith.constant 1.000000e+00 : f32
    %382 = vector.broadcast %cst_121 : f32 to vector<80x128xf32>
    %383 = arith.addf %382, %381 : vector<80x128xf32>
    %384 = arith.mulf %373, %383 : vector<80x128xf32>
    %385 = arith.truncf %384 : vector<80x128xf32> to vector<80x128xbf16>
    %cst_122 = arith.constant dense<0.000000e+00> : vector<80x32xf32>
    %386 = tpu.matmul %385, %201, %cst_122 {dimension_numbers = #tpu.dot_dimension_numbers<[1], [0], [0], [1], [0, 0, 1, 1], [], []>} : vector<80x128xbf16>, vector<128x32xbf16>, vector<80x32xf32> -> vector<80x32xf32>
    %387 = vector.extract_strided_slice %203 {offsets = [2, 0], sizes = [1, 32], strides = [1, 1]} : vector<3x128xf32> to vector<1x32xf32>
    %388 = vector.broadcast %387 : vector<1x32xf32> to vector<80x32xf32>
    %389 = arith.addf %386, %388 : vector<80x32xf32>
    %390 = arith.addf %342, %389 : vector<80x32xf32>
    %c0_123 = arith.constant 0 : index
    %c0_124 = arith.constant 0 : index
    %391 = vector.load %arg9[%c0_123, %c0_124] : memref<2x32xf32, #tpu.memory_space<vmem>>, vector<2x32xf32>
    %392 = vector.extract_strided_slice %391 {offsets = [0, 0], sizes = [1, 32], strides = [1, 1]} : vector<2x32xf32> to vector<1x32xf32>
    %393 = vector.extract_strided_slice %391 {offsets = [1, 0], sizes = [1, 32], strides = [1, 1]} : vector<2x32xf32> to vector<1x32xf32>
    %cst_125 = arith.constant dense<0.000000e+00> : vector<80xf32>
    %394 = vector.multi_reduction <add>, %390, %cst_125 [1] : vector<80x32xf32> to vector<80xf32>
    %395 = vector.shape_cast %394 : vector<80xf32> to vector<80x1xf32>
    %cst_126 = arith.constant 3.200000e+01 : f32
    %396 = vector.broadcast %cst_126 : f32 to vector<80x1xf32>
    %397 = arith.divf %395, %396 : vector<80x1xf32>
    %398 = vector.broadcast %397 : vector<80x1xf32> to vector<80x32xf32>
    %399 = arith.subf %390, %398 : vector<80x32xf32>
    %400 = arith.mulf %399, %399 : vector<80x32xf32>
    %cst_127 = arith.constant dense<0.000000e+00> : vector<80xf32>
    %401 = vector.multi_reduction <add>, %400, %cst_127 [1] : vector<80x32xf32> to vector<80xf32>
    %402 = vector.shape_cast %401 : vector<80xf32> to vector<80x1xf32>
    %cst_128 = arith.constant 3.200000e+01 : f32
    %403 = vector.broadcast %cst_128 : f32 to vector<80x1xf32>
    %404 = arith.divf %402, %403 : vector<80x1xf32>
    %405 = vector.broadcast %397 : vector<80x1xf32> to vector<80x32xf32>
    %406 = arith.subf %390, %405 : vector<80x32xf32>
    %cst_129 = arith.constant 9.99999974E-6 : f32
    %407 = vector.broadcast %cst_129 : f32 to vector<80x1xf32>
    %408 = arith.addf %404, %407 : vector<80x1xf32>
    %409 = math.rsqrt %408 : vector<80x1xf32>
    %410 = vector.broadcast %409 : vector<80x1xf32> to vector<80x32xf32>
    %411 = arith.mulf %406, %410 : vector<80x32xf32>
    %412 = vector.broadcast %392 : vector<1x32xf32> to vector<80x32xf32>
    %413 = arith.mulf %411, %412 : vector<80x32xf32>
    %414 = vector.broadcast %393 : vector<1x32xf32> to vector<80x32xf32>
    %415 = arith.addf %413, %414 : vector<80x32xf32>
    %416 = arith.truncf %415 : vector<80x32xf32> to vector<80x32xbf16>
    %c0_130 = arith.constant 0 : index
    %c0_131 = arith.constant 0 : index
    %417 = vector.load %arg7[%c0_130, %c0_131] : memref<32x128xbf16, #tpu.memory_space<vmem>>, vector<32x128xbf16>
    %cst_132 = arith.constant dense<0.000000e+00> : vector<80x128xf32>
    %418 = tpu.matmul %416, %417, %cst_132 {dimension_numbers = #tpu.dot_dimension_numbers<[1], [0], [0], [1], [0, 0, 1, 1], [], []>} : vector<80x32xbf16>, vector<32x128xbf16>, vector<80x128xf32> -> vector<80x128xf32>
    %c0_133 = arith.constant 0 : index
    %c0_134 = arith.constant 0 : index
    %419 = vector.load %arg8[%c0_133, %c0_134] : memref<1x128xf32, #tpu.memory_space<vmem>>, vector<1x128xf32>
    %420 = vector.broadcast %419 : vector<1x128xf32> to vector<80x128xf32>
    %421 = arith.addf %418, %420 : vector<80x128xf32>
    %c0_135 = arith.constant 0 : index
    %c0_136 = arith.constant 0 : index
    %422 = vector.load %arg10[%c0_135, %c0_136] : memref<80x128xf32, #tpu.memory_space<vmem>>, vector<80x128xf32>
    tpu.vector_store %arg10[%c0_135, %c0_136], %421 {strides = array<i32>} : memref<80x128xf32, #tpu.memory_space<vmem>>, vector<80x128xf32>,
    return
  }
}

</mosaic_0001>

<llo_original>
// kernel: ge_transformer_forward.1
$region0: #{ge_transformer_forward.1}
  #allocation0 [shape = 'u32[]', space=smem, size = 0x4, offset = 0x4, fixed_abs, tag = 'smem constant byte address 0x4 - core index']
  #allocation1 [shape = 'u32[144,128]{1,0:T(1,128)}', space=vmem, size = 0x12000, scoped, tag = 'internal scratch']
  %s0 = inlined_call_operand.vmem [shape: f32[80,32], index: 0, kind: input, shape index: {}]
  %s1 = inlined_call_operand.vmem [shape: f32[2,40,40], index: 1, kind: input, shape index: {}]
  %s2 = inlined_call_operand.vmem [shape: bf16[2,32,128], index: 2, kind: input, shape index: {}]
  %s3 = inlined_call_operand.vmem [shape: bf16[2,32,128], index: 3, kind: input, shape index: {}]
  %s4 = inlined_call_operand.vmem [shape: bf16[2,128,32], index: 4, kind: input, shape index: {}]
  %s5 = inlined_call_operand.vmem [shape: f32[2,3,128], index: 5, kind: input, shape index: {}]
  %s6 = inlined_call_operand.vmem [shape: f32[2,4,32], index: 6, kind: input, shape index: {}]
  %s7 = inlined_call_operand.vmem [shape: bf16[32,128], index: 7, kind: input, shape index: {}]
  %s8 = inlined_call_operand.vmem [shape: f32[1,128], index: 8, kind: input, shape index: {}]
  %s9 = inlined_call_operand.vmem [shape: f32[2,32], index: 9, kind: input, shape index: {}]
  %s10 = inlined_call_operand.vmem [shape: f32[80,128], index: 10, kind: output, shape index: {}]
  %s11 = sld [smem:[#allocation0]]
  $region50: #{ge_transformer_forward.1} parent=0
    _
  %s13 = ssub.s32 1, %s11
  %s14 = scalar_select 0, %s13, %s11
  // Predicated region
  $region2: #{ge_transformer_forward.1} parent=0 // pred_check
    _
  $region3: #{ge_transformer_forward.1} parent=0 // pred_check_branch
    %16 = sbr.rel (0) target = $region5
  $region4: #{ge_transformer_forward.1} parent=0 // pred_region
    _
  $region5: #{ge_transformer_forward.1} parent=0 // pred_fallthru
    _
  // Predicated region
  $region6: #{ge_transformer_forward.1} parent=0 // pred_check
    _
  $region7: #{ge_transformer_forward.1} parent=0 // pred_check_branch
    %18 = sbr.rel (0) target = $region9
  $region8: #{ge_transformer_forward.1} parent=0 // pred_region
    _
  $region9: #{ge_transformer_forward.1} parent=0 // pred_fallthru
    _
  // Predicated region
  $region10: #{ge_transformer_forward.1} parent=0 // pred_check
    _
  $region11: #{ge_transformer_forward.1} parent=0 // pred_check_branch
    %20 = sbr.rel (0) target = $region13
  $region12: #{ge_transformer_forward.1} parent=0 // pred_region
    _
  $region13: #{ge_transformer_forward.1} parent=0 // pred_fallthru
    _
  // Predicated region
  $region14: #{ge_transformer_forward.1} parent=0 // pred_check
    _
  $region15: #{ge_transformer_forward.1} parent=0 // pred_check_branch
    %22 = sbr.rel (0) target = $region17
  $region16: #{ge_transformer_forward.1} parent=0 // pred_region
    _
  $region17: #{ge_transformer_forward.1} parent=0 // pred_fallthru
    _
  // Predicated region
  $region18: #{ge_transformer_forward.1} parent=0 // pred_check
    _
  $region19: #{ge_transformer_forward.1} parent=0 // pred_check_branch
    %24 = sbr.rel (0) target = $region21
  $region20: #{ge_transformer_forward.1} parent=0 // pred_region
    _
  $region21: #{ge_transformer_forward.1} parent=0 // pred_fallthru
    _
  // Predicated region
  $region22: #{ge_transformer_forward.1} parent=0 // pred_check
    _
  $region23: #{ge_transformer_forward.1} parent=0 // pred_check_branch
    %26 = sbr.rel (0) target = $region25
  $region24: #{ge_transformer_forward.1} parent=0 // pred_region
    _
  $region25: #{ge_transformer_forward.1} parent=0 // pred_fallthru
    _
  // Predicated region
  $region26: #{ge_transformer_forward.1} parent=0 // pred_check
    _
  $region27: #{ge_transformer_forward.1} parent=0 // pred_check_branch
    %28 = sbr.rel (0) target = $region29
  $region28: #{ge_transformer_forward.1} parent=0 // pred_region
    _
  $region29: #{ge_transformer_forward.1} parent=0 // pred_fallthru
    _
  // Predicated region
  $region30: #{ge_transformer_forward.1} parent=0 // pred_check
    _
  $region31: #{ge_transformer_forward.1} parent=0 // pred_check_branch
    %30 = sbr.rel (0) target = $region33
  $region32: #{ge_transformer_forward.1} parent=0 // pred_region
    _
  $region33: #{ge_transformer_forward.1} parent=0 // pred_fallthru
    _
  // Predicated region
  $region34: #{ge_transformer_forward.1} parent=0 // pred_check
    _
  $region35: #{ge_transformer_forward.1} parent=0 // pred_check_branch
    %32 = sbr.rel (0) target = $region37
  $region36: #{ge_transformer_forward.1} parent=0 // pred_region
    _
  $region37: #{ge_transformer_forward.1} parent=0 // pred_fallthru
    _
  // Predicated region
  $region38: #{ge_transformer_forward.1} parent=0 // pred_check
    _
  $region39: #{ge_transformer_forward.1} parent=0 // pred_check_branch
    %34 = sbr.rel (0) target = $region41
  $region40: #{ge_transformer_forward.1} parent=0 // pred_region
    _
  $region41: #{ge_transformer_forward.1} parent=0 // pred_fallthru
    _
  %v36 = vld [vmem:[%s0] sm:$0xff]
  %v37 = vld [vmem:[%s0 + $0x8] sm:$0xff]
  %v38 = vld [vmem:[%s0 + $0x10] sm:$0xff]
  %v39 = vld [vmem:[%s0 + $0x18] sm:$0xff]
  %v40 = vld [vmem:[%s0 + $0x20] sm:$0xff]
  %v41 = vld [vmem:[%s0 + $0x28] sm:$0xff]
  %v42 = vld [vmem:[%s0 + $0x30] sm:$0xff]
  %v43 = vld [vmem:[%s0 + $0x38] sm:$0xff]
  %v44 = vld [vmem:[%s0 + $0x40] sm:$0xff]
  %v45 = vld [vmem:[%s0 + $0x48] sm:$0xff]
  %v46 = vld [vmem:[%s2] sm:$0xf]
  %v47 = vld [vmem:[%s2 + $0x4] sm:$0xf]
  %v48 = vld [vmem:[%s2 + $0x8] sm:$0xf]
  %v49 = vld [vmem:[%s2 + $0xc] sm:$0xf]
  %v50 = vld [vmem:[%s3] sm:$0xf]
  %v51 = vld [vmem:[%s3 + $0x4] sm:$0xf]
  %v52 = vld [vmem:[%s3 + $0x8] sm:$0xf]
  %v53 = vld [vmem:[%s3 + $0xc] sm:$0xf]
  %v54 = vld [vmem:[%s4] sm:$0xf]
  %v55 = vld [vmem:[%s4 + $0x4] sm:$0xf]
  %v56 = vld [vmem:[%s4 + $0x8] sm:$0xf]
  %v57 = vld [vmem:[%s4 + $0xc] sm:$0xf]
  %v58 = vld [vmem:[%s4 + $0x10] sm:$0xf]
  %v59 = vld [vmem:[%s4 + $0x14] sm:$0xf]
  %v60 = vld [vmem:[%s4 + $0x18] sm:$0xf]
  %v61 = vld [vmem:[%s4 + $0x1c] sm:$0xf]
  %v62 = vld [vmem:[%s4 + $0x20] sm:$0xf]
  %v63 = vld [vmem:[%s4 + $0x24] sm:$0xf]
  %v64 = vld [vmem:[%s4 + $0x28] sm:$0xf]
  %v65 = vld [vmem:[%s4 + $0x2c] sm:$0xf]
  %v66 = vld [vmem:[%s4 + $0x30] sm:$0xf]
  %v67 = vld [vmem:[%s4 + $0x34] sm:$0xf]
  %v68 = vld [vmem:[%s4 + $0x38] sm:$0xf]
  %v69 = vld [vmem:[%s4 + $0x3c] sm:$0xf]
  %v70 = vld [vmem:[%s5] sm:$0x7]
  %v71 = vld [vmem:[%s6] sm:$0xf]
  %vm72 = vcmask 261120
  %v73 = vsel %vm72, %v36, 0.0
  %74 = vadd.xlane.f32.xlu0 %v73
  %v75 = vpop.xlane.xlu0 %74
  %v76 = vsel %vm72, %v37, 0.0
  %77 = vadd.xlane.f32.xlu0 %v76
  %v78 = vpop.xlane.xlu0 %77
  %v79 = vsel %vm72, %v38, 0.0
  %80 = vadd.xlane.f32.xlu0 %v79
  %v81 = vpop.xlane.xlu0 %80
  %v82 = vsel %vm72, %v39, 0.0
  %83 = vadd.xlane.f32.xlu0 %v82
  %v84 = vpop.xlane.xlu0 %83
  %v85 = vsel %vm72, %v40, 0.0
  %86 = vadd.xlane.f32.xlu0 %v85
  %v87 = vpop.xlane.xlu0 %86
  %v88 = vsel %vm72, %v41, 0.0
  %89 = vadd.xlane.f32.xlu0 %v88
  %v90 = vpop.xlane.xlu0 %89
  %v91 = vsel %vm72, %v42, 0.0
  %92 = vadd.xlane.f32.xlu0 %v91
  %v93 = vpop.xlane.xlu0 %92
  %v94 = vsel %vm72, %v43, 0.0
  %95 = vadd.xlane.f32.xlu0 %v94
  %v96 = vpop.xlane.xlu0 %95
  %v97 = vsel %vm72, %v44, 0.0
  %98 = vadd.xlane.f32.xlu0 %v97
  %v99 = vpop.xlane.xlu0 %98
  %v100 = vsel %vm72, %v45, 0.0
  %101 = vadd.xlane.f32.xlu0 %v100
  %v102 = vpop.xlane.xlu0 %101
  %v103 = vrcp.pop 32.0
  %v104 = vmul.f32 %v75, %v103
  %v105 = vmul.f32 %v78, %v103
  %v106 = vmul.f32 %v81, %v103
  %v107 = vmul.f32 %v84, %v103
  %v108 = vmul.f32 %v87, %v103
  %v109 = vmul.f32 %v90, %v103
  %v110 = vmul.f32 %v93, %v103
  %v111 = vmul.f32 %v96, %v103
  %v112 = vmul.f32 %v99, %v103
  %v113 = vmul.f32 %v102, %v103
  %v114 = vsub.f32 %v36, %v104
  %v115 = vsub.f32 %v37, %v105
  %v116 = vsub.f32 %v38, %v106
  %v117 = vsub.f32 %v39, %v107
  %v118 = vsub.f32 %v40, %v108
  %v119 = vsub.f32 %v41, %v109
  %v120 = vsub.f32 %v42, %v110
  %v121 = vsub.f32 %v43, %v111
  %v122 = vsub.f32 %v44, %v112
  %v123 = vsub.f32 %v45, %v113
  %v124 = vmul.f32 %v114, %v114
  %v125 = vmul.f32 %v115, %v115
  %v126 = vmul.f32 %v116, %v116
  %v127 = vmul.f32 %v117, %v117
  %v128 = vmul.f32 %v118, %v118
  %v129 = vmul.f32 %v119, %v119
  %v130 = vmul.f32 %v120, %v120
  %v131 = vmul.f32 %v121, %v121
  %v132 = vmul.f32 %v122, %v122
  %v133 = vmul.f32 %v123, %v123
  %v134 = vsel %vm72, %v124, 0.0
  %135 = vadd.xlane.f32.xlu0 %v134
  %v136 = vpop.xlane.xlu0 %135
  %v137 = vsel %vm72, %v125, 0.0
  %138 = vadd.xlane.f32.xlu0 %v137
  %v139 = vpop.xlane.xlu0 %138
  %v140 = vsel %vm72, %v126, 0.0
  %141 = vadd.xlane.f32.xlu0 %v140
  %v142 = vpop.xlane.xlu0 %141
  %v143 = vsel %vm72, %v127, 0.0
  %144 = vadd.xlane.f32.xlu0 %v143
  %v145 = vpop.xlane.xlu0 %144
  %v146 = vsel %vm72, %v128, 0.0
  %147 = vadd.xlane.f32.xlu0 %v146
  %v148 = vpop.xlane.xlu0 %147
  %v149 = vsel %vm72, %v129, 0.0
  %150 = vadd.xlane.f32.xlu0 %v149
  %v151 = vpop.xlane.xlu0 %150
  %v152 = vsel %vm72, %v130, 0.0
  %153 = vadd.xlane.f32.xlu0 %v152
  %v154 = vpop.xlane.xlu0 %153
  %v155 = vsel %vm72, %v131, 0.0
  %156 = vadd.xlane.f32.xlu0 %v155
  %v157 = vpop.xlane.xlu0 %156
  %v158 = vsel %vm72, %v132, 0.0
  %159 = vadd.xlane.f32.xlu0 %v158
  %v160 = vpop.xlane.xlu0 %159
  %v161 = vsel %vm72, %v133, 0.0
  %162 = vadd.xlane.f32.xlu0 %v161
  %v163 = vpop.xlane.xlu0 %162
  %v164 = vmul.f32 %v136, %v103
  %v165 = vmul.f32 %v139, %v103
  %v166 = vmul.f32 %v142, %v103
  %v167 = vmul.f32 %v145, %v103
  %v168 = vmul.f32 %v148, %v103
  %v169 = vmul.f32 %v151, %v103
  %v170 = vmul.f32 %v154, %v103
  %v171 = vmul.f32 %v157, %v103
  %v172 = vmul.f32 %v160, %v103
  %v173 = vmul.f32 %v163, %v103
  %v174 = vadd.f32 %v164, 1e-05
  %v175 = vadd.f32 %v165, 1e-05
  %v176 = vadd.f32 %v166, 1e-05
  %v177 = vadd.f32 %v167, 1e-05
  %v178 = vadd.f32 %v168, 1e-05
  %v179 = vadd.f32 %v169, 1e-05
  %v180 = vadd.f32 %v170, 1e-05
  %v181 = vadd.f32 %v171, 1e-05
  %v182 = vadd.f32 %v172, 1e-05
  %v183 = vadd.f32 %v173, 1e-05
  %v184 = vrsqrt.pop %v174
  %v185 = vrsqrt.pop %v175
  %v186 = vrsqrt.pop %v176
  %v187 = vrsqrt.pop %v177
  %v188 = vrsqrt.pop %v178
  %v189 = vrsqrt.pop %v179
  %v190 = vrsqrt.pop %v180
  %v191 = vrsqrt.pop %v181
  %v192 = vrsqrt.pop %v182
  %v193 = vrsqrt.pop %v183
  %v194 = vmul.f32 %v114, %v184
  %v195 = vmul.f32 %v115, %v185
  %v196 = vmul.f32 %v116, %v186
  %v197 = vmul.f32 %v117, %v187
  %v198 = vmul.f32 %v118, %v188
  %v199 = vmul.f32 %v119, %v189
  %v200 = vmul.f32 %v120, %v190
  %v201 = vmul.f32 %v121, %v191
  %v202 = vmul.f32 %v122, %v192
  %v203 = vmul.f32 %v123, %v193
  %v204 = vlaneseq
  %v205 = vshrl.u32 %v204, 7
  %v206 = vsub.s32 0, %v205
  %v207 = vrot.slane %v71, %v206
  %v208 = vmul.f32 %v194, %v207
  %v209 = vmul.f32 %v195, %v207
  %v210 = vmul.f32 %v196, %v207
  %v211 = vmul.f32 %v197, %v207
  %v212 = vmul.f32 %v198, %v207
  %v213 = vmul.f32 %v199, %v207
  %v214 = vmul.f32 %v200, %v207
  %v215 = vmul.f32 %v201, %v207
  %v216 = vmul.f32 %v202, %v207
  %v217 = vmul.f32 %v203, %v207
  %v218 = vlaneseq
  %v219 = vshrl.u32 %v218, 7
  %v220 = vsub.s32 1, %v219
  %v221 = vrot.slane %v71, %v220
  %v222 = vadd.f32 %v208, %v221
  %v223 = vadd.f32 %v209, %v221
  %v224 = vadd.f32 %v210, %v221
  %v225 = vadd.f32 %v211, %v221
  %v226 = vadd.f32 %v212, %v221
  %v227 = vadd.f32 %v213, %v221
  %v228 = vadd.f32 %v214, %v221
  %v229 = vadd.f32 %v215, %v221
  %v230 = vadd.f32 %v216, %v221
  %v231 = vadd.f32 %v217, %v221
  %v232 = vpack.c.bf16 %v223, %v222
  %v233 = vpack.c.bf16 %v225, %v224
  %v234 = vpack.c.bf16 %v227, %v226
  %v235 = vpack.c.bf16 %v229, %v228
  %v236 = vpack.c.bf16 %v231, %v230
  %v237 = vlaneseq
  %v238 = vshrl.u32 %v237, 7
  %v239 = vsub.s32 0, %v238
  %v240 = vrot.slane %v70, %v239
  %v245 = vunpack.c.l.b16 %v46
  %v246 = vunpack.c.l.b16 %v47
  %v247 = vunpack.c.l.b16 %v48
  %v248 = vunpack.c.l.b16 %v49
  %v249 = vpack.c.b16 %v246, %v245
  %v250 = vpack.c.b16 %v248, %v247
  %v254 = vsel %vm72, %v232, 0
  %v257 = vsel %vm72, %v233, 0
  %v260 = vsel %vm72, %v234, 0
  %v263 = vsel %vm72, %v235, 0
  %v266 = vsel %vm72, %v236, 0
  %268 = vmatprep.subr.bf16.mxu0 0
  %269 = vmatpush1.bf16.msra.mxu0 0
  %270 = vmatprep.subr.bf16.mxu0 0
  %271 = vmatpush1.bf16.msra.mxu0 0
  %272 = vmatprep.subr.bf16.mxu0 0
  %273 = vmatpush1.bf16.msra.mxu0 0
  %274 = vmatprep.subr.bf16.mxu0 0
  %275 = vmatpush1.bf16.msra.mxu0 0
  %276 = vmatprep.subr.bf16.mxu0 0
  %277 = vmatpush1.bf16.msra.mxu0 0
  %278 = vmatprep.subr.bf16.mxu0 0
  %279 = vmatpush1.bf16.msra.mxu0 0
  %280 = vmatprep.subr.bf16.mxu0 0
  %281 = vmatpush1.bf16.msra.mxu0 %v250
  %282 = vmatprep.subr.bf16.mxu0 0
  %283 = vmatpush1.bf16.msra.mxu0 %v249
  %284 = vmatprep.subr.bf16.mxu0 0
  %285 = vmatpush2.bf16.msra.mxu0 0
  %286 = vmatprep.subr.bf16.mxu0 0
  %287 = vmatpush2.bf16.msra.mxu0 0
  %288 = vmatprep.subr.bf16.mxu0 0
  %289 = vmatpush2.bf16.msra.mxu0 0
  %290 = vmatprep.subr.bf16.mxu0 0
  %291 = vmatpush2.bf16.msra.mxu0 0
  %292 = vmatprep.subr.bf16.mxu0 0
  %293 = vmatpush2.bf16.msra.mxu0 0
  %294 = vmatprep.subr.bf16.mxu0 0
  %295 = vmatpush2.bf16.msra.mxu0 0
  %296 = vmatprep.subr.bf16.mxu0 0
  %297 = vmatpush2.bf16.msra.mxu0 0
  %298 = vmatprep.subr.bf16.mxu0 0
  %299 = vmatpush2.bf16.msra.mxu0 0
  %300 = vmatprep.mubr.bf16.mxu0 0
  %301 = vmatmul.mubr.bf16.gmra.mxu0 %v254
  %v302 = vpop.f32.mrf.mxu0
  %v303 = vadd.f32 %v240, %v302
  %v304 = vpop.f32.mrf.mxu0
  %v305 = vpop.f32.mrf.mxu0
  %v306 = vadd.f32 %v240, %v305
  %v307 = vpop.f32.mrf.mxu0
  %308 = vmatprep.mubr.bf16.mxu0 0
  %309 = vmatmul.mubr.bf16.gmra.mxu0 %v257
  %v310 = vpop.f32.mrf.mxu0
  %v311 = vadd.f32 %v240, %v310
  %v312 = vpop.f32.mrf.mxu0
  %v313 = vpop.f32.mrf.mxu0
  %v314 = vadd.f32 %v240, %v313
  %v315 = vpop.f32.mrf.mxu0
  %316 = vmatprep.mubr.bf16.mxu0 0
  %317 = vmatmul.mubr.bf16.gmra.mxu0 %v260
  %v318 = vpop.f32.mrf.mxu0
  %v319 = vadd.f32 %v240, %v318
  %v320 = vpop.f32.mrf.mxu0
  %v321 = vpop.f32.mrf.mxu0
  %v322 = vadd.f32 %v240, %v321
  %v323 = vpop.f32.mrf.mxu0
  %324 = vmatprep.mubr.bf16.mxu0 0
  %325 = vmatmul.mubr.bf16.gmra.mxu0 %v263
  %v326 = vpop.f32.mrf.mxu0
  %v327 = vadd.f32 %v240, %v326
  %v328 = vpop.f32.mrf.mxu0
  %v329 = vpop.f32.mrf.mxu0
  %v330 = vadd.f32 %v240, %v329
  %v331 = vpop.f32.mrf.mxu0
  %332 = vmatprep.mubr.bf16.mxu0 0
  %333 = vmatmul.mubr.bf16.gmra.mxu0 %v266
  %v334 = vpop.f32.mrf.mxu0
  %v335 = vadd.f32 %v240, %v334
  %v336 = vpop.f32.mrf.mxu0
  %v337 = vpop.f32.mrf.mxu0
  %v338 = vadd.f32 %v240, %v337
  %v339 = vpop.f32.mrf.mxu0
  %340 = vdwg.mxu0
  %v341 = vld [vmem:[%s1] sm:$0xff]
  %v342 = vld [vmem:[%s1 + $0x8] sm:$0xff]
  %v343 = vld [vmem:[%s1 + $0x10] sm:$0xff]
  %v344 = vld [vmem:[%s1 + $0x18] sm:$0xff]
  %v345 = vld [vmem:[%s1 + $0x20] sm:$0xff]
  %v346 = vpack.c.bf16 %v306, %v303
  %v347 = vpack.c.bf16 %v314, %v311
  %v348 = vpack.c.bf16 %v319, %v319
  %352 = vrot.lane.b32.xlu0 %v346, 96
  %v353 = vpop.permute.xlu0 %352
  %354 = vrot.lane.b32.xlu0 %v347, 96
  %v355 = vpop.permute.xlu0 %354
  %356 = vrot.lane.b32.xlu0 %v348, 96
  %v357 = vpop.permute.xlu0 %356
  %vm358 = vcmask 130048
  %v360 = vsel %vm358, %v346, 0
  %v363 = vsel %vm358, %v347, 0
  %v366 = vsel %vm358, %v348, 0
  %v369 = vsel %vm358, %v353, 0
  %v372 = vsel %vm358, %v355, 0
  %v375 = vsel %vm358, %v357, 0
  %377 = vmatprep.subr.bf16.mxu0 0
  %378 = vmatpush1.bf16.xpose.msra.mxu0 0
  %379 = vmatprep.subr.bf16.mxu0 0
  %380 = vmatpush1.bf16.xpose.msra.mxu0 0
  %381 = vmatprep.subr.bf16.mxu0 0
  %382 = vmatpush1.bf16.xpose.msra.mxu0 0
  %383 = vmatprep.subr.bf16.mxu0 0
  %384 = vmatpush1.bf16.xpose.msra.mxu0 0
  %385 = vmatprep.subr.bf16.mxu0 0
  %386 = vmatpush1.bf16.xpose.msra.mxu0 0
  %387 = vmatprep.subr.bf16.mxu0 0
  %388 = vmatpush1.bf16.xpose.msra.mxu0 %v375
  %389 = vmatprep.subr.bf16.mxu0 0
  %390 = vmatpush1.bf16.xpose.msra.mxu0 %v372
  %391 = vmatprep.subr.bf16.mxu0 0
  %392 = vmatpush1.bf16.xpose.msra.mxu0 %v369
  %393 = vmatprep.subr.bf16.mxu0 0
  %394 = vmatpush2.bf16.xpose.msra.mxu0 0
  %395 = vmatprep.subr.bf16.mxu0 0
  %396 = vmatpush2.bf16.xpose.msra.mxu0 0
  %397 = vmatprep.subr.bf16.mxu0 0
  %398 = vmatpush2.bf16.xpose.msra.mxu0 0
  %399 = vmatprep.subr.bf16.mxu0 0
  %400 = vmatpush2.bf16.xpose.msra.mxu0 0
  %401 = vmatprep.subr.bf16.mxu0 0
  %402 = vmatpush2.bf16.xpose.msra.mxu0 0
  %403 = vmatprep.subr.bf16.mxu0 0
  %404 = vmatpush2.bf16.xpose.msra.mxu0 0
  %405 = vmatprep.subr.bf16.mxu0 0
  %406 = vmatpush2.bf16.xpose.msra.mxu0 0
  %407 = vmatprep.subr.bf16.mxu0 0
  %408 = vmatpush2.bf16.xpose.msra.mxu0 0
  %409 = vmatprep.mubr.bf16.mxu0 0
  %410 = vmatmul.mubr.bf16.gmra.mxu0 %v360
  %v411 = vpop.f32.mrf.mxu0
  %v412 = vadd.f32 0.0, %v411
  %v413 = vpop.f32.mrf.mxu0
  %v414 = vpop.f32.mrf.mxu0
  %v415 = vadd.f32 0.0, %v414
  %v416 = vpop.f32.mrf.mxu0
  %417 = vmatprep.mubr.bf16.mxu0 0
  %418 = vmatmul.mubr.bf16.gmra.mxu0 %v363
  %v419 = vpop.f32.mrf.mxu0
  %v420 = vadd.f32 0.0, %v419
  %v421 = vpop.f32.mrf.mxu0
  %v422 = vpop.f32.mrf.mxu0
  %v423 = vadd.f32 0.0, %v422
  %v424 = vpop.f32.mrf.mxu0
  %425 = vmatprep.mubr.bf16.mxu0 0
  %426 = vmatmul.mubr.bf16.gmra.mxu0 %v366
  %v427 = vpop.f32.mrf.mxu0
  %v428 = vadd.f32 0.0, %v427
  %v429 = vpop.f32.mrf.mxu0
  %v430 = vpop.f32.mrf.mxu0
  %v431 = vpop.f32.mrf.mxu0
  %432 = vdwg.mxu0
  %v433 = vmul.f32 %v412, 0.25
  %v434 = vmul.f32 %v415, 0.25
  %v435 = vmul.f32 %v420, 0.25
  %v436 = vmul.f32 %v423, 0.25
  %v437 = vmul.f32 %v428, 0.25
  %v438 = vadd.f32 %v433, %v341
  %v439 = vadd.f32 %v434, %v342
  %v440 = vadd.f32 %v435, %v343
  %v441 = vadd.f32 %v436, %v344
  %v442 = vadd.f32 %v437, %v345
  %vm443 = vcmask 326656
  %v444 = vsel %vm443, %v438, -inf
  %445 = vmax.xlane.f32.xlu0 %v444
  %v446 = vpop.xlane.xlu0 %445
  %v447 = vsel %vm443, %v439, -inf
  %448 = vmax.xlane.f32.xlu0 %v447
  %v449 = vpop.xlane.xlu0 %448
  %v450 = vsel %vm443, %v440, -inf
  %451 = vmax.xlane.f32.xlu0 %v450
  %v452 = vpop.xlane.xlu0 %451
  %v453 = vsel %vm443, %v441, -inf
  %454 = vmax.xlane.f32.xlu0 %v453
  %v455 = vpop.xlane.xlu0 %454
  %v456 = vsel %vm443, %v442, -inf
  %457 = vmax.xlane.f32.xlu0 %v456
  %v458 = vpop.xlane.xlu0 %457
  %v459 = vsub.f32 %v438, %v446
  %v460 = vsub.f32 %v439, %v449
  %v461 = vsub.f32 %v440, %v452
  %v462 = vsub.f32 %v441, %v455
  %v463 = vsub.f32 %v442, %v458
  %v464 = vmul.f32 %v459, 1.442695
  %v465 = vpow.pop %v464
  %v466 = vmul.f32 %v460, 1.442695
  %v467 = vpow.pop %v466
  %v468 = vmul.f32 %v461, 1.442695
  %v469 = vpow.pop %v468
  %v470 = vmul.f32 %v462, 1.442695
  %v471 = vpow.pop %v470
  %v472 = vmul.f32 %v463, 1.442695
  %v473 = vpow.pop %v472
  %v474 = vsel %vm443, %v465, 0.0
  %475 = vadd.xlane.f32.xlu0 %v474
  %v476 = vpop.xlane.xlu0 %475
  %v477 = vsel %vm443, %v467, 0.0
  %478 = vadd.xlane.f32.xlu0 %v477
  %v479 = vpop.xlane.xlu0 %478
  %v480 = vsel %vm443, %v469, 0.0
  %481 = vadd.xlane.f32.xlu0 %v480
  %v482 = vpop.xlane.xlu0 %481
  %v483 = vsel %vm443, %v471, 0.0
  %484 = vadd.xlane.f32.xlu0 %v483
  %v485 = vpop.xlane.xlu0 %484
  %v486 = vsel %vm443, %v473, 0.0
  %487 = vadd.xlane.f32.xlu0 %v486
  %v488 = vpop.xlane.xlu0 %487
  %v489 = vrcp.pop %v476
  %v490 = vmul.f32 %v465, %v489
  %v491 = vrcp.pop %v479
  %v492 = vmul.f32 %v467, %v491
  %v493 = vrcp.pop %v482
  %v494 = vmul.f32 %v469, %v493
  %v495 = vrcp.pop %v485
  %v496 = vmul.f32 %v471, %v495
  %v497 = vrcp.pop %v488
  %v498 = vmul.f32 %v473, %v497
  %v499 = vpack.c.bf16 %v492, %v490
  %v500 = vpack.c.bf16 %v496, %v494
  %v501 = vpack.c.bf16 %v498, %v498
  %502 = vrot.lane.b32.xlu0 %v346, 64
  %v503 = vpop.permute.xlu0 %502
  %504 = vrot.lane.b32.xlu0 %v347, 64
  %v505 = vpop.permute.xlu0 %504
  %506 = vrot.lane.b32.xlu0 %v348, 64
  %v507 = vpop.permute.xlu0 %506
  %v511 = vsel %vm443, %v499, 0
  %v514 = vsel %vm443, %v500, 0
  %v517 = vsel %vm443, %v501, 0
  %vm519 = vcmask 1043456
  %v521 = vsel %vm519, %v507, 0
  %523 = vmatprep.subr.bf16.mxu0 0
  %524 = vmatpush1.bf16.msra.mxu0 0
  %525 = vmatprep.subr.bf16.mxu0 0
  %526 = vmatpush1.bf16.msra.mxu0 0
  %527 = vmatprep.subr.bf16.mxu0 0
  %528 = vmatpush1.bf16.msra.mxu0 0
  %529 = vmatprep.subr.bf16.mxu0 0
  %530 = vmatpush1.bf16.msra.mxu0 0
  %531 = vmatprep.subr.bf16.mxu0 0
  %532 = vmatpush1.bf16.msra.mxu0 0
  %533 = vmatprep.subr.bf16.mxu0 0
  %534 = vmatpush1.bf16.msra.mxu0 %v521
  %535 = vmatprep.subr.bf16.mxu0 0
  %536 = vmatpush1.bf16.msra.mxu0 %v505
  %537 = vmatprep.subr.bf16.mxu0 0
  %538 = vmatpush1.bf16.msra.mxu0 %v503
  %539 = vmatprep.subr.bf16.mxu0 0
  %540 = vmatpush2.bf16.msra.mxu0 0
  %541 = vmatprep.subr.bf16.mxu0 0
  %542 = vmatpush2.bf16.msra.mxu0 0
  %543 = vmatprep.subr.bf16.mxu0 0
  %544 = vmatpush2.bf16.msra.mxu0 0
  %545 = vmatprep.subr.bf16.mxu0 0
  %546 = vmatpush2.bf16.msra.mxu0 0
  %547 = vmatprep.subr.bf16.mxu0 0
  %548 = vmatpush2.bf16.msra.mxu0 0
  %549 = vmatprep.subr.bf16.mxu0 0
  %550 = vmatpush2.bf16.msra.mxu0 0
  %551 = vmatprep.subr.bf16.mxu0 0
  %552 = vmatpush2.bf16.msra.mxu0 0
  %553 = vmatprep.subr.bf16.mxu0 0
  %554 = vmatpush2.bf16.msra.mxu0 0
  %555 = vmatprep.mubr.bf16.mxu0 0
  %556 = vmatmul.mubr.bf16.gmra.mxu0 %v511
  %v557 = vpop.f32.mrf.mxu0
  %v558 = vadd.f32 0.0, %v557
  %v559 = vpop.f32.mrf.mxu0
  %v560 = vpop.f32.mrf.mxu0
  %v561 = vadd.f32 0.0, %v560
  %v562 = vpop.f32.mrf.mxu0
  %563 = vmatprep.mubr.bf16.mxu0 0
  %564 = vmatmul.mubr.bf16.gmra.mxu0 %v514
  %v565 = vpop.f32.mrf.mxu0
  %v566 = vadd.f32 0.0, %v565
  %v567 = vpop.f32.mrf.mxu0
  %v568 = vpop.f32.mrf.mxu0
  %v569 = vadd.f32 0.0, %v568
  %v570 = vpop.f32.mrf.mxu0
  %571 = vmatprep.mubr.bf16.mxu0 0
  %572 = vmatmul.mubr.bf16.gmra.mxu0 %v517
  %v573 = vpop.f32.mrf.mxu0
  %v574 = vadd.f32 0.0, %v573
  %v575 = vpop.f32.mrf.mxu0
  %v576 = vpop.f32.mrf.mxu0
  %v577 = vpop.f32.mrf.mxu0
  %578 = vdwg.mxu0
  %v579 = vpack.c.bf16 %v561, %v558
  %v580 = vpack.c.bf16 %v569, %v566
  %v581 = vpack.c.bf16 %v574, %v574
  %582 = vrot.lane.b32.xlu0 %v346, 112
  %v583 = vpop.permute.xlu0 %582
  %584 = vrot.lane.b32.xlu0 %v347, 112
  %v585 = vpop.permute.xlu0 %584
  %586 = vrot.lane.b32.xlu0 %v348, 112
  %v587 = vpop.permute.xlu0 %586
  %588 = vrot.lane.b32.xlu0 %v346, 80
  %v589 = vpop.permute.xlu0 %588
  %590 = vrot.lane.b32.xlu0 %v347, 80
  %v591 = vpop.permute.xlu0 %590
  %592 = vrot.lane.b32.xlu0 %v348, 80
  %v593 = vpop.permute.xlu0 %592
  %v595 = vsel %vm358, %v583, 0
  %v598 = vsel %vm358, %v585, 0
  %v601 = vsel %vm358, %v587, 0
  %v604 = vsel %vm358, %v589, 0
  %v607 = vsel %vm358, %v591, 0
  %v610 = vsel %vm358, %v593, 0
  %612 = vmatprep.subr.bf16.mxu0 0
  %613 = vmatpush1.bf16.xpose.msra.mxu0 0
  %614 = vmatprep.subr.bf16.mxu0 0
  %615 = vmatpush1.bf16.xpose.msra.mxu0 0
  %616 = vmatprep.subr.bf16.mxu0 0
  %617 = vmatpush1.bf16.xpose.msra.mxu0 0
  %618 = vmatprep.subr.bf16.mxu0 0
  %619 = vmatpush1.bf16.xpose.msra.mxu0 0
  %620 = vmatprep.subr.bf16.mxu0 0
  %621 = vmatpush1.bf16.xpose.msra.mxu0 0
  %622 = vmatprep.subr.bf16.mxu0 0
  %623 = vmatpush1.bf16.xpose.msra.mxu0 %v610
  %624 = vmatprep.subr.bf16.mxu0 0
  %625 = vmatpush1.bf16.xpose.msra.mxu0 %v607
  %626 = vmatprep.subr.bf16.mxu0 0
  %627 = vmatpush1.bf16.xpose.msra.mxu0 %v604
  %628 = vmatprep.subr.bf16.mxu0 0
  %629 = vmatpush2.bf16.xpose.msra.mxu0 0
  %630 = vmatprep.subr.bf16.mxu0 0
  %631 = vmatpush2.bf16.xpose.msra.mxu0 0
  %632 = vmatprep.subr.bf16.mxu0 0
  %633 = vmatpush2.bf16.xpose.msra.mxu0 0
  %634 = vmatprep.subr.bf16.mxu0 0
  %635 = vmatpush2.bf16.xpose.msra.mxu0 0
  %636 = vmatprep.subr.bf16.mxu0 0
  %637 = vmatpush2.bf16.xpose.msra.mxu0 0
  %638 = vmatprep.subr.bf16.mxu0 0
  %639 = vmatpush2.bf16.xpose.msra.mxu0 0
  %640 = vmatprep.subr.bf16.mxu0 0
  %641 = vmatpush2.bf16.xpose.msra.mxu0 0
  %642 = vmatprep.subr.bf16.mxu0 0
  %643 = vmatpush2.bf16.xpose.msra.mxu0 0
  %644 = vmatprep.mubr.bf16.mxu0 0
  %645 = vmatmul.mubr.bf16.gmra.mxu0 %v595
  %v646 = vpop.f32.mrf.mxu0
  %v647 = vadd.f32 0.0, %v646
  %v648 = vpop.f32.mrf.mxu0
  %v649 = vpop.f32.mrf.mxu0
  %v650 = vadd.f32 0.0, %v649
  %v651 = vpop.f32.mrf.mxu0
  %652 = vmatprep.mubr.bf16.mxu0 0
  %653 = vmatmul.mubr.bf16.gmra.mxu0 %v598
  %v654 = vpop.f32.mrf.mxu0
  %v655 = vadd.f32 0.0, %v654
  %v656 = vpop.f32.mrf.mxu0
  %v657 = vpop.f32.mrf.mxu0
  %v658 = vadd.f32 0.0, %v657
  %v659 = vpop.f32.mrf.mxu0
  %660 = vmatprep.mubr.bf16.mxu0 0
  %661 = vmatmul.mubr.bf16.gmra.mxu0 %v601
  %v662 = vpop.f32.mrf.mxu0
  %v663 = vadd.f32 0.0, %v662
  %v664 = vpop.f32.mrf.mxu0
  %v665 = vpop.f32.mrf.mxu0
  %v666 = vpop.f32.mrf.mxu0
  %667 = vdwg.mxu0
  %v668 = vmul.f32 %v647, 0.25
  %v669 = vmul.f32 %v650, 0.25
  %v670 = vmul.f32 %v655, 0.25
  %v671 = vmul.f32 %v658, 0.25
  %v672 = vmul.f32 %v663, 0.25
  %v673 = vadd.f32 %v668, %v341
  %v674 = vadd.f32 %v669, %v342
  %v675 = vadd.f32 %v670, %v343
  %v676 = vadd.f32 %v671, %v344
  %v677 = vadd.f32 %v672, %v345
  %v678 = vsel %vm443, %v673, -inf
  %679 = vmax.xlane.f32.xlu0 %v678
  %v680 = vpop.xlane.xlu0 %679
  %v681 = vsel %vm443, %v674, -inf
  %682 = vmax.xlane.f32.xlu0 %v681
  %v683 = vpop.xlane.xlu0 %682
  %v684 = vsel %vm443, %v675, -inf
  %685 = vmax.xlane.f32.xlu0 %v684
  %v686 = vpop.xlane.xlu0 %685
  %v687 = vsel %vm443, %v676, -inf
  %688 = vmax.xlane.f32.xlu0 %v687
  %v689 = vpop.xlane.xlu0 %688
  %v690 = vsel %vm443, %v677, -inf
  %691 = vmax.xlane.f32.xlu0 %v690
  %v692 = vpop.xlane.xlu0 %691
  %v693 = vsub.f32 %v673, %v680
  %v694 = vsub.f32 %v674, %v683
  %v695 = vsub.f32 %v675, %v686
  %v696 = vsub.f32 %v676, %v689
  %v697 = vsub.f32 %v677, %v692
  %v698 = vmul.f32 %v693, 1.442695
  %v699 = vpow.pop %v698
  %v700 = vmul.f32 %v694, 1.442695
  %v701 = vpow.pop %v700
  %v702 = vmul.f32 %v695, 1.442695
  %v703 = vpow.pop %v702
  %v704 = vmul.f32 %v696, 1.442695
  %v705 = vpow.pop %v704
  %v706 = vmul.f32 %v697, 1.442695
  %v707 = vpow.pop %v706
  %v708 = vsel %vm443, %v699, 0.0
  %709 = vadd.xlane.f32.xlu0 %v708
  %v710 = vpop.xlane.xlu0 %709
  %v711 = vsel %vm443, %v701, 0.0
  %712 = vadd.xlane.f32.xlu0 %v711
  %v713 = vpop.xlane.xlu0 %712
  %v714 = vsel %vm443, %v703, 0.0
  %715 = vadd.xlane.f32.xlu0 %v714
  %v716 = vpop.xlane.xlu0 %715
  %v717 = vsel %vm443, %v705, 0.0
  %718 = vadd.xlane.f32.xlu0 %v717
  %v719 = vpop.xlane.xlu0 %718
  %v720 = vsel %vm443, %v707, 0.0
  %721 = vadd.xlane.f32.xlu0 %v720
  %v722 = vpop.xlane.xlu0 %721
  %v723 = vrcp.pop %v710
  %v724 = vmul.f32 %v699, %v723
  %v725 = vrcp.pop %v713
  %v726 = vmul.f32 %v701, %v725
  %v727 = vrcp.pop %v716
  %v728 = vmul.f32 %v703, %v727
  %v729 = vrcp.pop %v719
  %v730 = vmul.f32 %v705, %v729
  %v731 = vrcp.pop %v722
  %v732 = vmul.f32 %v707, %v731
  %v733 = vpack.c.bf16 %v726, %v724
  %v734 = vpack.c.bf16 %v730, %v728
  %v735 = vpack.c.bf16 %v732, %v732
  %736 = vrot.lane.b32.xlu0 %v346, 48
  %v737 = vpop.permute.xlu0 %736
  %738 = vrot.lane.b32.xlu0 %v347, 48
  %v739 = vpop.permute.xlu0 %738
  %740 = vrot.lane.b32.xlu0 %v348, 48
  %v741 = vpop.permute.xlu0 %740
  %v745 = vsel %vm443, %v733, 0
  %v748 = vsel %vm443, %v734, 0
  %v751 = vsel %vm443, %v735, 0
  %v754 = vsel %vm519, %v741, 0
  %756 = vmatprep.subr.bf16.mxu0 0
  %757 = vmatpush1.bf16.msra.mxu0 0
  %758 = vmatprep.subr.bf16.mxu0 0
  %759 = vmatpush1.bf16.msra.mxu0 0
  %760 = vmatprep.subr.bf16.mxu0 0
  %761 = vmatpush1.bf16.msra.mxu0 0
  %762 = vmatprep.subr.bf16.mxu0 0
  %763 = vmatpush1.bf16.msra.mxu0 0
  %764 = vmatprep.subr.bf16.mxu0 0
  %765 = vmatpush1.bf16.msra.mxu0 0
  %766 = vmatprep.subr.bf16.mxu0 0
  %767 = vmatpush1.bf16.msra.mxu0 %v754
  %768 = vmatprep.subr.bf16.mxu0 0
  %769 = vmatpush1.bf16.msra.mxu0 %v739
  %770 = vmatprep.subr.bf16.mxu0 0
  %771 = vmatpush1.bf16.msra.mxu0 %v737
  %772 = vmatprep.subr.bf16.mxu0 0
  %773 = vmatpush2.bf16.msra.mxu0 0
  %774 = vmatprep.subr.bf16.mxu0 0
  %775 = vmatpush2.bf16.msra.mxu0 0
  %776 = vmatprep.subr.bf16.mxu0 0
  %777 = vmatpush2.bf16.msra.mxu0 0
  %778 = vmatprep.subr.bf16.mxu0 0
  %779 = vmatpush2.bf16.msra.mxu0 0
  %780 = vmatprep.subr.bf16.mxu0 0
  %781 = vmatpush2.bf16.msra.mxu0 0
  %782 = vmatprep.subr.bf16.mxu0 0
  %783 = vmatpush2.bf16.msra.mxu0 0
  %784 = vmatprep.subr.bf16.mxu0 0
  %785 = vmatpush2.bf16.msra.mxu0 0
  %786 = vmatprep.subr.bf16.mxu0 0
  %787 = vmatpush2.bf16.msra.mxu0 0
  %788 = vmatprep.mubr.bf16.mxu0 0
  %789 = vmatmul.mubr.bf16.gmra.mxu0 %v745
  %v790 = vpop.f32.mrf.mxu0
  %v791 = vadd.f32 0.0, %v790
  %v792 = vpop.f32.mrf.mxu0
  %v793 = vpop.f32.mrf.mxu0
  %v794 = vadd.f32 0.0, %v793
  %v795 = vpop.f32.mrf.mxu0
  %796 = vmatprep.mubr.bf16.mxu0 0
  %797 = vmatmul.mubr.bf16.gmra.mxu0 %v748
  %v798 = vpop.f32.mrf.mxu0
  %v799 = vadd.f32 0.0, %v798
  %v800 = vpop.f32.mrf.mxu0
  %v801 = vpop.f32.mrf.mxu0
  %v802 = vadd.f32 0.0, %v801
  %v803 = vpop.f32.mrf.mxu0
  %804 = vmatprep.mubr.bf16.mxu0 0
  %805 = vmatmul.mubr.bf16.gmra.mxu0 %v751
  %v806 = vpop.f32.mrf.mxu0
  %v807 = vadd.f32 0.0, %v806
  %v808 = vpop.f32.mrf.mxu0
  %v809 = vpop.f32.mrf.mxu0
  %v810 = vpop.f32.mrf.mxu0
  %811 = vdwg.mxu0
  %v812 = vpack.c.bf16 %v794, %v791
  %v813 = vpack.c.bf16 %v802, %v799
  %v814 = vpack.c.bf16 %v807, %v807
  %815 = vrot.lane.b32.xlu0 %v250, 32
  %v816 = vpop.permute.xlu0 %815
  %v819 = vsel %vm358, %v812, 0
  %v822 = vsel %vm358, %v813, 0
  %v825 = vsel %vm358, %v814, 0
  %827 = vmatprep.subr.bf16.mxu0 0
  %828 = vmatpush1.bf16.msra.mxu0 0
  %829 = vmatprep.subr.bf16.mxu0 0
  %830 = vmatpush1.bf16.msra.mxu0 0
  %831 = vmatprep.subr.bf16.mxu0 0
  %832 = vmatpush1.bf16.msra.mxu0 0
  %833 = vmatprep.subr.bf16.mxu0 0
  %834 = vmatpush1.bf16.msra.mxu0 0
  %835 = vmatprep.subr.bf16.mxu0 0
  %836 = vmatpush1.bf16.msra.mxu0 0
  %837 = vmatprep.subr.bf16.mxu0 0
  %838 = vmatpush1.bf16.msra.mxu0 0
  %839 = vmatprep.subr.bf16.mxu0 0
  %840 = vmatpush1.bf16.msra.mxu0 0
  %841 = vmatprep.subr.bf16.mxu0 0
  %842 = vmatpush1.bf16.msra.mxu0 %v816
  %843 = vmatprep.subr.bf16.mxu0 0
  %844 = vmatpush2.bf16.msra.mxu0 0
  %845 = vmatprep.subr.bf16.mxu0 0
  %846 = vmatpush2.bf16.msra.mxu0 0
  %847 = vmatprep.subr.bf16.mxu0 0
  %848 = vmatpush2.bf16.msra.mxu0 0
  %849 = vmatprep.subr.bf16.mxu0 0
  %850 = vmatpush2.bf16.msra.mxu0 0
  %851 = vmatprep.subr.bf16.mxu0 0
  %852 = vmatpush2.bf16.msra.mxu0 0
  %853 = vmatprep.subr.bf16.mxu0 0
  %854 = vmatpush2.bf16.msra.mxu0 0
  %855 = vmatprep.subr.bf16.mxu0 0
  %856 = vmatpush2.bf16.msra.mxu0 0
  %857 = vmatprep.subr.bf16.mxu0 0
  %858 = vmatpush2.bf16.msra.mxu0 0
  %859 = vmatprep.mubr.bf16.mxu0 0
  %860 = vmatmul.mubr.bf16.gmra.mxu0 %v819
  %v861 = vpop.f32.mrf.mxu0
  %v862 = vadd.f32 0.0, %v861
  %v863 = vpop.f32.mrf.mxu0
  %v864 = vpop.f32.mrf.mxu0
  %v865 = vadd.f32 0.0, %v864
  %v866 = vpop.f32.mrf.mxu0
  %867 = vmatprep.mubr.bf16.mxu0 0
  %868 = vmatmul.mubr.bf16.gmra.mxu0 %v822
  %v869 = vpop.f32.mrf.mxu0
  %v870 = vadd.f32 0.0, %v869
  %v871 = vpop.f32.mrf.mxu0
  %v872 = vpop.f32.mrf.mxu0
  %v873 = vadd.f32 0.0, %v872
  %v874 = vpop.f32.mrf.mxu0
  %875 = vmatprep.mubr.bf16.mxu0 0
  %876 = vmatmul.mubr.bf16.gmra.mxu0 %v825
  %v877 = vpop.f32.mrf.mxu0
  %v878 = vadd.f32 0.0, %v877
  %v879 = vpop.f32.mrf.mxu0
  %v880 = vpop.f32.mrf.mxu0
  %v881 = vpop.f32.mrf.mxu0
  %882 = vdwg.mxu0
  %883 = vrot.lane.b32.xlu0 %v249, 32
  %v884 = vpop.permute.xlu0 %883
  %v887 = vsel %vm358, %v579, 0
  %v890 = vsel %vm358, %v580, 0
  %v893 = vsel %vm358, %v581, 0
  %895 = vmatprep.subr.bf16.mxu0 0
  %896 = vmatpush1.bf16.msra.mxu0 0
  %897 = vmatprep.subr.bf16.mxu0 0
  %898 = vmatpush1.bf16.msra.mxu0 0
  %899 = vmatprep.subr.bf16.mxu0 0
  %900 = vmatpush1.bf16.msra.mxu0 0
  %901 = vmatprep.subr.bf16.mxu0 0
  %902 = vmatpush1.bf16.msra.mxu0 0
  %903 = vmatprep.subr.bf16.mxu0 0
  %904 = vmatpush1.bf16.msra.mxu0 0
  %905 = vmatprep.subr.bf16.mxu0 0
  %906 = vmatpush1.bf16.msra.mxu0 0
  %907 = vmatprep.subr.bf16.mxu0 0
  %908 = vmatpush1.bf16.msra.mxu0 0
  %909 = vmatprep.subr.bf16.mxu0 0
  %910 = vmatpush1.bf16.msra.mxu0 %v884
  %911 = vmatprep.subr.bf16.mxu0 0
  %912 = vmatpush2.bf16.msra.mxu0 0
  %913 = vmatprep.subr.bf16.mxu0 0
  %914 = vmatpush2.bf16.msra.mxu0 0
  %915 = vmatprep.subr.bf16.mxu0 0
  %916 = vmatpush2.bf16.msra.mxu0 0
  %917 = vmatprep.subr.bf16.mxu0 0
  %918 = vmatpush2.bf16.msra.mxu0 0
  %919 = vmatprep.subr.bf16.mxu0 0
  %920 = vmatpush2.bf16.msra.mxu0 0
  %921 = vmatprep.subr.bf16.mxu0 0
  %922 = vmatpush2.bf16.msra.mxu0 0
  %923 = vmatprep.subr.bf16.mxu0 0
  %924 = vmatpush2.bf16.msra.mxu0 0
  %925 = vmatprep.subr.bf16.mxu0 0
  %926 = vmatpush2.bf16.msra.mxu0 0
  %927 = vmatprep.mubr.bf16.mxu0 0
  %928 = vmatmul.mubr.bf16.gmra.mxu0 %v887
  %v929 = vpop.f32.mrf.mxu0
  %v930 = vadd.f32 %v862, %v929
  %v931 = vpop.f32.mrf.mxu0
  %v932 = vpop.f32.mrf.mxu0
  %v933 = vadd.f32 %v865, %v932
  %v934 = vpop.f32.mrf.mxu0
  %935 = vmatprep.mubr.bf16.mxu0 0
  %936 = vmatmul.mubr.bf16.gmra.mxu0 %v890
  %v937 = vpop.f32.mrf.mxu0
  %v938 = vadd.f32 %v870, %v937
  %v939 = vpop.f32.mrf.mxu0
  %v940 = vpop.f32.mrf.mxu0
  %v941 = vadd.f32 %v873, %v940
  %v942 = vpop.f32.mrf.mxu0
  %943 = vmatprep.mubr.bf16.mxu0 0
  %944 = vmatmul.mubr.bf16.gmra.mxu0 %v893
  %v945 = vpop.f32.mrf.mxu0
  %v946 = vadd.f32 %v878, %v945
  %v947 = vpop.f32.mrf.mxu0
  %v948 = vpop.f32.mrf.mxu0
  %v949 = vpop.f32.mrf.mxu0
  %950 = vdwg.mxu0
  %s951 = scalar_lea.vmem %s1, 40
  %v952 = vld [vmem:[%s951] sm:$0xff]
  %v953 = vld [vmem:[%s951 + $0x8] sm:$0xff]
  %v954 = vld [vmem:[%s951 + $0x10] sm:$0xff]
  %v955 = vld [vmem:[%s951 + $0x18] sm:$0xff]
  %v956 = vld [vmem:[%s951 + $0x20] sm:$0xff]
  %v957 = vpack.c.bf16 %v327, %v322
  %v958 = vpack.c.bf16 %v335, %v330
  %v959 = vpack.c.bf16 %v338, %v338
  %963 = vrot.lane.b32.xlu0 %v957, 96
  %v964 = vpop.permute.xlu0 %963
  %965 = vrot.lane.b32.xlu0 %v958, 96
  %v966 = vpop.permute.xlu0 %965
  %967 = vrot.lane.b32.xlu0 %v959, 96
  %v968 = vpop.permute.xlu0 %967
  %v970 = vsel %vm358, %v957, 0
  %v973 = vsel %vm358, %v958, 0
  %v976 = vsel %vm358, %v959, 0
  %v979 = vsel %vm358, %v964, 0
  %v982 = vsel %vm358, %v966, 0
  %v985 = vsel %vm358, %v968, 0
  %987 = vmatprep.subr.bf16.mxu0 0
  %988 = vmatpush1.bf16.xpose.msra.mxu0 0
  %989 = vmatprep.subr.bf16.mxu0 0
  %990 = vmatpush1.bf16.xpose.msra.mxu0 0
  %991 = vmatprep.subr.bf16.mxu0 0
  %992 = vmatpush1.bf16.xpose.msra.mxu0 0
  %993 = vmatprep.subr.bf16.mxu0 0
  %994 = vmatpush1.bf16.xpose.msra.mxu0 0
  %995 = vmatprep.subr.bf16.mxu0 0
  %996 = vmatpush1.bf16.xpose.msra.mxu0 0
  %997 = vmatprep.subr.bf16.mxu0 0
  %998 = vmatpush1.bf16.xpose.msra.mxu0 %v985
  %999 = vmatprep.subr.bf16.mxu0 0
  %1000 = vmatpush1.bf16.xpose.msra.mxu0 %v982
  %1001 = vmatprep.subr.bf16.mxu0 0
  %1002 = vmatpush1.bf16.xpose.msra.mxu0 %v979
  %1003 = vmatprep.subr.bf16.mxu0 0
  %1004 = vmatpush2.bf16.xpose.msra.mxu0 0
  %1005 = vmatprep.subr.bf16.mxu0 0
  %1006 = vmatpush2.bf16.xpose.msra.mxu0 0
  %1007 = vmatprep.subr.bf16.mxu0 0
  %1008 = vmatpush2.bf16.xpose.msra.mxu0 0
  %1009 = vmatprep.subr.bf16.mxu0 0
  %1010 = vmatpush2.bf16.xpose.msra.mxu0 0
  %1011 = vmatprep.subr.bf16.mxu0 0
  %1012 = vmatpush2.bf16.xpose.msra.mxu0 0
  %1013 = vmatprep.subr.bf16.mxu0 0
  %1014 = vmatpush2.bf16.xpose.msra.mxu0 0
  %1015 = vmatprep.subr.bf16.mxu0 0
  %1016 = vmatpush2.bf16.xpose.msra.mxu0 0
  %1017 = vmatprep.subr.bf16.mxu0 0
  %1018 = vmatpush2.bf16.xpose.msra.mxu0 0
  %1019 = vmatprep.mubr.bf16.mxu0 0
  %1020 = vmatmul.mubr.bf16.gmra.mxu0 %v970
  %v1021 = vpop.f32.mrf.mxu0
  %v1022 = vadd.f32 0.0, %v1021
  %v1023 = vpop.f32.mrf.mxu0
  %v1024 = vpop.f32.mrf.mxu0
  %v1025 = vadd.f32 0.0, %v1024
  %v1026 = vpop.f32.mrf.mxu0
  %1027 = vmatprep.mubr.bf16.mxu0 0
  %1028 = vmatmul.mubr.bf16.gmra.mxu0 %v973
  %v1029 = vpop.f32.mrf.mxu0
  %v1030 = vadd.f32 0.0, %v1029
  %v1031 = vpop.f32.mrf.mxu0
  %v1032 = vpop.f32.mrf.mxu0
  %v1033 = vadd.f32 0.0, %v1032
  %v1034 = vpop.f32.mrf.mxu0
  %1035 = vmatprep.mubr.bf16.mxu0 0
  %1036 = vmatmul.mubr.bf16.gmra.mxu0 %v976
  %v1037 = vpop.f32.mrf.mxu0
  %v1038 = vadd.f32 0.0, %v1037
  %v1039 = vpop.f32.mrf.mxu0
  %v1040 = vpop.f32.mrf.mxu0
  %v1041 = vpop.f32.mrf.mxu0
  %1042 = vdwg.mxu0
  %v1043 = vmul.f32 %v1022, 0.25
  %v1044 = vmul.f32 %v1025, 0.25
  %v1045 = vmul.f32 %v1030, 0.25
  %v1046 = vmul.f32 %v1033, 0.25
  %v1047 = vmul.f32 %v1038, 0.25
  %v1048 = vadd.f32 %v1043, %v952
  %v1049 = vadd.f32 %v1044, %v953
  %v1050 = vadd.f32 %v1045, %v954
  %v1051 = vadd.f32 %v1046, %v955
  %v1052 = vadd.f32 %v1047, %v956
  %v1053 = vsel %vm443, %v1048, -inf
  %1054 = vmax.xlane.f32.xlu0 %v1053
  %v1055 = vpop.xlane.xlu0 %1054
  %v1056 = vsel %vm443, %v1049, -inf
  %1057 = vmax.xlane.f32.xlu0 %v1056
  %v1058 = vpop.xlane.xlu0 %1057
  %v1059 = vsel %vm443, %v1050, -inf
  %1060 = vmax.xlane.f32.xlu0 %v1059
  %v1061 = vpop.xlane.xlu0 %1060
  %v1062 = vsel %vm443, %v1051, -inf
  %1063 = vmax.xlane.f32.xlu0 %v1062
  %v1064 = vpop.xlane.xlu0 %1063
  %v1065 = vsel %vm443, %v1052, -inf
  %1066 = vmax.xlane.f32.xlu0 %v1065
  %v1067 = vpop.xlane.xlu0 %1066
  %v1068 = vsub.f32 %v1048, %v1055
  %v1069 = vsub.f32 %v1049, %v1058
  %v1070 = vsub.f32 %v1050, %v1061
  %v1071 = vsub.f32 %v1051, %v1064
  %v1072 = vsub.f32 %v1052, %v1067
  %v1073 = vmul.f32 %v1068, 1.442695
  %v1074 = vpow.pop %v1073
  %v1075 = vmul.f32 %v1069, 1.442695
  %v1076 = vpow.pop %v1075
  %v1077 = vmul.f32 %v1070, 1.442695
  %v1078 = vpow.pop %v1077
  %v1079 = vmul.f32 %v1071, 1.442695
  %v1080 = vpow.pop %v1079
  %v1081 = vmul.f32 %v1072, 1.442695
  %v1082 = vpow.pop %v1081
  %v1083 = vsel %vm443, %v1074, 0.0
  %1084 = vadd.xlane.f32.xlu0 %v1083
  %v1085 = vpop.xlane.xlu0 %1084
  %v1086 = vsel %vm443, %v1076, 0.0
  %1087 = vadd.xlane.f32.xlu0 %v1086
  %v1088 = vpop.xlane.xlu0 %1087
  %v1089 = vsel %vm443, %v1078, 0.0
  %1090 = vadd.xlane.f32.xlu0 %v1089
  %v1091 = vpop.xlane.xlu0 %1090
  %v1092 = vsel %vm443, %v1080, 0.0
  %1093 = vadd.xlane.f32.xlu0 %v1092
  %v1094 = vpop.xlane.xlu0 %1093
  %v1095 = vsel %vm443, %v1082, 0.0
  %1096 = vadd.xlane.f32.xlu0 %v1095
  %v1097 = vpop.xlane.xlu0 %1096
  %v1098 = vrcp.pop %v1085
  %v1099 = vmul.f32 %v1074, %v1098
  %v1100 = vrcp.pop %v1088
  %v1101 = vmul.f32 %v1076, %v1100
  %v1102 = vrcp.pop %v1091
  %v1103 = vmul.f32 %v1078, %v1102
  %v1104 = vrcp.pop %v1094
  %v1105 = vmul.f32 %v1080, %v1104
  %v1106 = vrcp.pop %v1097
  %v1107 = vmul.f32 %v1082, %v1106
  %v1108 = vpack.c.bf16 %v1101, %v1099
  %v1109 = vpack.c.bf16 %v1105, %v1103
  %v1110 = vpack.c.bf16 %v1107, %v1107
  %1111 = vrot.lane.b32.xlu0 %v957, 64
  %v1112 = vpop.permute.xlu0 %1111
  %1113 = vrot.lane.b32.xlu0 %v958, 64
  %v1114 = vpop.permute.xlu0 %1113
  %1115 = vrot.lane.b32.xlu0 %v959, 64
  %v1116 = vpop.permute.xlu0 %1115
  %v1120 = vsel %vm443, %v1108, 0
  %v1123 = vsel %vm443, %v1109, 0
  %v1126 = vsel %vm443, %v1110, 0
  %v1129 = vsel %vm519, %v1116, 0
  %1131 = vmatprep.subr.bf16.mxu0 0
  %1132 = vmatpush1.bf16.msra.mxu0 0
  %1133 = vmatprep.subr.bf16.mxu0 0
  %1134 = vmatpush1.bf16.msra.mxu0 0
  %1135 = vmatprep.subr.bf16.mxu0 0
  %1136 = vmatpush1.bf16.msra.mxu0 0
  %1137 = vmatprep.subr.bf16.mxu0 0
  %1138 = vmatpush1.bf16.msra.mxu0 0
  %1139 = vmatprep.subr.bf16.mxu0 0
  %1140 = vmatpush1.bf16.msra.mxu0 0
  %1141 = vmatprep.subr.bf16.mxu0 0
  %1142 = vmatpush1.bf16.msra.mxu0 %v1129
  %1143 = vmatprep.subr.bf16.mxu0 0
  %1144 = vmatpush1.bf16.msra.mxu0 %v1114
  %1145 = vmatprep.subr.bf16.mxu0 0
  %1146 = vmatpush1.bf16.msra.mxu0 %v1112
  %1147 = vmatprep.subr.bf16.mxu0 0
  %1148 = vmatpush2.bf16.msra.mxu0 0
  %1149 = vmatprep.subr.bf16.mxu0 0
  %1150 = vmatpush2.bf16.msra.mxu0 0
  %1151 = vmatprep.subr.bf16.mxu0 0
  %1152 = vmatpush2.bf16.msra.mxu0 0
  %1153 = vmatprep.subr.bf16.mxu0 0
  %1154 = vmatpush2.bf16.msra.mxu0 0
  %1155 = vmatprep.subr.bf16.mxu0 0
  %1156 = vmatpush2.bf16.msra.mxu0 0
  %1157 = vmatprep.subr.bf16.mxu0 0
  %1158 = vmatpush2.bf16.msra.mxu0 0
  %1159 = vmatprep.subr.bf16.mxu0 0
  %1160 = vmatpush2.bf16.msra.mxu0 0
  %1161 = vmatprep.subr.bf16.mxu0 0
  %1162 = vmatpush2.bf16.msra.mxu0 0
  %1163 = vmatprep.mubr.bf16.mxu0 0
  %1164 = vmatmul.mubr.bf16.gmra.mxu0 %v1120
  %v1165 = vpop.f32.mrf.mxu0
  %v1166 = vadd.f32 0.0, %v1165
  %v1167 = vpop.f32.mrf.mxu0
  %v1168 = vpop.f32.mrf.mxu0
  %v1169 = vadd.f32 0.0, %v1168
  %v1170 = vpop.f32.mrf.mxu0
  %1171 = vmatprep.mubr.bf16.mxu0 0
  %1172 = vmatmul.mubr.bf16.gmra.mxu0 %v1123
  %v1173 = vpop.f32.mrf.mxu0
  %v1174 = vadd.f32 0.0, %v1173
  %v1175 = vpop.f32.mrf.mxu0
  %v1176 = vpop.f32.mrf.mxu0
  %v1177 = vadd.f32 0.0, %v1176
  %v1178 = vpop.f32.mrf.mxu0
  %1179 = vmatprep.mubr.bf16.mxu0 0
  %1180 = vmatmul.mubr.bf16.gmra.mxu0 %v1126
  %v1181 = vpop.f32.mrf.mxu0
  %v1182 = vadd.f32 0.0, %v1181
  %v1183 = vpop.f32.mrf.mxu0
  %v1184 = vpop.f32.mrf.mxu0
  %v1185 = vpop.f32.mrf.mxu0
  %1186 = vdwg.mxu0
  %v1187 = vpack.c.bf16 %v1169, %v1166
  %v1188 = vpack.c.bf16 %v1177, %v1174
  %v1189 = vpack.c.bf16 %v1182, %v1182
  %1190 = vrot.lane.b32.xlu0 %v957, 112
  %v1191 = vpop.permute.xlu0 %1190
  %1192 = vrot.lane.b32.xlu0 %v958, 112
  %v1193 = vpop.permute.xlu0 %1192
  %1194 = vrot.lane.b32.xlu0 %v959, 112
  %v1195 = vpop.permute.xlu0 %1194
  %1196 = vrot.lane.b32.xlu0 %v957, 80
  %v1197 = vpop.permute.xlu0 %1196
  %1198 = vrot.lane.b32.xlu0 %v958, 80
  %v1199 = vpop.permute.xlu0 %1198
  %1200 = vrot.lane.b32.xlu0 %v959, 80
  %v1201 = vpop.permute.xlu0 %1200
  %v1203 = vsel %vm358, %v1191, 0
  %v1206 = vsel %vm358, %v1193, 0
  %v1209 = vsel %vm358, %v1195, 0
  %v1212 = vsel %vm358, %v1197, 0
  %v1215 = vsel %vm358, %v1199, 0
  %v1218 = vsel %vm358, %v1201, 0
  %1220 = vmatprep.subr.bf16.mxu0 0
  %1221 = vmatpush1.bf16.xpose.msra.mxu0 0
  %1222 = vmatprep.subr.bf16.mxu0 0
  %1223 = vmatpush1.bf16.xpose.msra.mxu0 0
  %1224 = vmatprep.subr.bf16.mxu0 0
  %1225 = vmatpush1.bf16.xpose.msra.mxu0 0
  %1226 = vmatprep.subr.bf16.mxu0 0
  %1227 = vmatpush1.bf16.xpose.msra.mxu0 0
  %1228 = vmatprep.subr.bf16.mxu0 0
  %1229 = vmatpush1.bf16.xpose.msra.mxu0 0
  %1230 = vmatprep.subr.bf16.mxu0 0
  %1231 = vmatpush1.bf16.xpose.msra.mxu0 %v1218
  %1232 = vmatprep.subr.bf16.mxu0 0
  %1233 = vmatpush1.bf16.xpose.msra.mxu0 %v1215
  %1234 = vmatprep.subr.bf16.mxu0 0
  %1235 = vmatpush1.bf16.xpose.msra.mxu0 %v1212
  %1236 = vmatprep.subr.bf16.mxu0 0
  %1237 = vmatpush2.bf16.xpose.msra.mxu0 0
  %1238 = vmatprep.subr.bf16.mxu0 0
  %1239 = vmatpush2.bf16.xpose.msra.mxu0 0
  %1240 = vmatprep.subr.bf16.mxu0 0
  %1241 = vmatpush2.bf16.xpose.msra.mxu0 0
  %1242 = vmatprep.subr.bf16.mxu0 0
  %1243 = vmatpush2.bf16.xpose.msra.mxu0 0
  %1244 = vmatprep.subr.bf16.mxu0 0
  %1245 = vmatpush2.bf16.xpose.msra.mxu0 0
  %1246 = vmatprep.subr.bf16.mxu0 0
  %1247 = vmatpush2.bf16.xpose.msra.mxu0 0
  %1248 = vmatprep.subr.bf16.mxu0 0
  %1249 = vmatpush2.bf16.xpose.msra.mxu0 0
  %1250 = vmatprep.subr.bf16.mxu0 0
  %1251 = vmatpush2.bf16.xpose.msra.mxu0 0
  %1252 = vmatprep.mubr.bf16.mxu0 0
  %1253 = vmatmul.mubr.bf16.gmra.mxu0 %v1203
  %v1254 = vpop.f32.mrf.mxu0
  %v1255 = vadd.f32 0.0, %v1254
  %v1256 = vpop.f32.mrf.mxu0
  %v1257 = vpop.f32.mrf.mxu0
  %v1258 = vadd.f32 0.0, %v1257
  %v1259 = vpop.f32.mrf.mxu0
  %1260 = vmatprep.mubr.bf16.mxu0 0
  %1261 = vmatmul.mubr.bf16.gmra.mxu0 %v1206
  %v1262 = vpop.f32.mrf.mxu0
  %v1263 = vadd.f32 0.0, %v1262
  %v1264 = vpop.f32.mrf.mxu0
  %v1265 = vpop.f32.mrf.mxu0
  %v1266 = vadd.f32 0.0, %v1265
  %v1267 = vpop.f32.mrf.mxu0
  %1268 = vmatprep.mubr.bf16.mxu0 0
  %1269 = vmatmul.mubr.bf16.gmra.mxu0 %v1209
  %v1270 = vpop.f32.mrf.mxu0
  %v1271 = vadd.f32 0.0, %v1270
  %v1272 = vpop.f32.mrf.mxu0
  %v1273 = vpop.f32.mrf.mxu0
  %v1274 = vpop.f32.mrf.mxu0
  %1275 = vdwg.mxu0
  %v1276 = vmul.f32 %v1255, 0.25
  %v1277 = vmul.f32 %v1258, 0.25
  %v1278 = vmul.f32 %v1263, 0.25
  %v1279 = vmul.f32 %v1266, 0.25
  %v1280 = vmul.f32 %v1271, 0.25
  %v1281 = vadd.f32 %v1276, %v952
  %v1282 = vadd.f32 %v1277, %v953
  %v1283 = vadd.f32 %v1278, %v954
  %v1284 = vadd.f32 %v1279, %v955
  %v1285 = vadd.f32 %v1280, %v956
  %v1286 = vsel %vm443, %v1281, -inf
  %1287 = vmax.xlane.f32.xlu0 %v1286
  %v1288 = vpop.xlane.xlu0 %1287
  %v1289 = vsel %vm443, %v1282, -inf
  %1290 = vmax.xlane.f32.xlu0 %v1289
  %v1291 = vpop.xlane.xlu0 %1290
  %v1292 = vsel %vm443, %v1283, -inf
  %1293 = vmax.xlane.f32.xlu0 %v1292
  %v1294 = vpop.xlane.xlu0 %1293
  %v1295 = vsel %vm443, %v1284, -inf
  %1296 = vmax.xlane.f32.xlu0 %v1295
  %v1297 = vpop.xlane.xlu0 %1296
  %v1298 = vsel %vm443, %v1285, -inf
  %1299 = vmax.xlane.f32.xlu0 %v1298
  %v1300 = vpop.xlane.xlu0 %1299
  %v1301 = vsub.f32 %v1281, %v1288
  %v1302 = vsub.f32 %v1282, %v1291
  %v1303 = vsub.f32 %v1283, %v1294
  %v1304 = vsub.f32 %v1284, %v1297
  %v1305 = vsub.f32 %v1285, %v1300
  %v1306 = vmul.f32 %v1301, 1.442695
  %v1307 = vpow.pop %v1306
  %v1308 = vmul.f32 %v1302, 1.442695
  %v1309 = vpow.pop %v1308
  %v1310 = vmul.f32 %v1303, 1.442695
  %v1311 = vpow.pop %v1310
  %v1312 = vmul.f32 %v1304, 1.442695
  %v1313 = vpow.pop %v1312
  %v1314 = vmul.f32 %v1305, 1.442695
  %v1315 = vpow.pop %v1314
  %v1316 = vsel %vm443, %v1307, 0.0
  %1317 = vadd.xlane.f32.xlu0 %v1316
  %v1318 = vpop.xlane.xlu0 %1317
  %v1319 = vsel %vm443, %v1309, 0.0
  %1320 = vadd.xlane.f32.xlu0 %v1319
  %v1321 = vpop.xlane.xlu0 %1320
  %v1322 = vsel %vm443, %v1311, 0.0
  %1323 = vadd.xlane.f32.xlu0 %v1322
  %v1324 = vpop.xlane.xlu0 %1323
  %v1325 = vsel %vm443, %v1313, 0.0
  %1326 = vadd.xlane.f32.xlu0 %v1325
  %v1327 = vpop.xlane.xlu0 %1326
  %v1328 = vsel %vm443, %v1315, 0.0
  %1329 = vadd.xlane.f32.xlu0 %v1328
  %v1330 = vpop.xlane.xlu0 %1329
  %v1331 = vrcp.pop %v1318
  %v1332 = vmul.f32 %v1307, %v1331
  %v1333 = vrcp.pop %v1321
  %v1334 = vmul.f32 %v1309, %v1333
  %v1335 = vrcp.pop %v1324
  %v1336 = vmul.f32 %v1311, %v1335
  %v1337 = vrcp.pop %v1327
  %v1338 = vmul.f32 %v1313, %v1337
  %v1339 = vrcp.pop %v1330
  %v1340 = vmul.f32 %v1315, %v1339
  %v1341 = vpack.c.bf16 %v1334, %v1332
  %v1342 = vpack.c.bf16 %v1338, %v1336
  %v1343 = vpack.c.bf16 %v1340, %v1340
  %1344 = vrot.lane.b32.xlu0 %v957, 48
  %v1345 = vpop.permute.xlu0 %1344
  %1346 = vrot.lane.b32.xlu0 %v958, 48
  %v1347 = vpop.permute.xlu0 %1346
  %1348 = vrot.lane.b32.xlu0 %v959, 48
  %v1349 = vpop.permute.xlu0 %1348
  %v1353 = vsel %vm443, %v1341, 0
  %v1356 = vsel %vm443, %v1342, 0
  %v1359 = vsel %vm443, %v1343, 0
  %v1362 = vsel %vm519, %v1349, 0
  %1364 = vmatprep.subr.bf16.mxu0 0
  %1365 = vmatpush1.bf16.msra.mxu0 0
  %1366 = vmatprep.subr.bf16.mxu0 0
  %1367 = vmatpush1.bf16.msra.mxu0 0
  %1368 = vmatprep.subr.bf16.mxu0 0
  %1369 = vmatpush1.bf16.msra.mxu0 0
  %1370 = vmatprep.subr.bf16.mxu0 0
  %1371 = vmatpush1.bf16.msra.mxu0 0
  %1372 = vmatprep.subr.bf16.mxu0 0
  %1373 = vmatpush1.bf16.msra.mxu0 0
  %1374 = vmatprep.subr.bf16.mxu0 0
  %1375 = vmatpush1.bf16.msra.mxu0 %v1362
  %1376 = vmatprep.subr.bf16.mxu0 0
  %1377 = vmatpush1.bf16.msra.mxu0 %v1347
  %1378 = vmatprep.subr.bf16.mxu0 0
  %1379 = vmatpush1.bf16.msra.mxu0 %v1345
  %1380 = vmatprep.subr.bf16.mxu0 0
  %1381 = vmatpush2.bf16.msra.mxu0 0
  %1382 = vmatprep.subr.bf16.mxu0 0
  %1383 = vmatpush2.bf16.msra.mxu0 0
  %1384 = vmatprep.subr.bf16.mxu0 0
  %1385 = vmatpush2.bf16.msra.mxu0 0
  %1386 = vmatprep.subr.bf16.mxu0 0
  %1387 = vmatpush2.bf16.msra.mxu0 0
  %1388 = vmatprep.subr.bf16.mxu0 0
  %1389 = vmatpush2.bf16.msra.mxu0 0
  %1390 = vmatprep.subr.bf16.mxu0 0
  %1391 = vmatpush2.bf16.msra.mxu0 0
  %1392 = vmatprep.subr.bf16.mxu0 0
  %1393 = vmatpush2.bf16.msra.mxu0 0
  %1394 = vmatprep.subr.bf16.mxu0 0
  %1395 = vmatpush2.bf16.msra.mxu0 0
  %1396 = vmatprep.mubr.bf16.mxu0 0
  %1397 = vmatmul.mubr.bf16.gmra.mxu0 %v1353
  %v1398 = vpop.f32.mrf.mxu0
  %v1399 = vadd.f32 0.0, %v1398
  %v1400 = vpop.f32.mrf.mxu0
  %v1401 = vpop.f32.mrf.mxu0
  %v1402 = vadd.f32 0.0, %v1401
  %v1403 = vpop.f32.mrf.mxu0
  %1404 = vmatprep.mubr.bf16.mxu0 0
  %1405 = vmatmul.mubr.bf16.gmra.mxu0 %v1356
  %v1406 = vpop.f32.mrf.mxu0
  %v1407 = vadd.f32 0.0, %v1406
  %v1408 = vpop.f32.mrf.mxu0
  %v1409 = vpop.f32.mrf.mxu0
  %v1410 = vadd.f32 0.0, %v1409
  %v1411 = vpop.f32.mrf.mxu0
  %1412 = vmatprep.mubr.bf16.mxu0 0
  %1413 = vmatmul.mubr.bf16.gmra.mxu0 %v1359
  %v1414 = vpop.f32.mrf.mxu0
  %v1415 = vadd.f32 0.0, %v1414
  %v1416 = vpop.f32.mrf.mxu0
  %v1417 = vpop.f32.mrf.mxu0
  %v1418 = vpop.f32.mrf.mxu0
  %1419 = vdwg.mxu0
  %v1420 = vpack.c.bf16 %v1402, %v1399
  %v1421 = vpack.c.bf16 %v1410, %v1407
  %v1422 = vpack.c.bf16 %v1415, %v1415
  %v1424 = vsel %vm358, %v1420, 0
  %v1427 = vsel %vm358, %v1421, 0
  %v1430 = vsel %vm358, %v1422, 0
  %1432 = vmatprep.subr.bf16.mxu0 0
  %1433 = vmatpush1.bf16.msra.mxu0 0
  %1434 = vmatprep.subr.bf16.mxu0 0
  %1435 = vmatpush1.bf16.msra.mxu0 0
  %1436 = vmatprep.subr.bf16.mxu0 0
  %1437 = vmatpush1.bf16.msra.mxu0 0
  %1438 = vmatprep.subr.bf16.mxu0 0
  %1439 = vmatpush1.bf16.msra.mxu0 0
  %1440 = vmatprep.subr.bf16.mxu0 0
  %1441 = vmatpush1.bf16.msra.mxu0 0
  %1442 = vmatprep.subr.bf16.mxu0 0
  %1443 = vmatpush1.bf16.msra.mxu0 0
  %1444 = vmatprep.subr.bf16.mxu0 0
  %1445 = vmatpush1.bf16.msra.mxu0 0
  %1446 = vmatprep.subr.bf16.mxu0 0
  %1447 = vmatpush1.bf16.msra.mxu0 %v816
  %1448 = vmatprep.subr.bf16.mxu0 0
  %1449 = vmatpush2.bf16.msra.mxu0 0
  %1450 = vmatprep.subr.bf16.mxu0 0
  %1451 = vmatpush2.bf16.msra.mxu0 0
  %1452 = vmatprep.subr.bf16.mxu0 0
  %1453 = vmatpush2.bf16.msra.mxu0 0
  %1454 = vmatprep.subr.bf16.mxu0 0
  %1455 = vmatpush2.bf16.msra.mxu0 0
  %1456 = vmatprep.subr.bf16.mxu0 0
  %1457 = vmatpush2.bf16.msra.mxu0 0
  %1458 = vmatprep.subr.bf16.mxu0 0
  %1459 = vmatpush2.bf16.msra.mxu0 0
  %1460 = vmatprep.subr.bf16.mxu0 0
  %1461 = vmatpush2.bf16.msra.mxu0 0
  %1462 = vmatprep.subr.bf16.mxu0 0
  %1463 = vmatpush2.bf16.msra.mxu0 0
  %1464 = vmatprep.mubr.bf16.mxu0 0
  %1465 = vmatmul.mubr.bf16.gmra.mxu0 %v1424
  %v1466 = vpop.f32.mrf.mxu0
  %v1467 = vadd.f32 0.0, %v1466
  %v1468 = vpop.f32.mrf.mxu0
  %v1469 = vpop.f32.mrf.mxu0
  %v1470 = vadd.f32 0.0, %v1469
  %v1471 = vpop.f32.mrf.mxu0
  %1472 = vmatprep.mubr.bf16.mxu0 0
  %1473 = vmatmul.mubr.bf16.gmra.mxu0 %v1427
  %v1474 = vpop.f32.mrf.mxu0
  %v1475 = vadd.f32 0.0, %v1474
  %v1476 = vpop.f32.mrf.mxu0
  %v1477 = vpop.f32.mrf.mxu0
  %v1478 = vadd.f32 0.0, %v1477
  %v1479 = vpop.f32.mrf.mxu0
  %1480 = vmatprep.mubr.bf16.mxu0 0
  %1481 = vmatmul.mubr.bf16.gmra.mxu0 %v1430
  %v1482 = vpop.f32.mrf.mxu0
  %v1483 = vadd.f32 0.0, %v1482
  %v1484 = vpop.f32.mrf.mxu0
  %v1485 = vpop.f32.mrf.mxu0
  %v1486 = vpop.f32.mrf.mxu0
  %1487 = vdwg.mxu0
  %v1489 = vsel %vm358, %v1187, 0
  %v1492 = vsel %vm358, %v1188, 0
  %v1495 = vsel %vm358, %v1189, 0
  %1497 = vmatprep.subr.bf16.mxu0 0
  %1498 = vmatpush1.bf16.msra.mxu0 0
  %1499 = vmatprep.subr.bf16.mxu0 0
  %1500 = vmatpush1.bf16.msra.mxu0 0
  %1501 = vmatprep.subr.bf16.mxu0 0
  %1502 = vmatpush1.bf16.msra.mxu0 0
  %1503 = vmatprep.subr.bf16.mxu0 0
  %1504 = vmatpush1.bf16.msra.mxu0 0
  %1505 = vmatprep.subr.bf16.mxu0 0
  %1506 = vmatpush1.bf16.msra.mxu0 0
  %1507 = vmatprep.subr.bf16.mxu0 0
  %1508 = vmatpush1.bf16.msra.mxu0 0
  %1509 = vmatprep.subr.bf16.mxu0 0
  %1510 = vmatpush1.bf16.msra.mxu0 0
  %1511 = vmatprep.subr.bf16.mxu0 0
  %1512 = vmatpush1.bf16.msra.mxu0 %v884
  %1513 = vmatprep.subr.bf16.mxu0 0
  %1514 = vmatpush2.bf16.msra.mxu0 0
  %1515 = vmatprep.subr.bf16.mxu0 0
  %1516 = vmatpush2.bf16.msra.mxu0 0
  %1517 = vmatprep.subr.bf16.mxu0 0
  %1518 = vmatpush2.bf16.msra.mxu0 0
  %1519 = vmatprep.subr.bf16.mxu0 0
  %1520 = vmatpush2.bf16.msra.mxu0 0
  %1521 = vmatprep.subr.bf16.mxu0 0
  %1522 = vmatpush2.bf16.msra.mxu0 0
  %1523 = vmatprep.subr.bf16.mxu0 0
  %1524 = vmatpush2.bf16.msra.mxu0 0
  %1525 = vmatprep.subr.bf16.mxu0 0
  %1526 = vmatpush2.bf16.msra.mxu0 0
  %1527 = vmatprep.subr.bf16.mxu0 0
  %1528 = vmatpush2.bf16.msra.mxu0 0
  %1529 = vmatprep.mubr.bf16.mxu0 0
  %1530 = vmatmul.mubr.bf16.gmra.mxu0 %v1489
  %v1531 = vpop.f32.mrf.mxu0
  %v1532 = vadd.f32 %v1467, %v1531
  %v1533 = vpop.f32.mrf.mxu0
  %v1534 = vpop.f32.mrf.mxu0
  %v1535 = vadd.f32 %v1470, %v1534
  %v1536 = vpop.f32.mrf.mxu0
  %1537 = vmatprep.mubr.bf16.mxu0 0
  %1538 = vmatmul.mubr.bf16.gmra.mxu0 %v1492
  %v1539 = vpop.f32.mrf.mxu0
  %v1540 = vadd.f32 %v1475, %v1539
  %v1541 = vpop.f32.mrf.mxu0
  %v1542 = vpop.f32.mrf.mxu0
  %v1543 = vadd.f32 %v1478, %v1542
  %v1544 = vpop.f32.mrf.mxu0
  %1545 = vmatprep.mubr.bf16.mxu0 0
  %1546 = vmatmul.mubr.bf16.gmra.mxu0 %v1495
  %v1547 = vpop.f32.mrf.mxu0
  %v1548 = vadd.f32 %v1483, %v1547
  %v1549 = vpop.f32.mrf.mxu0
  %v1550 = vpop.f32.mrf.mxu0
  %v1551 = vpop.f32.mrf.mxu0
  %1552 = vdwg.mxu0
  %1554 = vrot.lane.b32.xlu0 %v240, 32
  %v1555 = vpop.permute.xlu0 %1554
  %v1557 = vadd.f32 %v930, %v1555
  %v1558 = vadd.f32 %v933, %v1555
  %v1559 = vadd.f32 %v938, %v1555
  %v1560 = vadd.f32 %v941, %v1555
  %v1561 = vadd.f32 %v946, %v1555
  %v1562 = vadd.f32 %v1532, %v1555
  %v1563 = vadd.f32 %v1535, %v1555
  %v1564 = vadd.f32 %v1540, %v1555
  %v1565 = vadd.f32 %v1543, %v1555
  %v1566 = vadd.f32 %v1548, %v1555
  %v1567 = vadd.f32 %v36, %v1557
  %v1568 = vadd.f32 %v37, %v1558
  %v1569 = vadd.f32 %v38, %v1559
  %v1570 = vadd.f32 %v39, %v1560
  %v1571 = vadd.f32 %v40, %v1561
  %v1572 = vadd.f32 %v41, %v1562
  %v1573 = vadd.f32 %v42, %v1563
  %v1574 = vadd.f32 %v43, %v1564
  %v1575 = vadd.f32 %v44, %v1565
  %v1576 = vadd.f32 %v45, %v1566
  %v1577 = vsel %vm72, %v1567, 0.0
  %1578 = vadd.xlane.f32.xlu0 %v1577
  %v1579 = vpop.xlane.xlu0 %1578
  %v1580 = vsel %vm72, %v1568, 0.0
  %1581 = vadd.xlane.f32.xlu0 %v1580
  %v1582 = vpop.xlane.xlu0 %1581
  %v1583 = vsel %vm72, %v1569, 0.0
  %1584 = vadd.xlane.f32.xlu0 %v1583
  %v1585 = vpop.xlane.xlu0 %1584
  %v1586 = vsel %vm72, %v1570, 0.0
  %1587 = vadd.xlane.f32.xlu0 %v1586
  %v1588 = vpop.xlane.xlu0 %1587
  %v1589 = vsel %vm72, %v1571, 0.0
  %1590 = vadd.xlane.f32.xlu0 %v1589
  %v1591 = vpop.xlane.xlu0 %1590
  %v1592 = vsel %vm72, %v1572, 0.0
  %1593 = vadd.xlane.f32.xlu0 %v1592
  %v1594 = vpop.xlane.xlu0 %1593
  %v1595 = vsel %vm72, %v1573, 0.0
  %1596 = vadd.xlane.f32.xlu0 %v1595
  %v1597 = vpop.xlane.xlu0 %1596
  %v1598 = vsel %vm72, %v1574, 0.0
  %1599 = vadd.xlane.f32.xlu0 %v1598
  %v1600 = vpop.xlane.xlu0 %1599
  %v1601 = vsel %vm72, %v1575, 0.0
  %1602 = vadd.xlane.f32.xlu0 %v1601
  %v1603 = vpop.xlane.xlu0 %1602
  %v1604 = vsel %vm72, %v1576, 0.0
  %1605 = vadd.xlane.f32.xlu0 %v1604
  %v1606 = vpop.xlane.xlu0 %1605
  %v1607 = vmul.f32 %v1579, %v103
  %v1608 = vmul.f32 %v1582, %v103
  %v1609 = vmul.f32 %v1585, %v103
  %v1610 = vmul.f32 %v1588, %v103
  %v1611 = vmul.f32 %v1591, %v103
  %v1612 = vmul.f32 %v1594, %v103
  %v1613 = vmul.f32 %v1597, %v103
  %v1614 = vmul.f32 %v1600, %v103
  %v1615 = vmul.f32 %v1603, %v103
  %v1616 = vmul.f32 %v1606, %v103
  %v1617 = vsub.f32 %v1567, %v1607
  %v1618 = vsub.f32 %v1568, %v1608
  %v1619 = vsub.f32 %v1569, %v1609
  %v1620 = vsub.f32 %v1570, %v1610
  %v1621 = vsub.f32 %v1571, %v1611
  %v1622 = vsub.f32 %v1572, %v1612
  %v1623 = vsub.f32 %v1573, %v1613
  %v1624 = vsub.f32 %v1574, %v1614
  %v1625 = vsub.f32 %v1575, %v1615
  %v1626 = vsub.f32 %v1576, %v1616
  %v1627 = vmul.f32 %v1617, %v1617
  %v1628 = vmul.f32 %v1618, %v1618
  %v1629 = vmul.f32 %v1619, %v1619
  %v1630 = vmul.f32 %v1620, %v1620
  %v1631 = vmul.f32 %v1621, %v1621
  %v1632 = vmul.f32 %v1622, %v1622
  %v1633 = vmul.f32 %v1623, %v1623
  %v1634 = vmul.f32 %v1624, %v1624
  %v1635 = vmul.f32 %v1625, %v1625
  %v1636 = vmul.f32 %v1626, %v1626
  %v1637 = vsel %vm72, %v1627, 0.0
  %1638 = vadd.xlane.f32.xlu0 %v1637
  %v1639 = vpop.xlane.xlu0 %1638
  %v1640 = vsel %vm72, %v1628, 0.0
  %1641 = vadd.xlane.f32.xlu0 %v1640
  %v1642 = vpop.xlane.xlu0 %1641
  %v1643 = vsel %vm72, %v1629, 0.0
  %1644 = vadd.xlane.f32.xlu0 %v1643
  %v1645 = vpop.xlane.xlu0 %1644
  %v1646 = vsel %vm72, %v1630, 0.0
  %1647 = vadd.xlane.f32.xlu0 %v1646
  %v1648 = vpop.xlane.xlu0 %1647
  %v1649 = vsel %vm72, %v1631, 0.0
  %1650 = vadd.xlane.f32.xlu0 %v1649
  %v1651 = vpop.xlane.xlu0 %1650
  %v1652 = vsel %vm72, %v1632, 0.0
  %1653 = vadd.xlane.f32.xlu0 %v1652
  %v1654 = vpop.xlane.xlu0 %1653
  %v1655 = vsel %vm72, %v1633, 0.0
  %1656 = vadd.xlane.f32.xlu0 %v1655
  %v1657 = vpop.xlane.xlu0 %1656
  %v1658 = vsel %vm72, %v1634, 0.0
  %1659 = vadd.xlane.f32.xlu0 %v1658
  %v1660 = vpop.xlane.xlu0 %1659
  %v1661 = vsel %vm72, %v1635, 0.0
  %1662 = vadd.xlane.f32.xlu0 %v1661
  %v1663 = vpop.xlane.xlu0 %1662
  %v1664 = vsel %vm72, %v1636, 0.0
  %1665 = vadd.xlane.f32.xlu0 %v1664
  %v1666 = vpop.xlane.xlu0 %1665
  %v1667 = vmul.f32 %v1639, %v103
  %v1668 = vmul.f32 %v1642, %v103
  %v1669 = vmul.f32 %v1645, %v103
  %v1670 = vmul.f32 %v1648, %v103
  %v1671 = vmul.f32 %v1651, %v103
  %v1672 = vmul.f32 %v1654, %v103
  %v1673 = vmul.f32 %v1657, %v103
  %v1674 = vmul.f32 %v1660, %v103
  %v1675 = vmul.f32 %v1663, %v103
  %v1676 = vmul.f32 %v1666, %v103
  %v1677 = vadd.f32 %v1667, 1e-05
  %v1678 = vadd.f32 %v1668, 1e-05
  %v1679 = vadd.f32 %v1669, 1e-05
  %v1680 = vadd.f32 %v1670, 1e-05
  %v1681 = vadd.f32 %v1671, 1e-05
  %v1682 = vadd.f32 %v1672, 1e-05
  %v1683 = vadd.f32 %v1673, 1e-05
  %v1684 = vadd.f32 %v1674, 1e-05
  %v1685 = vadd.f32 %v1675, 1e-05
  %v1686 = vadd.f32 %v1676, 1e-05
  %v1687 = vrsqrt.pop %v1677
  %v1688 = vrsqrt.pop %v1678
  %v1689 = vrsqrt.pop %v1679
  %v1690 = vrsqrt.pop %v1680
  %v1691 = vrsqrt.pop %v1681
  %v1692 = vrsqrt.pop %v1682
  %v1693 = vrsqrt.pop %v1683
  %v1694 = vrsqrt.pop %v1684
  %v1695 = vrsqrt.pop %v1685
  %v1696 = vrsqrt.pop %v1686
  %v1697 = vmul.f32 %v1617, %v1687
  %v1698 = vmul.f32 %v1618, %v1688
  %v1699 = vmul.f32 %v1619, %v1689
  %v1700 = vmul.f32 %v1620, %v1690
  %v1701 = vmul.f32 %v1621, %v1691
  %v1702 = vmul.f32 %v1622, %v1692
  %v1703 = vmul.f32 %v1623, %v1693
  %v1704 = vmul.f32 %v1624, %v1694
  %v1705 = vmul.f32 %v1625, %v1695
  %v1706 = vmul.f32 %v1626, %v1696
  %v1707 = vlaneseq
  %v1708 = vshrl.u32 %v1707, 7
  %v1709 = vsub.s32 2, %v1708
  %v1710 = vrot.slane %v71, %v1709
  %v1711 = vmul.f32 %v1697, %v1710
  %v1712 = vmul.f32 %v1698, %v1710
  %v1713 = vmul.f32 %v1699, %v1710
  %v1714 = vmul.f32 %v1700, %v1710
  %v1715 = vmul.f32 %v1701, %v1710
  %v1716 = vmul.f32 %v1702, %v1710
  %v1717 = vmul.f32 %v1703, %v1710
  %v1718 = vmul.f32 %v1704, %v1710
  %v1719 = vmul.f32 %v1705, %v1710
  %v1720 = vmul.f32 %v1706, %v1710
  %v1721 = vlaneseq
  %v1722 = vshrl.u32 %v1721, 7
  %v1723 = vsub.s32 3, %v1722
  %v1724 = vrot.slane %v71, %v1723
  %v1725 = vadd.f32 %v1711, %v1724
  %v1726 = vadd.f32 %v1712, %v1724
  %v1727 = vadd.f32 %v1713, %v1724
  %v1728 = vadd.f32 %v1714, %v1724
  %v1729 = vadd.f32 %v1715, %v1724
  %v1730 = vadd.f32 %v1716, %v1724
  %v1731 = vadd.f32 %v1717, %v1724
  %v1732 = vadd.f32 %v1718, %v1724
  %v1733 = vadd.f32 %v1719, %v1724
  %v1734 = vadd.f32 %v1720, %v1724
  %v1735 = vpack.c.bf16 %v1726, %v1725
  %v1736 = vpack.c.bf16 %v1728, %v1727
  %v1737 = vpack.c.bf16 %v1730, %v1729
  %v1738 = vpack.c.bf16 %v1732, %v1731
  %v1739 = vpack.c.bf16 %v1734, %v1733
  %v1740 = vlaneseq
  %v1741 = vshrl.u32 %v1740, 7
  %v1742 = vsub.s32 1, %v1741
  %v1743 = vrot.slane %v70, %v1742
  %v1748 = vunpack.c.l.b16 %v50
  %v1749 = vunpack.c.l.b16 %v51
  %v1750 = vunpack.c.l.b16 %v52
  %v1751 = vunpack.c.l.b16 %v53
  %v1752 = vpack.c.b16 %v1749, %v1748
  %v1753 = vpack.c.b16 %v1751, %v1750
  %v1757 = vsel %vm72, %v1735, 0
  %v1760 = vsel %vm72, %v1736, 0
  %v1763 = vsel %vm72, %v1737, 0
  %v1766 = vsel %vm72, %v1738, 0
  %v1769 = vsel %vm72, %v1739, 0
  %1771 = vmatprep.subr.bf16.mxu0 0
  %1772 = vmatpush1.bf16.msra.mxu0 0
  %1773 = vmatprep.subr.bf16.mxu0 0
  %1774 = vmatpush1.bf16.msra.mxu0 0
  %1775 = vmatprep.subr.bf16.mxu0 0
  %1776 = vmatpush1.bf16.msra.mxu0 0
  %1777 = vmatprep.subr.bf16.mxu0 0
  %1778 = vmatpush1.bf16.msra.mxu0 0
  %1779 = vmatprep.subr.bf16.mxu0 0
  %1780 = vmatpush1.bf16.msra.mxu0 0
  %1781 = vmatprep.subr.bf16.mxu0 0
  %1782 = vmatpush1.bf16.msra.mxu0 0
  %1783 = vmatprep.subr.bf16.mxu0 0
  %1784 = vmatpush1.bf16.msra.mxu0 %v1753
  %1785 = vmatprep.subr.bf16.mxu0 0
  %1786 = vmatpush1.bf16.msra.mxu0 %v1752
  %1787 = vmatprep.subr.bf16.mxu0 0
  %1788 = vmatpush2.bf16.msra.mxu0 0
  %1789 = vmatprep.subr.bf16.mxu0 0
  %1790 = vmatpush2.bf16.msra.mxu0 0
  %1791 = vmatprep.subr.bf16.mxu0 0
  %1792 = vmatpush2.bf16.msra.mxu0 0
  %1793 = vmatprep.subr.bf16.mxu0 0
  %1794 = vmatpush2.bf16.msra.mxu0 0
  %1795 = vmatprep.subr.bf16.mxu0 0
  %1796 = vmatpush2.bf16.msra.mxu0 0
  %1797 = vmatprep.subr.bf16.mxu0 0
  %1798 = vmatpush2.bf16.msra.mxu0 0
  %1799 = vmatprep.subr.bf16.mxu0 0
  %1800 = vmatpush2.bf16.msra.mxu0 0
  %1801 = vmatprep.subr.bf16.mxu0 0
  %1802 = vmatpush2.bf16.msra.mxu0 0
  %1803 = vmatprep.mubr.bf16.mxu0 0
  %1804 = vmatmul.mubr.bf16.gmra.mxu0 %v1757
  %v1805 = vpop.f32.mrf.mxu0
  %v1806 = vadd.f32 %v1743, %v1805
  %v1807 = vpop.f32.mrf.mxu0
  %v1808 = vpop.f32.mrf.mxu0
  %v1809 = vadd.f32 %v1743, %v1808
  %v1810 = vpop.f32.mrf.mxu0
  %1811 = vmatprep.mubr.bf16.mxu0 0
  %1812 = vmatmul.mubr.bf16.gmra.mxu0 %v1760
  %v1813 = vpop.f32.mrf.mxu0
  %v1814 = vadd.f32 %v1743, %v1813
  %v1815 = vpop.f32.mrf.mxu0
  %v1816 = vpop.f32.mrf.mxu0
  %v1817 = vadd.f32 %v1743, %v1816
  %v1818 = vpop.f32.mrf.mxu0
  %1819 = vmatprep.mubr.bf16.mxu0 0
  %1820 = vmatmul.mubr.bf16.gmra.mxu0 %v1763
  %v1821 = vpop.f32.mrf.mxu0
  %v1822 = vadd.f32 %v1743, %v1821
  %v1823 = vpop.f32.mrf.mxu0
  %v1824 = vpop.f32.mrf.mxu0
  %v1825 = vadd.f32 %v1743, %v1824
  %v1826 = vpop.f32.mrf.mxu0
  %1827 = vmatprep.mubr.bf16.mxu0 0
  %1828 = vmatmul.mubr.bf16.gmra.mxu0 %v1766
  %v1829 = vpop.f32.mrf.mxu0
  %v1830 = vadd.f32 %v1743, %v1829
  %v1831 = vpop.f32.mrf.mxu0
  %v1832 = vpop.f32.mrf.mxu0
  %v1833 = vadd.f32 %v1743, %v1832
  %v1834 = vpop.f32.mrf.mxu0
  %1835 = vmatprep.mubr.bf16.mxu0 0
  %1836 = vmatmul.mubr.bf16.gmra.mxu0 %v1769
  %v1837 = vpop.f32.mrf.mxu0
  %v1838 = vadd.f32 %v1743, %v1837
  %v1839 = vpop.f32.mrf.mxu0
  %v1840 = vpop.f32.mrf.mxu0
  %v1841 = vadd.f32 %v1743, %v1840
  %v1842 = vpop.f32.mrf.mxu0
  %1843 = vdwg.mxu0
  %v1844 = vmul.f32 %v1806, 0.5
  %v1845 = vmul.f32 %v1809, 0.5
  %v1846 = vmul.f32 %v1814, 0.5
  %v1847 = vmul.f32 %v1817, 0.5
  %v1848 = vmul.f32 %v1822, 0.5
  %v1849 = vmul.f32 %v1825, 0.5
  %v1850 = vmul.f32 %v1830, 0.5
  %v1851 = vmul.f32 %v1833, 0.5
  %v1852 = vmul.f32 %v1838, 0.5
  %v1853 = vmul.f32 %v1841, 0.5
  %v1854 = vmul.f32 %v1806, 0.044715
  %v1855 = vmul.f32 %v1809, 0.044715
  %v1856 = vmul.f32 %v1814, 0.044715
  %v1857 = vmul.f32 %v1817, 0.044715
  %v1858 = vmul.f32 %v1822, 0.044715
  %v1859 = vmul.f32 %v1825, 0.044715
  %v1860 = vmul.f32 %v1830, 0.044715
  %v1861 = vmul.f32 %v1833, 0.044715
  %v1862 = vmul.f32 %v1838, 0.044715
  %v1863 = vmul.f32 %v1841, 0.044715
  %v1864 = vmul.f32 %v1854, %v1806
  %v1865 = vmul.f32 %v1855, %v1809
  %v1866 = vmul.f32 %v1856, %v1814
  %v1867 = vmul.f32 %v1857, %v1817
  %v1868 = vmul.f32 %v1858, %v1822
  %v1869 = vmul.f32 %v1859, %v1825
  %v1870 = vmul.f32 %v1860, %v1830
  %v1871 = vmul.f32 %v1861, %v1833
  %v1872 = vmul.f32 %v1862, %v1838
  %v1873 = vmul.f32 %v1863, %v1841
  %v1874 = vmul.f32 %v1864, %v1806
  %v1875 = vmul.f32 %v1865, %v1809
  %v1876 = vmul.f32 %v1866, %v1814
  %v1877 = vmul.f32 %v1867, %v1817
  %v1878 = vmul.f32 %v1868, %v1822
  %v1879 = vmul.f32 %v1869, %v1825
  %v1880 = vmul.f32 %v1870, %v1830
  %v1881 = vmul.f32 %v1871, %v1833
  %v1882 = vmul.f32 %v1872, %v1838
  %v1883 = vmul.f32 %v1873, %v1841
  %v1884 = vadd.f32 %v1806, %v1874
  %v1885 = vadd.f32 %v1809, %v1875
  %v1886 = vadd.f32 %v1814, %v1876
  %v1887 = vadd.f32 %v1817, %v1877
  %v1888 = vadd.f32 %v1822, %v1878
  %v1889 = vadd.f32 %v1825, %v1879
  %v1890 = vadd.f32 %v1830, %v1880
  %v1891 = vadd.f32 %v1833, %v1881
  %v1892 = vadd.f32 %v1838, %v1882
  %v1893 = vadd.f32 %v1841, %v1883
  %v1894 = vmul.f32 %v1884, 0.7978846
  %v1895 = vmul.f32 %v1885, 0.7978846
  %v1896 = vmul.f32 %v1886, 0.7978846
  %v1897 = vmul.f32 %v1887, 0.7978846
  %v1898 = vmul.f32 %v1888, 0.7978846
  %v1899 = vmul.f32 %v1889, 0.7978846
  %v1900 = vmul.f32 %v1890, 0.7978846
  %v1901 = vmul.f32 %v1891, 0.7978846
  %v1902 = vmul.f32 %v1892, 0.7978846
  %v1903 = vmul.f32 %v1893, 0.7978846
  %v1904 = vtanh.pop %v1894
  %v1905 = vtanh.pop %v1895
  %v1906 = vtanh.pop %v1896
  %v1907 = vtanh.pop %v1897
  %v1908 = vtanh.pop %v1898
  %v1909 = vtanh.pop %v1899
  %v1910 = vtanh.pop %v1900
  %v1911 = vtanh.pop %v1901
  %v1912 = vtanh.pop %v1902
  %v1913 = vtanh.pop %v1903
  %v1914 = vadd.f32 %v1904, 1.0
  %v1915 = vadd.f32 %v1905, 1.0
  %v1916 = vadd.f32 %v1906, 1.0
  %v1917 = vadd.f32 %v1907, 1.0
  %v1918 = vadd.f32 %v1908, 1.0
  %v1919 = vadd.f32 %v1909, 1.0
  %v1920 = vadd.f32 %v1910, 1.0
  %v1921 = vadd.f32 %v1911, 1.0
  %v1922 = vadd.f32 %v1912, 1.0
  %v1923 = vadd.f32 %v1913, 1.0
  %v1924 = vmul.f32 %v1844, %v1914
  %v1925 = vmul.f32 %v1845, %v1915
  %v1926 = vmul.f32 %v1846, %v1916
  %v1927 = vmul.f32 %v1847, %v1917
  %v1928 = vmul.f32 %v1848, %v1918
  %v1929 = vmul.f32 %v1849, %v1919
  %v1930 = vmul.f32 %v1850, %v1920
  %v1931 = vmul.f32 %v1851, %v1921
  %v1932 = vmul.f32 %v1852, %v1922
  %v1933 = vmul.f32 %v1853, %v1923
  %v1934 = vpack.c.bf16 %v1925, %v1924
  %v1935 = vpack.c.bf16 %v1927, %v1926
  %v1936 = vpack.c.bf16 %v1929, %v1928
  %v1937 = vpack.c.bf16 %v1931, %v1930
  %v1938 = vpack.c.bf16 %v1933, %v1932
  %v1939 = vlaneseq
  %v1940 = vshrl.u32 %v1939, 7
  %v1941 = vsub.s32 2, %v1940
  %v1942 = vrot.slane %v70, %v1941
  %v1959 = vunpack.c.l.b16 %v54
  %v1960 = vunpack.c.l.b16 %v55
  %v1961 = vunpack.c.l.b16 %v56
  %v1962 = vunpack.c.l.b16 %v57
  %v1963 = vunpack.c.l.b16 %v58
  %v1964 = vunpack.c.l.b16 %v59
  %v1965 = vunpack.c.l.b16 %v60
  %v1966 = vunpack.c.l.b16 %v61
  %v1967 = vunpack.c.l.b16 %v62
  %v1968 = vunpack.c.l.b16 %v63
  %v1969 = vunpack.c.l.b16 %v64
  %v1970 = vunpack.c.l.b16 %v65
  %v1971 = vunpack.c.l.b16 %v66
  %v1972 = vunpack.c.l.b16 %v67
  %v1973 = vunpack.c.l.b16 %v68
  %v1974 = vunpack.c.l.b16 %v69
  %v1975 = vpack.c.b16 %v1960, %v1959
  %v1976 = vpack.c.b16 %v1962, %v1961
  %v1977 = vpack.c.b16 %v1964, %v1963
  %v1978 = vpack.c.b16 %v1966, %v1965
  %v1979 = vpack.c.b16 %v1968, %v1967
  %v1980 = vpack.c.b16 %v1970, %v1969
  %v1981 = vpack.c.b16 %v1972, %v1971
  %v1982 = vpack.c.b16 %v1974, %v1973
  %1991 = vmatprep.subr.bf16.mxu0 0
  %1992 = vmatpush1.bf16.msra.mxu0 %v1982
  %1993 = vmatprep.subr.bf16.mxu0 0
  %1994 = vmatpush1.bf16.msra.mxu0 %v1981
  %1995 = vmatprep.subr.bf16.mxu0 0
  %1996 = vmatpush1.bf16.msra.mxu0 %v1980
  %1997 = vmatprep.subr.bf16.mxu0 0
  %1998 = vmatpush1.bf16.msra.mxu0 %v1979
  %1999 = vmatprep.subr.bf16.mxu0 0
  %2000 = vmatpush1.bf16.msra.mxu0 %v1978
  %2001 = vmatprep.subr.bf16.mxu0 0
  %2002 = vmatpush1.bf16.msra.mxu0 %v1977
  %2003 = vmatprep.subr.bf16.mxu0 0
  %2004 = vmatpush1.bf16.msra.mxu0 %v1976
  %2005 = vmatprep.subr.bf16.mxu0 0
  %2006 = vmatpush1.bf16.msra.mxu0 %v1975
  %2007 = vmatprep.subr.bf16.mxu0 0
  %2008 = vmatpush2.bf16.msra.mxu0 0
  %2009 = vmatprep.subr.bf16.mxu0 0
  %2010 = vmatpush2.bf16.msra.mxu0 0
  %2011 = vmatprep.subr.bf16.mxu0 0
  %2012 = vmatpush2.bf16.msra.mxu0 0
  %2013 = vmatprep.subr.bf16.mxu0 0
  %2014 = vmatpush2.bf16.msra.mxu0 0
  %2015 = vmatprep.subr.bf16.mxu0 0
  %2016 = vmatpush2.bf16.msra.mxu0 0
  %2017 = vmatprep.subr.bf16.mxu0 0
  %2018 = vmatpush2.bf16.msra.mxu0 0
  %2019 = vmatprep.subr.bf16.mxu0 0
  %2020 = vmatpush2.bf16.msra.mxu0 0
  %2021 = vmatprep.subr.bf16.mxu0 0
  %2022 = vmatpush2.bf16.msra.mxu0 0
  %2023 = vmatprep.mubr.bf16.mxu0 0
  %2024 = vmatmul.mubr.bf16.gmra.mxu0 %v1934
  %v2025 = vpop.f32.mrf.mxu0
  %v2026 = vadd.f32 %v1942, %v2025
  %v2027 = vpop.f32.mrf.mxu0
  %v2028 = vpop.f32.mrf.mxu0
  %v2029 = vadd.f32 %v1942, %v2028
  %v2030 = vpop.f32.mrf.mxu0
  %2031 = vmatprep.mubr.bf16.mxu0 0
  %2032 = vmatmul.mubr.bf16.gmra.mxu0 %v1935
  %v2033 = vpop.f32.mrf.mxu0
  %v2034 = vadd.f32 %v1942, %v2033
  %v2035 = vpop.f32.mrf.mxu0
  %v2036 = vpop.f32.mrf.mxu0
  %v2037 = vadd.f32 %v1942, %v2036
  %v2038 = vpop.f32.mrf.mxu0
  %2039 = vmatprep.mubr.bf16.mxu0 0
  %2040 = vmatmul.mubr.bf16.gmra.mxu0 %v1936
  %v2041 = vpop.f32.mrf.mxu0
  %v2042 = vadd.f32 %v1942, %v2041
  %v2043 = vpop.f32.mrf.mxu0
  %v2044 = vpop.f32.mrf.mxu0
  %v2045 = vadd.f32 %v1942, %v2044
  %v2046 = vpop.f32.mrf.mxu0
  %2047 = vmatprep.mubr.bf16.mxu0 0
  %2048 = vmatmul.mubr.bf16.gmra.mxu0 %v1937
  %v2049 = vpop.f32.mrf.mxu0
  %v2050 = vadd.f32 %v1942, %v2049
  %v2051 = vpop.f32.mrf.mxu0
  %v2052 = vpop.f32.mrf.mxu0
  %v2053 = vadd.f32 %v1942, %v2052
  %v2054 = vpop.f32.mrf.mxu0
  %2055 = vmatprep.mubr.bf16.mxu0 0
  %2056 = vmatmul.mubr.bf16.gmra.mxu0 %v1938
  %v2057 = vpop.f32.mrf.mxu0
  %v2058 = vadd.f32 %v1942, %v2057
  %v2059 = vpop.f32.mrf.mxu0
  %v2060 = vpop.f32.mrf.mxu0
  %v2061 = vadd.f32 %v1942, %v2060
  %v2062 = vpop.f32.mrf.mxu0
  %2063 = vdwg.mxu0
  %v2064 = vadd.f32 %v1567, %v2026
  %v2065 = vadd.f32 %v1568, %v2029
  %v2066 = vadd.f32 %v1569, %v2034
  %v2067 = vadd.f32 %v1570, %v2037
  %v2068 = vadd.f32 %v1571, %v2042
  %v2069 = vadd.f32 %v1572, %v2045
  %v2070 = vadd.f32 %v1573, %v2050
  %v2071 = vadd.f32 %v1574, %v2053
  %v2072 = vadd.f32 %v1575, %v2058
  %v2073 = vadd.f32 %v1576, %v2061
  %s2074 = scalar_lea.vmem %s2, 16
  %v2075 = vld [vmem:[%s2074] sm:$0xf]
  %v2076 = vld [vmem:[%s2074 + $0x4] sm:$0xf]
  %v2077 = vld [vmem:[%s2074 + $0x8] sm:$0xf]
  %v2078 = vld [vmem:[%s2074 + $0xc] sm:$0xf]
  %s2079 = scalar_lea.vmem %s3, 16
  %v2080 = vld [vmem:[%s2079] sm:$0xf]
  %v2081 = vld [vmem:[%s2079 + $0x4] sm:$0xf]
  %v2082 = vld [vmem:[%s2079 + $0x8] sm:$0xf]
  %v2083 = vld [vmem:[%s2079 + $0xc] sm:$0xf]
  %s2084 = scalar_lea.vmem %s4, 64
  %v2085 = vld [vmem:[%s2084] sm:$0xf]
  %v2086 = vld [vmem:[%s2084 + $0x4] sm:$0xf]
  %v2087 = vld [vmem:[%s2084 + $0x8] sm:$0xf]
  %v2088 = vld [vmem:[%s2084 + $0xc] sm:$0xf]
  %v2089 = vld [vmem:[%s2084 + $0x10] sm:$0xf]
  %v2090 = vld [vmem:[%s2084 + $0x14] sm:$0xf]
  %v2091 = vld [vmem:[%s2084 + $0x18] sm:$0xf]
  %v2092 = vld [vmem:[%s2084 + $0x1c] sm:$0xf]
  %v2093 = vld [vmem:[%s2084 + $0x20] sm:$0xf]
  %v2094 = vld [vmem:[%s2084 + $0x24] sm:$0xf]
  %v2095 = vld [vmem:[%s2084 + $0x28] sm:$0xf]
  %v2096 = vld [vmem:[%s2084 + $0x2c] sm:$0xf]
  %v2097 = vld [vmem:[%s2084 + $0x30] sm:$0xf]
  %v2098 = vld [vmem:[%s2084 + $0x34] sm:$0xf]
  %v2099 = vld [vmem:[%s2084 + $0x38] sm:$0xf]
  %v2100 = vld [vmem:[%s2084 + $0x3c] sm:$0xf]
  %s2101 = scalar_lea.vmem %s5, 4
  %v2102 = vld [vmem:[%s2101] sm:$0x7]
  %s2103 = scalar_lea.vmem %s6, 4
  %v2104 = vld [vmem:[%s2103] sm:$0xf]
  %v2105 = vsel %vm72, %v2064, 0.0
  %2106 = vadd.xlane.f32.xlu0 %v2105
  %v2107 = vpop.xlane.xlu0 %2106
  %v2108 = vsel %vm72, %v2065, 0.0
  %2109 = vadd.xlane.f32.xlu0 %v2108
  %v2110 = vpop.xlane.xlu0 %2109
  %v2111 = vsel %vm72, %v2066, 0.0
  %2112 = vadd.xlane.f32.xlu0 %v2111
  %v2113 = vpop.xlane.xlu0 %2112
  %v2114 = vsel %vm72, %v2067, 0.0
  %2115 = vadd.xlane.f32.xlu0 %v2114
  %v2116 = vpop.xlane.xlu0 %2115
  %v2117 = vsel %vm72, %v2068, 0.0
  %2118 = vadd.xlane.f32.xlu0 %v2117
  %v2119 = vpop.xlane.xlu0 %2118
  %v2120 = vsel %vm72, %v2069, 0.0
  %2121 = vadd.xlane.f32.xlu0 %v2120
  %v2122 = vpop.xlane.xlu0 %2121
  %v2123 = vsel %vm72, %v2070, 0.0
  %2124 = vadd.xlane.f32.xlu0 %v2123
  %v2125 = vpop.xlane.xlu0 %2124
  %v2126 = vsel %vm72, %v2071, 0.0
  %2127 = vadd.xlane.f32.xlu0 %v2126
  %v2128 = vpop.xlane.xlu0 %2127
  %v2129 = vsel %vm72, %v2072, 0.0
  %2130 = vadd.xlane.f32.xlu0 %v2129
  %v2131 = vpop.xlane.xlu0 %2130
  %v2132 = vsel %vm72, %v2073, 0.0
  %2133 = vadd.xlane.f32.xlu0 %v2132
  %v2134 = vpop.xlane.xlu0 %2133
  %v2135 = vmul.f32 %v2107, %v103
  %v2136 = vmul.f32 %v2110, %v103
  %v2137 = vmul.f32 %v2113, %v103
  %v2138 = vmul.f32 %v2116, %v103
  %v2139 = vmul.f32 %v2119, %v103
  %v2140 = vmul.f32 %v2122, %v103
  %v2141 = vmul.f32 %v2125, %v103
  %v2142 = vmul.f32 %v2128, %v103
  %v2143 = vmul.f32 %v2131, %v103
  %v2144 = vmul.f32 %v2134, %v103
  %v2145 = vsub.f32 %v2064, %v2135
  %v2146 = vsub.f32 %v2065, %v2136
  %v2147 = vsub.f32 %v2066, %v2137
  %v2148 = vsub.f32 %v2067, %v2138
  %v2149 = vsub.f32 %v2068, %v2139
  %v2150 = vsub.f32 %v2069, %v2140
  %v2151 = vsub.f32 %v2070, %v2141
  %v2152 = vsub.f32 %v2071, %v2142
  %v2153 = vsub.f32 %v2072, %v2143
  %v2154 = vsub.f32 %v2073, %v2144
  %v2155 = vmul.f32 %v2145, %v2145
  %v2156 = vmul.f32 %v2146, %v2146
  %v2157 = vmul.f32 %v2147, %v2147
  %v2158 = vmul.f32 %v2148, %v2148
  %v2159 = vmul.f32 %v2149, %v2149
  %v2160 = vmul.f32 %v2150, %v2150
  %v2161 = vmul.f32 %v2151, %v2151
  %v2162 = vmul.f32 %v2152, %v2152
  %v2163 = vmul.f32 %v2153, %v2153
  %v2164 = vmul.f32 %v2154, %v2154
  %v2165 = vsel %vm72, %v2155, 0.0
  %2166 = vadd.xlane.f32.xlu0 %v2165
  %v2167 = vpop.xlane.xlu0 %2166
  %v2168 = vsel %vm72, %v2156, 0.0
  %2169 = vadd.xlane.f32.xlu0 %v2168
  %v2170 = vpop.xlane.xlu0 %2169
  %v2171 = vsel %vm72, %v2157, 0.0
  %2172 = vadd.xlane.f32.xlu0 %v2171
  %v2173 = vpop.xlane.xlu0 %2172
  %v2174 = vsel %vm72, %v2158, 0.0
  %2175 = vadd.xlane.f32.xlu0 %v2174
  %v2176 = vpop.xlane.xlu0 %2175
  %v2177 = vsel %vm72, %v2159, 0.0
  %2178 = vadd.xlane.f32.xlu0 %v2177
  %v2179 = vpop.xlane.xlu0 %2178
  %v2180 = vsel %vm72, %v2160, 0.0
  %2181 = vadd.xlane.f32.xlu0 %v2180
  %v2182 = vpop.xlane.xlu0 %2181
  %v2183 = vsel %vm72, %v2161, 0.0
  %2184 = vadd.xlane.f32.xlu0 %v2183
  %v2185 = vpop.xlane.xlu0 %2184
  %v2186 = vsel %vm72, %v2162, 0.0
  %2187 = vadd.xlane.f32.xlu0 %v2186
  %v2188 = vpop.xlane.xlu0 %2187
  %v2189 = vsel %vm72, %v2163, 0.0
  %2190 = vadd.xlane.f32.xlu0 %v2189
  %v2191 = vpop.xlane.xlu0 %2190
  %v2192 = vsel %vm72, %v2164, 0.0
  %2193 = vadd.xlane.f32.xlu0 %v2192
  %v2194 = vpop.xlane.xlu0 %2193
  %v2195 = vmul.f32 %v2167, %v103
  %v2196 = vmul.f32 %v2170, %v103
  %v2197 = vmul.f32 %v2173, %v103
  %v2198 = vmul.f32 %v2176, %v103
  %v2199 = vmul.f32 %v2179, %v103
  %v2200 = vmul.f32 %v2182, %v103
  %v2201 = vmul.f32 %v2185, %v103
  %v2202 = vmul.f32 %v2188, %v103
  %v2203 = vmul.f32 %v2191, %v103
  %v2204 = vmul.f32 %v2194, %v103
  %v2205 = vadd.f32 %v2195, 1e-05
  %v2206 = vadd.f32 %v2196, 1e-05
  %v2207 = vadd.f32 %v2197, 1e-05
  %v2208 = vadd.f32 %v2198, 1e-05
  %v2209 = vadd.f32 %v2199, 1e-05
  %v2210 = vadd.f32 %v2200, 1e-05
  %v2211 = vadd.f32 %v2201, 1e-05
  %v2212 = vadd.f32 %v2202, 1e-05
  %v2213 = vadd.f32 %v2203, 1e-05
  %v2214 = vadd.f32 %v2204, 1e-05
  %v2215 = vrsqrt.pop %v2205
  %v2216 = vrsqrt.pop %v2206
  %v2217 = vrsqrt.pop %v2207
  %v2218 = vrsqrt.pop %v2208
  %v2219 = vrsqrt.pop %v2209
  %v2220 = vrsqrt.pop %v2210
  %v2221 = vrsqrt.pop %v2211
  %v2222 = vrsqrt.pop %v2212
  %v2223 = vrsqrt.pop %v2213
  %v2224 = vrsqrt.pop %v2214
  %v2225 = vmul.f32 %v2145, %v2215
  %v2226 = vmul.f32 %v2146, %v2216
  %v2227 = vmul.f32 %v2147, %v2217
  %v2228 = vmul.f32 %v2148, %v2218
  %v2229 = vmul.f32 %v2149, %v2219
  %v2230 = vmul.f32 %v2150, %v2220
  %v2231 = vmul.f32 %v2151, %v2221
  %v2232 = vmul.f32 %v2152, %v2222
  %v2233 = vmul.f32 %v2153, %v2223
  %v2234 = vmul.f32 %v2154, %v2224
  %v2235 = vlaneseq
  %v2236 = vshrl.u32 %v2235, 7
  %v2237 = vsub.s32 0, %v2236
  %v2238 = vrot.slane %v2104, %v2237
  %v2239 = vmul.f32 %v2225, %v2238
  %v2240 = vmul.f32 %v2226, %v2238
  %v2241 = vmul.f32 %v2227, %v2238
  %v2242 = vmul.f32 %v2228, %v2238
  %v2243 = vmul.f32 %v2229, %v2238
  %v2244 = vmul.f32 %v2230, %v2238
  %v2245 = vmul.f32 %v2231, %v2238
  %v2246 = vmul.f32 %v2232, %v2238
  %v2247 = vmul.f32 %v2233, %v2238
  %v2248 = vmul.f32 %v2234, %v2238
  %v2249 = vlaneseq
  %v2250 = vshrl.u32 %v2249, 7
  %v2251 = vsub.s32 1, %v2250
  %v2252 = vrot.slane %v2104, %v2251
  %v2253 = vadd.f32 %v2239, %v2252
  %v2254 = vadd.f32 %v2240, %v2252
  %v2255 = vadd.f32 %v2241, %v2252
  %v2256 = vadd.f32 %v2242, %v2252
  %v2257 = vadd.f32 %v2243, %v2252
  %v2258 = vadd.f32 %v2244, %v2252
  %v2259 = vadd.f32 %v2245, %v2252
  %v2260 = vadd.f32 %v2246, %v2252
  %v2261 = vadd.f32 %v2247, %v2252
  %v2262 = vadd.f32 %v2248, %v2252
  %v2263 = vpack.c.bf16 %v2254, %v2253
  %v2264 = vpack.c.bf16 %v2256, %v2255
  %v2265 = vpack.c.bf16 %v2258, %v2257
  %v2266 = vpack.c.bf16 %v2260, %v2259
  %v2267 = vpack.c.bf16 %v2262, %v2261
  %v2268 = vlaneseq
  %v2269 = vshrl.u32 %v2268, 7
  %v2270 = vsub.s32 0, %v2269
  %v2271 = vrot.slane %v2102, %v2270
  %v2276 = vunpack.c.l.b16 %v2075
  %v2277 = vunpack.c.l.b16 %v2076
  %v2278 = vunpack.c.l.b16 %v2077
  %v2279 = vunpack.c.l.b16 %v2078
  %v2280 = vpack.c.b16 %v2277, %v2276
  %v2281 = vpack.c.b16 %v2279, %v2278
  %v2285 = vsel %vm72, %v2263, 0
  %v2288 = vsel %vm72, %v2264, 0
  %v2291 = vsel %vm72, %v2265, 0
  %v2294 = vsel %vm72, %v2266, 0
  %v2297 = vsel %vm72, %v2267, 0
  %2299 = vmatprep.subr.bf16.mxu0 0
  %2300 = vmatpush1.bf16.msra.mxu0 0
  %2301 = vmatprep.subr.bf16.mxu0 0
  %2302 = vmatpush1.bf16.msra.mxu0 0
  %2303 = vmatprep.subr.bf16.mxu0 0
  %2304 = vmatpush1.bf16.msra.mxu0 0
  %2305 = vmatprep.subr.bf16.mxu0 0
  %2306 = vmatpush1.bf16.msra.mxu0 0
  %2307 = vmatprep.subr.bf16.mxu0 0
  %2308 = vmatpush1.bf16.msra.mxu0 0
  %2309 = vmatprep.subr.bf16.mxu0 0
  %2310 = vmatpush1.bf16.msra.mxu0 0
  %2311 = vmatprep.subr.bf16.mxu0 0
  %2312 = vmatpush1.bf16.msra.mxu0 %v2281
  %2313 = vmatprep.subr.bf16.mxu0 0
  %2314 = vmatpush1.bf16.msra.mxu0 %v2280
  %2315 = vmatprep.subr.bf16.mxu0 0
  %2316 = vmatpush2.bf16.msra.mxu0 0
  %2317 = vmatprep.subr.bf16.mxu0 0
  %2318 = vmatpush2.bf16.msra.mxu0 0
  %2319 = vmatprep.subr.bf16.mxu0 0
  %2320 = vmatpush2.bf16.msra.mxu0 0
  %2321 = vmatprep.subr.bf16.mxu0 0
  %2322 = vmatpush2.bf16.msra.mxu0 0
  %2323 = vmatprep.subr.bf16.mxu0 0
  %2324 = vmatpush2.bf16.msra.mxu0 0
  %2325 = vmatprep.subr.bf16.mxu0 0
  %2326 = vmatpush2.bf16.msra.mxu0 0
  %2327 = vmatprep.subr.bf16.mxu0 0
  %2328 = vmatpush2.bf16.msra.mxu0 0
  %2329 = vmatprep.subr.bf16.mxu0 0
  %2330 = vmatpush2.bf16.msra.mxu0 0
  %2331 = vmatprep.mubr.bf16.mxu0 0
  %2332 = vmatmul.mubr.bf16.gmra.mxu0 %v2285
  %v2333 = vpop.f32.mrf.mxu0
  %v2334 = vadd.f32 %v2271, %v2333
  %v2335 = vpop.f32.mrf.mxu0
  %v2336 = vpop.f32.mrf.mxu0
  %v2337 = vadd.f32 %v2271, %v2336
  %v2338 = vpop.f32.mrf.mxu0
  %2339 = vmatprep.mubr.bf16.mxu0 0
  %2340 = vmatmul.mubr.bf16.gmra.mxu0 %v2288
  %v2341 = vpop.f32.mrf.mxu0
  %v2342 = vadd.f32 %v2271, %v2341
  %v2343 = vpop.f32.mrf.mxu0
  %v2344 = vpop.f32.mrf.mxu0
  %v2345 = vadd.f32 %v2271, %v2344
  %v2346 = vpop.f32.mrf.mxu0
  %2347 = vmatprep.mubr.bf16.mxu0 0
  %2348 = vmatmul.mubr.bf16.gmra.mxu0 %v2291
  %v2349 = vpop.f32.mrf.mxu0
  %v2350 = vadd.f32 %v2271, %v2349
  %v2351 = vpop.f32.mrf.mxu0
  %v2352 = vpop.f32.mrf.mxu0
  %v2353 = vadd.f32 %v2271, %v2352
  %v2354 = vpop.f32.mrf.mxu0
  %2355 = vmatprep.mubr.bf16.mxu0 0
  %2356 = vmatmul.mubr.bf16.gmra.mxu0 %v2294
  %v2357 = vpop.f32.mrf.mxu0
  %v2358 = vadd.f32 %v2271, %v2357
  %v2359 = vpop.f32.mrf.mxu0
  %v2360 = vpop.f32.mrf.mxu0
  %v2361 = vadd.f32 %v2271, %v2360
  %v2362 = vpop.f32.mrf.mxu0
  %2363 = vmatprep.mubr.bf16.mxu0 0
  %2364 = vmatmul.mubr.bf16.gmra.mxu0 %v2297
  %v2365 = vpop.f32.mrf.mxu0
  %v2366 = vadd.f32 %v2271, %v2365
  %v2367 = vpop.f32.mrf.mxu0
  %v2368 = vpop.f32.mrf.mxu0
  %v2369 = vadd.f32 %v2271, %v2368
  %v2370 = vpop.f32.mrf.mxu0
  %2371 = vdwg.mxu0
  %v2372 = vpack.c.bf16 %v2337, %v2334
  %v2373 = vpack.c.bf16 %v2345, %v2342
  %v2374 = vpack.c.bf16 %v2350, %v2350
  %2378 = vrot.lane.b32.xlu0 %v2372, 96
  %v2379 = vpop.permute.xlu0 %2378
  %2380 = vrot.lane.b32.xlu0 %v2373, 96
  %v2381 = vpop.permute.xlu0 %2380
  %2382 = vrot.lane.b32.xlu0 %v2374, 96
  %v2383 = vpop.permute.xlu0 %2382
  %v2385 = vsel %vm358, %v2372, 0
  %v2388 = vsel %vm358, %v2373, 0
  %v2391 = vsel %vm358, %v2374, 0
  %v2394 = vsel %vm358, %v2379, 0
  %v2397 = vsel %vm358, %v2381, 0
  %v2400 = vsel %vm358, %v2383, 0
  %2402 = vmatprep.subr.bf16.mxu0 0
  %2403 = vmatpush1.bf16.xpose.msra.mxu0 0
  %2404 = vmatprep.subr.bf16.mxu0 0
  %2405 = vmatpush1.bf16.xpose.msra.mxu0 0
  %2406 = vmatprep.subr.bf16.mxu0 0
  %2407 = vmatpush1.bf16.xpose.msra.mxu0 0
  %2408 = vmatprep.subr.bf16.mxu0 0
  %2409 = vmatpush1.bf16.xpose.msra.mxu0 0
  %2410 = vmatprep.subr.bf16.mxu0 0
  %2411 = vmatpush1.bf16.xpose.msra.mxu0 0
  %2412 = vmatprep.subr.bf16.mxu0 0
  %2413 = vmatpush1.bf16.xpose.msra.mxu0 %v2400
  %2414 = vmatprep.subr.bf16.mxu0 0
  %2415 = vmatpush1.bf16.xpose.msra.mxu0 %v2397
  %2416 = vmatprep.subr.bf16.mxu0 0
  %2417 = vmatpush1.bf16.xpose.msra.mxu0 %v2394
  %2418 = vmatprep.subr.bf16.mxu0 0
  %2419 = vmatpush2.bf16.xpose.msra.mxu0 0
  %2420 = vmatprep.subr.bf16.mxu0 0
  %2421 = vmatpush2.bf16.xpose.msra.mxu0 0
  %2422 = vmatprep.subr.bf16.mxu0 0
  %2423 = vmatpush2.bf16.xpose.msra.mxu0 0
  %2424 = vmatprep.subr.bf16.mxu0 0
  %2425 = vmatpush2.bf16.xpose.msra.mxu0 0
  %2426 = vmatprep.subr.bf16.mxu0 0
  %2427 = vmatpush2.bf16.xpose.msra.mxu0 0
  %2428 = vmatprep.subr.bf16.mxu0 0
  %2429 = vmatpush2.bf16.xpose.msra.mxu0 0
  %2430 = vmatprep.subr.bf16.mxu0 0
  %2431 = vmatpush2.bf16.xpose.msra.mxu0 0
  %2432 = vmatprep.subr.bf16.mxu0 0
  %2433 = vmatpush2.bf16.xpose.msra.mxu0 0
  %2434 = vmatprep.mubr.bf16.mxu0 0
  %2435 = vmatmul.mubr.bf16.gmra.mxu0 %v2385
  %v2436 = vpop.f32.mrf.mxu0
  %v2437 = vadd.f32 0.0, %v2436
  %v2438 = vpop.f32.mrf.mxu0
  %v2439 = vpop.f32.mrf.mxu0
  %v2440 = vadd.f32 0.0, %v2439
  %v2441 = vpop.f32.mrf.mxu0
  %2442 = vmatprep.mubr.bf16.mxu0 0
  %2443 = vmatmul.mubr.bf16.gmra.mxu0 %v2388
  %v2444 = vpop.f32.mrf.mxu0
  %v2445 = vadd.f32 0.0, %v2444
  %v2446 = vpop.f32.mrf.mxu0
  %v2447 = vpop.f32.mrf.mxu0
  %v2448 = vadd.f32 0.0, %v2447
  %v2449 = vpop.f32.mrf.mxu0
  %2450 = vmatprep.mubr.bf16.mxu0 0
  %2451 = vmatmul.mubr.bf16.gmra.mxu0 %v2391
  %v2452 = vpop.f32.mrf.mxu0
  %v2453 = vadd.f32 0.0, %v2452
  %v2454 = vpop.f32.mrf.mxu0
  %v2455 = vpop.f32.mrf.mxu0
  %v2456 = vpop.f32.mrf.mxu0
  %2457 = vdwg.mxu0
  %v2458 = vmul.f32 %v2437, 0.25
  %v2459 = vmul.f32 %v2440, 0.25
  %v2460 = vmul.f32 %v2445, 0.25
  %v2461 = vmul.f32 %v2448, 0.25
  %v2462 = vmul.f32 %v2453, 0.25
  %v2463 = vadd.f32 %v2458, %v341
  %v2464 = vadd.f32 %v2459, %v342
  %v2465 = vadd.f32 %v2460, %v343
  %v2466 = vadd.f32 %v2461, %v344
  %v2467 = vadd.f32 %v2462, %v345
  %v2468 = vsel %vm443, %v2463, -inf
  %2469 = vmax.xlane.f32.xlu0 %v2468
  %v2470 = vpop.xlane.xlu0 %2469
  %v2471 = vsel %vm443, %v2464, -inf
  %2472 = vmax.xlane.f32.xlu0 %v2471
  %v2473 = vpop.xlane.xlu0 %2472
  %v2474 = vsel %vm443, %v2465, -inf
  %2475 = vmax.xlane.f32.xlu0 %v2474
  %v2476 = vpop.xlane.xlu0 %2475
  %v2477 = vsel %vm443, %v2466, -inf
  %2478 = vmax.xlane.f32.xlu0 %v2477
  %v2479 = vpop.xlane.xlu0 %2478
  %v2480 = vsel %vm443, %v2467, -inf
  %2481 = vmax.xlane.f32.xlu0 %v2480
  %v2482 = vpop.xlane.xlu0 %2481
  %v2483 = vsub.f32 %v2463, %v2470
  %v2484 = vsub.f32 %v2464, %v2473
  %v2485 = vsub.f32 %v2465, %v2476
  %v2486 = vsub.f32 %v2466, %v2479
  %v2487 = vsub.f32 %v2467, %v2482
  %v2488 = vmul.f32 %v2483, 1.442695
  %v2489 = vpow.pop %v2488
  %v2490 = vmul.f32 %v2484, 1.442695
  %v2491 = vpow.pop %v2490
  %v2492 = vmul.f32 %v2485, 1.442695
  %v2493 = vpow.pop %v2492
  %v2494 = vmul.f32 %v2486, 1.442695
  %v2495 = vpow.pop %v2494
  %v2496 = vmul.f32 %v2487, 1.442695
  %v2497 = vpow.pop %v2496
  %v2498 = vsel %vm443, %v2489, 0.0
  %2499 = vadd.xlane.f32.xlu0 %v2498
  %v2500 = vpop.xlane.xlu0 %2499
  %v2501 = vsel %vm443, %v2491, 0.0
  %2502 = vadd.xlane.f32.xlu0 %v2501
  %v2503 = vpop.xlane.xlu0 %2502
  %v2504 = vsel %vm443, %v2493, 0.0
  %2505 = vadd.xlane.f32.xlu0 %v2504
  %v2506 = vpop.xlane.xlu0 %2505
  %v2507 = vsel %vm443, %v2495, 0.0
  %2508 = vadd.xlane.f32.xlu0 %v2507
  %v2509 = vpop.xlane.xlu0 %2508
  %v2510 = vsel %vm443, %v2497, 0.0
  %2511 = vadd.xlane.f32.xlu0 %v2510
  %v2512 = vpop.xlane.xlu0 %2511
  %v2513 = vrcp.pop %v2500
  %v2514 = vmul.f32 %v2489, %v2513
  %v2515 = vrcp.pop %v2503
  %v2516 = vmul.f32 %v2491, %v2515
  %v2517 = vrcp.pop %v2506
  %v2518 = vmul.f32 %v2493, %v2517
  %v2519 = vrcp.pop %v2509
  %v2520 = vmul.f32 %v2495, %v2519
  %v2521 = vrcp.pop %v2512
  %v2522 = vmul.f32 %v2497, %v2521
  %v2523 = vpack.c.bf16 %v2516, %v2514
  %v2524 = vpack.c.bf16 %v2520, %v2518
  %v2525 = vpack.c.bf16 %v2522, %v2522
  %2526 = vrot.lane.b32.xlu0 %v2372, 64
  %v2527 = vpop.permute.xlu0 %2526
  %2528 = vrot.lane.b32.xlu0 %v2373, 64
  %v2529 = vpop.permute.xlu0 %2528
  %2530 = vrot.lane.b32.xlu0 %v2374, 64
  %v2531 = vpop.permute.xlu0 %2530
  %v2535 = vsel %vm443, %v2523, 0
  %v2538 = vsel %vm443, %v2524, 0
  %v2541 = vsel %vm443, %v2525, 0
  %v2544 = vsel %vm519, %v2531, 0
  %2546 = vmatprep.subr.bf16.mxu0 0
  %2547 = vmatpush1.bf16.msra.mxu0 0
  %2548 = vmatprep.subr.bf16.mxu0 0
  %2549 = vmatpush1.bf16.msra.mxu0 0
  %2550 = vmatprep.subr.bf16.mxu0 0
  %2551 = vmatpush1.bf16.msra.mxu0 0
  %2552 = vmatprep.subr.bf16.mxu0 0
  %2553 = vmatpush1.bf16.msra.mxu0 0
  %2554 = vmatprep.subr.bf16.mxu0 0
  %2555 = vmatpush1.bf16.msra.mxu0 0
  %2556 = vmatprep.subr.bf16.mxu0 0
  %2557 = vmatpush1.bf16.msra.mxu0 %v2544
  %2558 = vmatprep.subr.bf16.mxu0 0
  %2559 = vmatpush1.bf16.msra.mxu0 %v2529
  %2560 = vmatprep.subr.bf16.mxu0 0
  %2561 = vmatpush1.bf16.msra.mxu0 %v2527
  %2562 = vmatprep.subr.bf16.mxu0 0
  %2563 = vmatpush2.bf16.msra.mxu0 0
  %2564 = vmatprep.subr.bf16.mxu0 0
  %2565 = vmatpush2.bf16.msra.mxu0 0
  %2566 = vmatprep.subr.bf16.mxu0 0
  %2567 = vmatpush2.bf16.msra.mxu0 0
  %2568 = vmatprep.subr.bf16.mxu0 0
  %2569 = vmatpush2.bf16.msra.mxu0 0
  %2570 = vmatprep.subr.bf16.mxu0 0
  %2571 = vmatpush2.bf16.msra.mxu0 0
  %2572 = vmatprep.subr.bf16.mxu0 0
  %2573 = vmatpush2.bf16.msra.mxu0 0
  %2574 = vmatprep.subr.bf16.mxu0 0
  %2575 = vmatpush2.bf16.msra.mxu0 0
  %2576 = vmatprep.subr.bf16.mxu0 0
  %2577 = vmatpush2.bf16.msra.mxu0 0
  %2578 = vmatprep.mubr.bf16.mxu0 0
  %2579 = vmatmul.mubr.bf16.gmra.mxu0 %v2535
  %v2580 = vpop.f32.mrf.mxu0
  %v2581 = vadd.f32 0.0, %v2580
  %v2582 = vpop.f32.mrf.mxu0
  %v2583 = vpop.f32.mrf.mxu0
  %v2584 = vadd.f32 0.0, %v2583
  %v2585 = vpop.f32.mrf.mxu0
  %2586 = vmatprep.mubr.bf16.mxu0 0
  %2587 = vmatmul.mubr.bf16.gmra.mxu0 %v2538
  %v2588 = vpop.f32.mrf.mxu0
  %v2589 = vadd.f32 0.0, %v2588
  %v2590 = vpop.f32.mrf.mxu0
  %v2591 = vpop.f32.mrf.mxu0
  %v2592 = vadd.f32 0.0, %v2591
  %v2593 = vpop.f32.mrf.mxu0
  %2594 = vmatprep.mubr.bf16.mxu0 0
  %2595 = vmatmul.mubr.bf16.gmra.mxu0 %v2541
  %v2596 = vpop.f32.mrf.mxu0
  %v2597 = vadd.f32 0.0, %v2596
  %v2598 = vpop.f32.mrf.mxu0
  %v2599 = vpop.f32.mrf.mxu0
  %v2600 = vpop.f32.mrf.mxu0
  %2601 = vdwg.mxu0
  %v2602 = vpack.c.bf16 %v2584, %v2581
  %v2603 = vpack.c.bf16 %v2592, %v2589
  %v2604 = vpack.c.bf16 %v2597, %v2597
  %2605 = vrot.lane.b32.xlu0 %v2372, 112
  %v2606 = vpop.permute.xlu0 %2605
  %2607 = vrot.lane.b32.xlu0 %v2373, 112
  %v2608 = vpop.permute.xlu0 %2607
  %2609 = vrot.lane.b32.xlu0 %v2374, 112
  %v2610 = vpop.permute.xlu0 %2609
  %2611 = vrot.lane.b32.xlu0 %v2372, 80
  %v2612 = vpop.permute.xlu0 %2611
  %2613 = vrot.lane.b32.xlu0 %v2373, 80
  %v2614 = vpop.permute.xlu0 %2613
  %2615 = vrot.lane.b32.xlu0 %v2374, 80
  %v2616 = vpop.permute.xlu0 %2615
  %v2618 = vsel %vm358, %v2606, 0
  %v2621 = vsel %vm358, %v2608, 0
  %v2624 = vsel %vm358, %v2610, 0
  %v2627 = vsel %vm358, %v2612, 0
  %v2630 = vsel %vm358, %v2614, 0
  %v2633 = vsel %vm358, %v2616, 0
  %2635 = vmatprep.subr.bf16.mxu0 0
  %2636 = vmatpush1.bf16.xpose.msra.mxu0 0
  %2637 = vmatprep.subr.bf16.mxu0 0
  %2638 = vmatpush1.bf16.xpose.msra.mxu0 0
  %2639 = vmatprep.subr.bf16.mxu0 0
  %2640 = vmatpush1.bf16.xpose.msra.mxu0 0
  %2641 = vmatprep.subr.bf16.mxu0 0
  %2642 = vmatpush1.bf16.xpose.msra.mxu0 0
  %2643 = vmatprep.subr.bf16.mxu0 0
  %2644 = vmatpush1.bf16.xpose.msra.mxu0 0
  %2645 = vmatprep.subr.bf16.mxu0 0
  %2646 = vmatpush1.bf16.xpose.msra.mxu0 %v2633
  %2647 = vmatprep.subr.bf16.mxu0 0
  %2648 = vmatpush1.bf16.xpose.msra.mxu0 %v2630
  %2649 = vmatprep.subr.bf16.mxu0 0
  %2650 = vmatpush1.bf16.xpose.msra.mxu0 %v2627
  %2651 = vmatprep.subr.bf16.mxu0 0
  %2652 = vmatpush2.bf16.xpose.msra.mxu0 0
  %2653 = vmatprep.subr.bf16.mxu0 0
  %2654 = vmatpush2.bf16.xpose.msra.mxu0 0
  %2655 = vmatprep.subr.bf16.mxu0 0
  %2656 = vmatpush2.bf16.xpose.msra.mxu0 0
  %2657 = vmatprep.subr.bf16.mxu0 0
  %2658 = vmatpush2.bf16.xpose.msra.mxu0 0
  %2659 = vmatprep.subr.bf16.mxu0 0
  %2660 = vmatpush2.bf16.xpose.msra.mxu0 0
  %2661 = vmatprep.subr.bf16.mxu0 0
  %2662 = vmatpush2.bf16.xpose.msra.mxu0 0
  %2663 = vmatprep.subr.bf16.mxu0 0
  %2664 = vmatpush2.bf16.xpose.msra.mxu0 0
  %2665 = vmatprep.subr.bf16.mxu0 0
  %2666 = vmatpush2.bf16.xpose.msra.mxu0 0
  %2667 = vmatprep.mubr.bf16.mxu0 0
  %2668 = vmatmul.mubr.bf16.gmra.mxu0 %v2618
  %v2669 = vpop.f32.mrf.mxu0
  %v2670 = vadd.f32 0.0, %v2669
  %v2671 = vpop.f32.mrf.mxu0
  %v2672 = vpop.f32.mrf.mxu0
  %v2673 = vadd.f32 0.0, %v2672
  %v2674 = vpop.f32.mrf.mxu0
  %2675 = vmatprep.mubr.bf16.mxu0 0
  %2676 = vmatmul.mubr.bf16.gmra.mxu0 %v2621
  %v2677 = vpop.f32.mrf.mxu0
  %v2678 = vadd.f32 0.0, %v2677
  %v2679 = vpop.f32.mrf.mxu0
  %v2680 = vpop.f32.mrf.mxu0
  %v2681 = vadd.f32 0.0, %v2680
  %v2682 = vpop.f32.mrf.mxu0
  %2683 = vmatprep.mubr.bf16.mxu0 0
  %2684 = vmatmul.mubr.bf16.gmra.mxu0 %v2624
  %v2685 = vpop.f32.mrf.mxu0
  %v2686 = vadd.f32 0.0, %v2685
  %v2687 = vpop.f32.mrf.mxu0
  %v2688 = vpop.f32.mrf.mxu0
  %v2689 = vpop.f32.mrf.mxu0
  %2690 = vdwg.mxu0
  %v2691 = vmul.f32 %v2670, 0.25
  %v2692 = vmul.f32 %v2673, 0.25
  %v2693 = vmul.f32 %v2678, 0.25
  %v2694 = vmul.f32 %v2681, 0.25
  %v2695 = vmul.f32 %v2686, 0.25
  %v2696 = vadd.f32 %v2691, %v341
  %v2697 = vadd.f32 %v2692, %v342
  %v2698 = vadd.f32 %v2693, %v343
  %v2699 = vadd.f32 %v2694, %v344
  %v2700 = vadd.f32 %v2695, %v345
  %v2701 = vsel %vm443, %v2696, -inf
  %2702 = vmax.xlane.f32.xlu0 %v2701
  %v2703 = vpop.xlane.xlu0 %2702
  %v2704 = vsel %vm443, %v2697, -inf
  %2705 = vmax.xlane.f32.xlu0 %v2704
  %v2706 = vpop.xlane.xlu0 %2705
  %v2707 = vsel %vm443, %v2698, -inf
  %2708 = vmax.xlane.f32.xlu0 %v2707
  %v2709 = vpop.xlane.xlu0 %2708
  %v2710 = vsel %vm443, %v2699, -inf
  %2711 = vmax.xlane.f32.xlu0 %v2710
  %v2712 = vpop.xlane.xlu0 %2711
  %v2713 = vsel %vm443, %v2700, -inf
  %2714 = vmax.xlane.f32.xlu0 %v2713
  %v2715 = vpop.xlane.xlu0 %2714
  %v2716 = vsub.f32 %v2696, %v2703
  %v2717 = vsub.f32 %v2697, %v2706
  %v2718 = vsub.f32 %v2698, %v2709
  %v2719 = vsub.f32 %v2699, %v2712
  %v2720 = vsub.f32 %v2700, %v2715
  %v2721 = vmul.f32 %v2716, 1.442695
  %v2722 = vpow.pop %v2721
  %v2723 = vmul.f32 %v2717, 1.442695
  %v2724 = vpow.pop %v2723
  %v2725 = vmul.f32 %v2718, 1.442695
  %v2726 = vpow.pop %v2725
  %v2727 = vmul.f32 %v2719, 1.442695
  %v2728 = vpow.pop %v2727
  %v2729 = vmul.f32 %v2720, 1.442695
  %v2730 = vpow.pop %v2729
  %v2731 = vsel %vm443, %v2722, 0.0
  %2732 = vadd.xlane.f32.xlu0 %v2731
  %v2733 = vpop.xlane.xlu0 %2732
  %v2734 = vsel %vm443, %v2724, 0.0
  %2735 = vadd.xlane.f32.xlu0 %v2734
  %v2736 = vpop.xlane.xlu0 %2735
  %v2737 = vsel %vm443, %v2726, 0.0
  %2738 = vadd.xlane.f32.xlu0 %v2737
  %v2739 = vpop.xlane.xlu0 %2738
  %v2740 = vsel %vm443, %v2728, 0.0
  %2741 = vadd.xlane.f32.xlu0 %v2740
  %v2742 = vpop.xlane.xlu0 %2741
  %v2743 = vsel %vm443, %v2730, 0.0
  %2744 = vadd.xlane.f32.xlu0 %v2743
  %v2745 = vpop.xlane.xlu0 %2744
  %v2746 = vrcp.pop %v2733
  %v2747 = vmul.f32 %v2722, %v2746
  %v2748 = vrcp.pop %v2736
  %v2749 = vmul.f32 %v2724, %v2748
  %v2750 = vrcp.pop %v2739
  %v2751 = vmul.f32 %v2726, %v2750
  %v2752 = vrcp.pop %v2742
  %v2753 = vmul.f32 %v2728, %v2752
  %v2754 = vrcp.pop %v2745
  %v2755 = vmul.f32 %v2730, %v2754
  %v2756 = vpack.c.bf16 %v2749, %v2747
  %v2757 = vpack.c.bf16 %v2753, %v2751
  %v2758 = vpack.c.bf16 %v2755, %v2755
  %2759 = vrot.lane.b32.xlu0 %v2372, 48
  %v2760 = vpop.permute.xlu0 %2759
  %2761 = vrot.lane.b32.xlu0 %v2373, 48
  %v2762 = vpop.permute.xlu0 %2761
  %2763 = vrot.lane.b32.xlu0 %v2374, 48
  %v2764 = vpop.permute.xlu0 %2763
  %v2768 = vsel %vm443, %v2756, 0
  %v2771 = vsel %vm443, %v2757, 0
  %v2774 = vsel %vm443, %v2758, 0
  %v2777 = vsel %vm519, %v2764, 0
  %2779 = vmatprep.subr.bf16.mxu0 0
  %2780 = vmatpush1.bf16.msra.mxu0 0
  %2781 = vmatprep.subr.bf16.mxu0 0
  %2782 = vmatpush1.bf16.msra.mxu0 0
  %2783 = vmatprep.subr.bf16.mxu0 0
  %2784 = vmatpush1.bf16.msra.mxu0 0
  %2785 = vmatprep.subr.bf16.mxu0 0
  %2786 = vmatpush1.bf16.msra.mxu0 0
  %2787 = vmatprep.subr.bf16.mxu0 0
  %2788 = vmatpush1.bf16.msra.mxu0 0
  %2789 = vmatprep.subr.bf16.mxu0 0
  %2790 = vmatpush1.bf16.msra.mxu0 %v2777
  %2791 = vmatprep.subr.bf16.mxu0 0
  %2792 = vmatpush1.bf16.msra.mxu0 %v2762
  %2793 = vmatprep.subr.bf16.mxu0 0
  %2794 = vmatpush1.bf16.msra.mxu0 %v2760
  %2795 = vmatprep.subr.bf16.mxu0 0
  %2796 = vmatpush2.bf16.msra.mxu0 0
  %2797 = vmatprep.subr.bf16.mxu0 0
  %2798 = vmatpush2.bf16.msra.mxu0 0
  %2799 = vmatprep.subr.bf16.mxu0 0
  %2800 = vmatpush2.bf16.msra.mxu0 0
  %2801 = vmatprep.subr.bf16.mxu0 0
  %2802 = vmatpush2.bf16.msra.mxu0 0
  %2803 = vmatprep.subr.bf16.mxu0 0
  %2804 = vmatpush2.bf16.msra.mxu0 0
  %2805 = vmatprep.subr.bf16.mxu0 0
  %2806 = vmatpush2.bf16.msra.mxu0 0
  %2807 = vmatprep.subr.bf16.mxu0 0
  %2808 = vmatpush2.bf16.msra.mxu0 0
  %2809 = vmatprep.subr.bf16.mxu0 0
  %2810 = vmatpush2.bf16.msra.mxu0 0
  %2811 = vmatprep.mubr.bf16.mxu0 0
  %2812 = vmatmul.mubr.bf16.gmra.mxu0 %v2768
  %v2813 = vpop.f32.mrf.mxu0
  %v2814 = vadd.f32 0.0, %v2813
  %v2815 = vpop.f32.mrf.mxu0
  %v2816 = vpop.f32.mrf.mxu0
  %v2817 = vadd.f32 0.0, %v2816
  %v2818 = vpop.f32.mrf.mxu0
  %2819 = vmatprep.mubr.bf16.mxu0 0
  %2820 = vmatmul.mubr.bf16.gmra.mxu0 %v2771
  %v2821 = vpop.f32.mrf.mxu0
  %v2822 = vadd.f32 0.0, %v2821
  %v2823 = vpop.f32.mrf.mxu0
  %v2824 = vpop.f32.mrf.mxu0
  %v2825 = vadd.f32 0.0, %v2824
  %v2826 = vpop.f32.mrf.mxu0
  %2827 = vmatprep.mubr.bf16.mxu0 0
  %2828 = vmatmul.mubr.bf16.gmra.mxu0 %v2774
  %v2829 = vpop.f32.mrf.mxu0
  %v2830 = vadd.f32 0.0, %v2829
  %v2831 = vpop.f32.mrf.mxu0
  %v2832 = vpop.f32.mrf.mxu0
  %v2833 = vpop.f32.mrf.mxu0
  %2834 = vdwg.mxu0
  %v2835 = vpack.c.bf16 %v2817, %v2814
  %v2836 = vpack.c.bf16 %v2825, %v2822
  %v2837 = vpack.c.bf16 %v2830, %v2830
  %2838 = vrot.lane.b32.xlu0 %v2281, 32
  %v2839 = vpop.permute.xlu0 %2838
  %v2842 = vsel %vm358, %v2835, 0
  %v2845 = vsel %vm358, %v2836, 0
  %v2848 = vsel %vm358, %v2837, 0
  %2850 = vmatprep.subr.bf16.mxu0 0
  %2851 = vmatpush1.bf16.msra.mxu0 0
  %2852 = vmatprep.subr.bf16.mxu0 0
  %2853 = vmatpush1.bf16.msra.mxu0 0
  %2854 = vmatprep.subr.bf16.mxu0 0
  %2855 = vmatpush1.bf16.msra.mxu0 0
  %2856 = vmatprep.subr.bf16.mxu0 0
  %2857 = vmatpush1.bf16.msra.mxu0 0
  %2858 = vmatprep.subr.bf16.mxu0 0
  %2859 = vmatpush1.bf16.msra.mxu0 0
  %2860 = vmatprep.subr.bf16.mxu0 0
  %2861 = vmatpush1.bf16.msra.mxu0 0
  %2862 = vmatprep.subr.bf16.mxu0 0
  %2863 = vmatpush1.bf16.msra.mxu0 0
  %2864 = vmatprep.subr.bf16.mxu0 0
  %2865 = vmatpush1.bf16.msra.mxu0 %v2839
  %2866 = vmatprep.subr.bf16.mxu0 0
  %2867 = vmatpush2.bf16.msra.mxu0 0
  %2868 = vmatprep.subr.bf16.mxu0 0
  %2869 = vmatpush2.bf16.msra.mxu0 0
  %2870 = vmatprep.subr.bf16.mxu0 0
  %2871 = vmatpush2.bf16.msra.mxu0 0
  %2872 = vmatprep.subr.bf16.mxu0 0
  %2873 = vmatpush2.bf16.msra.mxu0 0
  %2874 = vmatprep.subr.bf16.mxu0 0
  %2875 = vmatpush2.bf16.msra.mxu0 0
  %2876 = vmatprep.subr.bf16.mxu0 0
  %2877 = vmatpush2.bf16.msra.mxu0 0
  %2878 = vmatprep.subr.bf16.mxu0 0
  %2879 = vmatpush2.bf16.msra.mxu0 0
  %2880 = vmatprep.subr.bf16.mxu0 0
  %2881 = vmatpush2.bf16.msra.mxu0 0
  %2882 = vmatprep.mubr.bf16.mxu0 0
  %2883 = vmatmul.mubr.bf16.gmra.mxu0 %v2842
  %v2884 = vpop.f32.mrf.mxu0
  %v2885 = vadd.f32 0.0, %v2884
  %v2886 = vpop.f32.mrf.mxu0
  %v2887 = vpop.f32.mrf.mxu0
  %v2888 = vadd.f32 0.0, %v2887
  %v2889 = vpop.f32.mrf.mxu0
  %2890 = vmatprep.mubr.bf16.mxu0 0
  %2891 = vmatmul.mubr.bf16.gmra.mxu0 %v2845
  %v2892 = vpop.f32.mrf.mxu0
  %v2893 = vadd.f32 0.0, %v2892
  %v2894 = vpop.f32.mrf.mxu0
  %v2895 = vpop.f32.mrf.mxu0
  %v2896 = vadd.f32 0.0, %v2895
  %v2897 = vpop.f32.mrf.mxu0
  %2898 = vmatprep.mubr.bf16.mxu0 0
  %2899 = vmatmul.mubr.bf16.gmra.mxu0 %v2848
  %v2900 = vpop.f32.mrf.mxu0
  %v2901 = vadd.f32 0.0, %v2900
  %v2902 = vpop.f32.mrf.mxu0
  %v2903 = vpop.f32.mrf.mxu0
  %v2904 = vpop.f32.mrf.mxu0
  %2905 = vdwg.mxu0
  %2906 = vrot.lane.b32.xlu0 %v2280, 32
  %v2907 = vpop.permute.xlu0 %2906
  %v2910 = vsel %vm358, %v2602, 0
  %v2913 = vsel %vm358, %v2603, 0
  %v2916 = vsel %vm358, %v2604, 0
  %2918 = vmatprep.subr.bf16.mxu0 0
  %2919 = vmatpush1.bf16.msra.mxu0 0
  %2920 = vmatprep.subr.bf16.mxu0 0
  %2921 = vmatpush1.bf16.msra.mxu0 0
  %2922 = vmatprep.subr.bf16.mxu0 0
  %2923 = vmatpush1.bf16.msra.mxu0 0
  %2924 = vmatprep.subr.bf16.mxu0 0
  %2925 = vmatpush1.bf16.msra.mxu0 0
  %2926 = vmatprep.subr.bf16.mxu0 0
  %2927 = vmatpush1.bf16.msra.mxu0 0
  %2928 = vmatprep.subr.bf16.mxu0 0
  %2929 = vmatpush1.bf16.msra.mxu0 0
  %2930 = vmatprep.subr.bf16.mxu0 0
  %2931 = vmatpush1.bf16.msra.mxu0 0
  %2932 = vmatprep.subr.bf16.mxu0 0
  %2933 = vmatpush1.bf16.msra.mxu0 %v2907
  %2934 = vmatprep.subr.bf16.mxu0 0
  %2935 = vmatpush2.bf16.msra.mxu0 0
  %2936 = vmatprep.subr.bf16.mxu0 0
  %2937 = vmatpush2.bf16.msra.mxu0 0
  %2938 = vmatprep.subr.bf16.mxu0 0
  %2939 = vmatpush2.bf16.msra.mxu0 0
  %2940 = vmatprep.subr.bf16.mxu0 0
  %2941 = vmatpush2.bf16.msra.mxu0 0
  %2942 = vmatprep.subr.bf16.mxu0 0
  %2943 = vmatpush2.bf16.msra.mxu0 0
  %2944 = vmatprep.subr.bf16.mxu0 0
  %2945 = vmatpush2.bf16.msra.mxu0 0
  %2946 = vmatprep.subr.bf16.mxu0 0
  %2947 = vmatpush2.bf16.msra.mxu0 0
  %2948 = vmatprep.subr.bf16.mxu0 0
  %2949 = vmatpush2.bf16.msra.mxu0 0
  %2950 = vmatprep.mubr.bf16.mxu0 0
  %2951 = vmatmul.mubr.bf16.gmra.mxu0 %v2910
  %v2952 = vpop.f32.mrf.mxu0
  %v2953 = vadd.f32 %v2885, %v2952
  %v2954 = vpop.f32.mrf.mxu0
  %v2955 = vpop.f32.mrf.mxu0
  %v2956 = vadd.f32 %v2888, %v2955
  %v2957 = vpop.f32.mrf.mxu0
  %2958 = vmatprep.mubr.bf16.mxu0 0
  %2959 = vmatmul.mubr.bf16.gmra.mxu0 %v2913
  %v2960 = vpop.f32.mrf.mxu0
  %v2961 = vadd.f32 %v2893, %v2960
  %v2962 = vpop.f32.mrf.mxu0
  %v2963 = vpop.f32.mrf.mxu0
  %v2964 = vadd.f32 %v2896, %v2963
  %v2965 = vpop.f32.mrf.mxu0
  %2966 = vmatprep.mubr.bf16.mxu0 0
  %2967 = vmatmul.mubr.bf16.gmra.mxu0 %v2916
  %v2968 = vpop.f32.mrf.mxu0
  %v2969 = vadd.f32 %v2901, %v2968
  %v2970 = vpop.f32.mrf.mxu0
  %v2971 = vpop.f32.mrf.mxu0
  %v2972 = vpop.f32.mrf.mxu0
  %2973 = vdwg.mxu0
  %v2974 = vpack.c.bf16 %v2358, %v2353
  %v2975 = vpack.c.bf16 %v2366, %v2361
  %v2976 = vpack.c.bf16 %v2369, %v2369
  %2980 = vrot.lane.b32.xlu0 %v2974, 96
  %v2981 = vpop.permute.xlu0 %2980
  %2982 = vrot.lane.b32.xlu0 %v2975, 96
  %v2983 = vpop.permute.xlu0 %2982
  %2984 = vrot.lane.b32.xlu0 %v2976, 96
  %v2985 = vpop.permute.xlu0 %2984
  %v2987 = vsel %vm358, %v2974, 0
  %v2990 = vsel %vm358, %v2975, 0
  %v2993 = vsel %vm358, %v2976, 0
  %v2996 = vsel %vm358, %v2981, 0
  %v2999 = vsel %vm358, %v2983, 0
  %v3002 = vsel %vm358, %v2985, 0
  %3004 = vmatprep.subr.bf16.mxu0 0
  %3005 = vmatpush1.bf16.xpose.msra.mxu0 0
  %3006 = vmatprep.subr.bf16.mxu0 0
  %3007 = vmatpush1.bf16.xpose.msra.mxu0 0
  %3008 = vmatprep.subr.bf16.mxu0 0
  %3009 = vmatpush1.bf16.xpose.msra.mxu0 0
  %3010 = vmatprep.subr.bf16.mxu0 0
  %3011 = vmatpush1.bf16.xpose.msra.mxu0 0
  %3012 = vmatprep.subr.bf16.mxu0 0
  %3013 = vmatpush1.bf16.xpose.msra.mxu0 0
  %3014 = vmatprep.subr.bf16.mxu0 0
  %3015 = vmatpush1.bf16.xpose.msra.mxu0 %v3002
  %3016 = vmatprep.subr.bf16.mxu0 0
  %3017 = vmatpush1.bf16.xpose.msra.mxu0 %v2999
  %3018 = vmatprep.subr.bf16.mxu0 0
  %3019 = vmatpush1.bf16.xpose.msra.mxu0 %v2996
  %3020 = vmatprep.subr.bf16.mxu0 0
  %3021 = vmatpush2.bf16.xpose.msra.mxu0 0
  %3022 = vmatprep.subr.bf16.mxu0 0
  %3023 = vmatpush2.bf16.xpose.msra.mxu0 0
  %3024 = vmatprep.subr.bf16.mxu0 0
  %3025 = vmatpush2.bf16.xpose.msra.mxu0 0
  %3026 = vmatprep.subr.bf16.mxu0 0
  %3027 = vmatpush2.bf16.xpose.msra.mxu0 0
  %3028 = vmatprep.subr.bf16.mxu0 0
  %3029 = vmatpush2.bf16.xpose.msra.mxu0 0
  %3030 = vmatprep.subr.bf16.mxu0 0
  %3031 = vmatpush2.bf16.xpose.msra.mxu0 0
  %3032 = vmatprep.subr.bf16.mxu0 0
  %3033 = vmatpush2.bf16.xpose.msra.mxu0 0
  %3034 = vmatprep.subr.bf16.mxu0 0
  %3035 = vmatpush2.bf16.xpose.msra.mxu0 0
  %3036 = vmatprep.mubr.bf16.mxu0 0
  %3037 = vmatmul.mubr.bf16.gmra.mxu0 %v2987
  %v3038 = vpop.f32.mrf.mxu0
  %v3039 = vadd.f32 0.0, %v3038
  %v3040 = vpop.f32.mrf.mxu0
  %v3041 = vpop.f32.mrf.mxu0
  %v3042 = vadd.f32 0.0, %v3041
  %v3043 = vpop.f32.mrf.mxu0
  %3044 = vmatprep.mubr.bf16.mxu0 0
  %3045 = vmatmul.mubr.bf16.gmra.mxu0 %v2990
  %v3046 = vpop.f32.mrf.mxu0
  %v3047 = vadd.f32 0.0, %v3046
  %v3048 = vpop.f32.mrf.mxu0
  %v3049 = vpop.f32.mrf.mxu0
  %v3050 = vadd.f32 0.0, %v3049
  %v3051 = vpop.f32.mrf.mxu0
  %3052 = vmatprep.mubr.bf16.mxu0 0
  %3053 = vmatmul.mubr.bf16.gmra.mxu0 %v2993
  %v3054 = vpop.f32.mrf.mxu0
  %v3055 = vadd.f32 0.0, %v3054
  %v3056 = vpop.f32.mrf.mxu0
  %v3057 = vpop.f32.mrf.mxu0
  %v3058 = vpop.f32.mrf.mxu0
  %3059 = vdwg.mxu0
  %v3060 = vmul.f32 %v3039, 0.25
  %v3061 = vmul.f32 %v3042, 0.25
  %v3062 = vmul.f32 %v3047, 0.25
  %v3063 = vmul.f32 %v3050, 0.25
  %v3064 = vmul.f32 %v3055, 0.25
  %v3065 = vadd.f32 %v3060, %v952
  %v3066 = vadd.f32 %v3061, %v953
  %v3067 = vadd.f32 %v3062, %v954
  %v3068 = vadd.f32 %v3063, %v955
  %v3069 = vadd.f32 %v3064, %v956
  %v3070 = vsel %vm443, %v3065, -inf
  %3071 = vmax.xlane.f32.xlu0 %v3070
  %v3072 = vpop.xlane.xlu0 %3071
  %v3073 = vsel %vm443, %v3066, -inf
  %3074 = vmax.xlane.f32.xlu0 %v3073
  %v3075 = vpop.xlane.xlu0 %3074
  %v3076 = vsel %vm443, %v3067, -inf
  %3077 = vmax.xlane.f32.xlu0 %v3076
  %v3078 = vpop.xlane.xlu0 %3077
  %v3079 = vsel %vm443, %v3068, -inf
  %3080 = vmax.xlane.f32.xlu0 %v3079
  %v3081 = vpop.xlane.xlu0 %3080
  %v3082 = vsel %vm443, %v3069, -inf
  %3083 = vmax.xlane.f32.xlu0 %v3082
  %v3084 = vpop.xlane.xlu0 %3083
  %v3085 = vsub.f32 %v3065, %v3072
  %v3086 = vsub.f32 %v3066, %v3075
  %v3087 = vsub.f32 %v3067, %v3078
  %v3088 = vsub.f32 %v3068, %v3081
  %v3089 = vsub.f32 %v3069, %v3084
  %v3090 = vmul.f32 %v3085, 1.442695
  %v3091 = vpow.pop %v3090
  %v3092 = vmul.f32 %v3086, 1.442695
  %v3093 = vpow.pop %v3092
  %v3094 = vmul.f32 %v3087, 1.442695
  %v3095 = vpow.pop %v3094
  %v3096 = vmul.f32 %v3088, 1.442695
  %v3097 = vpow.pop %v3096
  %v3098 = vmul.f32 %v3089, 1.442695
  %v3099 = vpow.pop %v3098
  %v3100 = vsel %vm443, %v3091, 0.0
  %3101 = vadd.xlane.f32.xlu0 %v3100
  %v3102 = vpop.xlane.xlu0 %3101
  %v3103 = vsel %vm443, %v3093, 0.0
  %3104 = vadd.xlane.f32.xlu0 %v3103
  %v3105 = vpop.xlane.xlu0 %3104
  %v3106 = vsel %vm443, %v3095, 0.0
  %3107 = vadd.xlane.f32.xlu0 %v3106
  %v3108 = vpop.xlane.xlu0 %3107
  %v3109 = vsel %vm443, %v3097, 0.0
  %3110 = vadd.xlane.f32.xlu0 %v3109
  %v3111 = vpop.xlane.xlu0 %3110
  %v3112 = vsel %vm443, %v3099, 0.0
  %3113 = vadd.xlane.f32.xlu0 %v3112
  %v3114 = vpop.xlane.xlu0 %3113
  %v3115 = vrcp.pop %v3102
  %v3116 = vmul.f32 %v3091, %v3115
  %v3117 = vrcp.pop %v3105
  %v3118 = vmul.f32 %v3093, %v3117
  %v3119 = vrcp.pop %v3108
  %v3120 = vmul.f32 %v3095, %v3119
  %v3121 = vrcp.pop %v3111
  %v3122 = vmul.f32 %v3097, %v3121
  %v3123 = vrcp.pop %v3114
  %v3124 = vmul.f32 %v3099, %v3123
  %v3125 = vpack.c.bf16 %v3118, %v3116
  %v3126 = vpack.c.bf16 %v3122, %v3120
  %v3127 = vpack.c.bf16 %v3124, %v3124
  %3128 = vrot.lane.b32.xlu0 %v2974, 64
  %v3129 = vpop.permute.xlu0 %3128
  %3130 = vrot.lane.b32.xlu0 %v2975, 64
  %v3131 = vpop.permute.xlu0 %3130
  %3132 = vrot.lane.b32.xlu0 %v2976, 64
  %v3133 = vpop.permute.xlu0 %3132
  %v3137 = vsel %vm443, %v3125, 0
  %v3140 = vsel %vm443, %v3126, 0
  %v3143 = vsel %vm443, %v3127, 0
  %v3146 = vsel %vm519, %v3133, 0
  %3148 = vmatprep.subr.bf16.mxu0 0
  %3149 = vmatpush1.bf16.msra.mxu0 0
  %3150 = vmatprep.subr.bf16.mxu0 0
  %3151 = vmatpush1.bf16.msra.mxu0 0
  %3152 = vmatprep.subr.bf16.mxu0 0
  %3153 = vmatpush1.bf16.msra.mxu0 0
  %3154 = vmatprep.subr.bf16.mxu0 0
  %3155 = vmatpush1.bf16.msra.mxu0 0
  %3156 = vmatprep.subr.bf16.mxu0 0
  %3157 = vmatpush1.bf16.msra.mxu0 0
  %3158 = vmatprep.subr.bf16.mxu0 0
  %3159 = vmatpush1.bf16.msra.mxu0 %v3146
  %3160 = vmatprep.subr.bf16.mxu0 0
  %3161 = vmatpush1.bf16.msra.mxu0 %v3131
  %3162 = vmatprep.subr.bf16.mxu0 0
  %3163 = vmatpush1.bf16.msra.mxu0 %v3129
  %3164 = vmatprep.subr.bf16.mxu0 0
  %3165 = vmatpush2.bf16.msra.mxu0 0
  %3166 = vmatprep.subr.bf16.mxu0 0
  %3167 = vmatpush2.bf16.msra.mxu0 0
  %3168 = vmatprep.subr.bf16.mxu0 0
  %3169 = vmatpush2.bf16.msra.mxu0 0
  %3170 = vmatprep.subr.bf16.mxu0 0
  %3171 = vmatpush2.bf16.msra.mxu0 0
  %3172 = vmatprep.subr.bf16.mxu0 0
  %3173 = vmatpush2.bf16.msra.mxu0 0
  %3174 = vmatprep.subr.bf16.mxu0 0
  %3175 = vmatpush2.bf16.msra.mxu0 0
  %3176 = vmatprep.subr.bf16.mxu0 0
  %3177 = vmatpush2.bf16.msra.mxu0 0
  %3178 = vmatprep.subr.bf16.mxu0 0
  %3179 = vmatpush2.bf16.msra.mxu0 0
  %3180 = vmatprep.mubr.bf16.mxu0 0
  %3181 = vmatmul.mubr.bf16.gmra.mxu0 %v3137
  %v3182 = vpop.f32.mrf.mxu0
  %v3183 = vadd.f32 0.0, %v3182
  %v3184 = vpop.f32.mrf.mxu0
  %v3185 = vpop.f32.mrf.mxu0
  %v3186 = vadd.f32 0.0, %v3185
  %v3187 = vpop.f32.mrf.mxu0
  %3188 = vmatprep.mubr.bf16.mxu0 0
  %3189 = vmatmul.mubr.bf16.gmra.mxu0 %v3140
  %v3190 = vpop.f32.mrf.mxu0
  %v3191 = vadd.f32 0.0, %v3190
  %v3192 = vpop.f32.mrf.mxu0
  %v3193 = vpop.f32.mrf.mxu0
  %v3194 = vadd.f32 0.0, %v3193
  %v3195 = vpop.f32.mrf.mxu0
  %3196 = vmatprep.mubr.bf16.mxu0 0
  %3197 = vmatmul.mubr.bf16.gmra.mxu0 %v3143
  %v3198 = vpop.f32.mrf.mxu0
  %v3199 = vadd.f32 0.0, %v3198
  %v3200 = vpop.f32.mrf.mxu0
  %v3201 = vpop.f32.mrf.mxu0
  %v3202 = vpop.f32.mrf.mxu0
  %3203 = vdwg.mxu0
  %v3204 = vpack.c.bf16 %v3186, %v3183
  %v3205 = vpack.c.bf16 %v3194, %v3191
  %v3206 = vpack.c.bf16 %v3199, %v3199
  %3207 = vrot.lane.b32.xlu0 %v2974, 112
  %v3208 = vpop.permute.xlu0 %3207
  %3209 = vrot.lane.b32.xlu0 %v2975, 112
  %v3210 = vpop.permute.xlu0 %3209
  %3211 = vrot.lane.b32.xlu0 %v2976, 112
  %v3212 = vpop.permute.xlu0 %3211
  %3213 = vrot.lane.b32.xlu0 %v2974, 80
  %v3214 = vpop.permute.xlu0 %3213
  %3215 = vrot.lane.b32.xlu0 %v2975, 80
  %v3216 = vpop.permute.xlu0 %3215
  %3217 = vrot.lane.b32.xlu0 %v2976, 80
  %v3218 = vpop.permute.xlu0 %3217
  %v3220 = vsel %vm358, %v3208, 0
  %v3223 = vsel %vm358, %v3210, 0
  %v3226 = vsel %vm358, %v3212, 0
  %v3229 = vsel %vm358, %v3214, 0
  %v3232 = vsel %vm358, %v3216, 0
  %v3235 = vsel %vm358, %v3218, 0
  %3237 = vmatprep.subr.bf16.mxu0 0
  %3238 = vmatpush1.bf16.xpose.msra.mxu0 0
  %3239 = vmatprep.subr.bf16.mxu0 0
  %3240 = vmatpush1.bf16.xpose.msra.mxu0 0
  %3241 = vmatprep.subr.bf16.mxu0 0
  %3242 = vmatpush1.bf16.xpose.msra.mxu0 0
  %3243 = vmatprep.subr.bf16.mxu0 0
  %3244 = vmatpush1.bf16.xpose.msra.mxu0 0
  %3245 = vmatprep.subr.bf16.mxu0 0
  %3246 = vmatpush1.bf16.xpose.msra.mxu0 0
  %3247 = vmatprep.subr.bf16.mxu0 0
  %3248 = vmatpush1.bf16.xpose.msra.mxu0 %v3235
  %3249 = vmatprep.subr.bf16.mxu0 0
  %3250 = vmatpush1.bf16.xpose.msra.mxu0 %v3232
  %3251 = vmatprep.subr.bf16.mxu0 0
  %3252 = vmatpush1.bf16.xpose.msra.mxu0 %v3229
  %3253 = vmatprep.subr.bf16.mxu0 0
  %3254 = vmatpush2.bf16.xpose.msra.mxu0 0
  %3255 = vmatprep.subr.bf16.mxu0 0
  %3256 = vmatpush2.bf16.xpose.msra.mxu0 0
  %3257 = vmatprep.subr.bf16.mxu0 0
  %3258 = vmatpush2.bf16.xpose.msra.mxu0 0
  %3259 = vmatprep.subr.bf16.mxu0 0
  %3260 = vmatpush2.bf16.xpose.msra.mxu0 0
  %3261 = vmatprep.subr.bf16.mxu0 0
  %3262 = vmatpush2.bf16.xpose.msra.mxu0 0
  %3263 = vmatprep.subr.bf16.mxu0 0
  %3264 = vmatpush2.bf16.xpose.msra.mxu0 0
  %3265 = vmatprep.subr.bf16.mxu0 0
  %3266 = vmatpush2.bf16.xpose.msra.mxu0 0
  %3267 = vmatprep.subr.bf16.mxu0 0
  %3268 = vmatpush2.bf16.xpose.msra.mxu0 0
  %3269 = vmatprep.mubr.bf16.mxu0 0
  %3270 = vmatmul.mubr.bf16.gmra.mxu0 %v3220
  %v3271 = vpop.f32.mrf.mxu0
  %v3272 = vadd.f32 0.0, %v3271
  %v3273 = vpop.f32.mrf.mxu0
  %v3274 = vpop.f32.mrf.mxu0
  %v3275 = vadd.f32 0.0, %v3274
  %v3276 = vpop.f32.mrf.mxu0
  %3277 = vmatprep.mubr.bf16.mxu0 0
  %3278 = vmatmul.mubr.bf16.gmra.mxu0 %v3223
  %v3279 = vpop.f32.mrf.mxu0
  %v3280 = vadd.f32 0.0, %v3279
  %v3281 = vpop.f32.mrf.mxu0
  %v3282 = vpop.f32.mrf.mxu0
  %v3283 = vadd.f32 0.0, %v3282
  %v3284 = vpop.f32.mrf.mxu0
  %3285 = vmatprep.mubr.bf16.mxu0 0
  %3286 = vmatmul.mubr.bf16.gmra.mxu0 %v3226
  %v3287 = vpop.f32.mrf.mxu0
  %v3288 = vadd.f32 0.0, %v3287
  %v3289 = vpop.f32.mrf.mxu0
  %v3290 = vpop.f32.mrf.mxu0
  %v3291 = vpop.f32.mrf.mxu0
  %3292 = vdwg.mxu0
  %v3293 = vmul.f32 %v3272, 0.25
  %v3294 = vmul.f32 %v3275, 0.25
  %v3295 = vmul.f32 %v3280, 0.25
  %v3296 = vmul.f32 %v3283, 0.25
  %v3297 = vmul.f32 %v3288, 0.25
  %v3298 = vadd.f32 %v3293, %v952
  %v3299 = vadd.f32 %v3294, %v953
  %v3300 = vadd.f32 %v3295, %v954
  %v3301 = vadd.f32 %v3296, %v955
  %v3302 = vadd.f32 %v3297, %v956
  %v3303 = vsel %vm443, %v3298, -inf
  %3304 = vmax.xlane.f32.xlu0 %v3303
  %v3305 = vpop.xlane.xlu0 %3304
  %v3306 = vsel %vm443, %v3299, -inf
  %3307 = vmax.xlane.f32.xlu0 %v3306
  %v3308 = vpop.xlane.xlu0 %3307
  %v3309 = vsel %vm443, %v3300, -inf
  %3310 = vmax.xlane.f32.xlu0 %v3309
  %v3311 = vpop.xlane.xlu0 %3310
  %v3312 = vsel %vm443, %v3301, -inf
  %3313 = vmax.xlane.f32.xlu0 %v3312
  %v3314 = vpop.xlane.xlu0 %3313
  %v3315 = vsel %vm443, %v3302, -inf
  %3316 = vmax.xlane.f32.xlu0 %v3315
  %v3317 = vpop.xlane.xlu0 %3316
  %v3318 = vsub.f32 %v3298, %v3305
  %v3319 = vsub.f32 %v3299, %v3308
  %v3320 = vsub.f32 %v3300, %v3311
  %v3321 = vsub.f32 %v3301, %v3314
  %v3322 = vsub.f32 %v3302, %v3317
  %v3323 = vmul.f32 %v3318, 1.442695
  %v3324 = vpow.pop %v3323
  %v3325 = vmul.f32 %v3319, 1.442695
  %v3326 = vpow.pop %v3325
  %v3327 = vmul.f32 %v3320, 1.442695
  %v3328 = vpow.pop %v3327
  %v3329 = vmul.f32 %v3321, 1.442695
  %v3330 = vpow.pop %v3329
  %v3331 = vmul.f32 %v3322, 1.442695
  %v3332 = vpow.pop %v3331
  %v3333 = vsel %vm443, %v3324, 0.0
  %3334 = vadd.xlane.f32.xlu0 %v3333
  %v3335 = vpop.xlane.xlu0 %3334
  %v3336 = vsel %vm443, %v3326, 0.0
  %3337 = vadd.xlane.f32.xlu0 %v3336
  %v3338 = vpop.xlane.xlu0 %3337
  %v3339 = vsel %vm443, %v3328, 0.0
  %3340 = vadd.xlane.f32.xlu0 %v3339
  %v3341 = vpop.xlane.xlu0 %3340
  %v3342 = vsel %vm443, %v3330, 0.0
  %3343 = vadd.xlane.f32.xlu0 %v3342
  %v3344 = vpop.xlane.xlu0 %3343
  %v3345 = vsel %vm443, %v3332, 0.0
  %3346 = vadd.xlane.f32.xlu0 %v3345
  %v3347 = vpop.xlane.xlu0 %3346
  %v3348 = vrcp.pop %v3335
  %v3349 = vmul.f32 %v3324, %v3348
  %v3350 = vrcp.pop %v3338
  %v3351 = vmul.f32 %v3326, %v3350
  %v3352 = vrcp.pop %v3341
  %v3353 = vmul.f32 %v3328, %v3352
  %v3354 = vrcp.pop %v3344
  %v3355 = vmul.f32 %v3330, %v3354
  %v3356 = vrcp.pop %v3347
  %v3357 = vmul.f32 %v3332, %v3356
  %v3358 = vpack.c.bf16 %v3351, %v3349
  %v3359 = vpack.c.bf16 %v3355, %v3353
  %v3360 = vpack.c.bf16 %v3357, %v3357
  %3361 = vrot.lane.b32.xlu0 %v2974, 48
  %v3362 = vpop.permute.xlu0 %3361
  %3363 = vrot.lane.b32.xlu0 %v2975, 48
  %v3364 = vpop.permute.xlu0 %3363
  %3365 = vrot.lane.b32.xlu0 %v2976, 48
  %v3366 = vpop.permute.xlu0 %3365
  %v3370 = vsel %vm443, %v3358, 0
  %v3373 = vsel %vm443, %v3359, 0
  %v3376 = vsel %vm443, %v3360, 0
  %v3379 = vsel %vm519, %v3366, 0
  %3381 = vmatprep.subr.bf16.mxu0 0
  %3382 = vmatpush1.bf16.msra.mxu0 0
  %3383 = vmatprep.subr.bf16.mxu0 0
  %3384 = vmatpush1.bf16.msra.mxu0 0
  %3385 = vmatprep.subr.bf16.mxu0 0
  %3386 = vmatpush1.bf16.msra.mxu0 0
  %3387 = vmatprep.subr.bf16.mxu0 0
  %3388 = vmatpush1.bf16.msra.mxu0 0
  %3389 = vmatprep.subr.bf16.mxu0 0
  %3390 = vmatpush1.bf16.msra.mxu0 0
  %3391 = vmatprep.subr.bf16.mxu0 0
  %3392 = vmatpush1.bf16.msra.mxu0 %v3379
  %3393 = vmatprep.subr.bf16.mxu0 0
  %3394 = vmatpush1.bf16.msra.mxu0 %v3364
  %3395 = vmatprep.subr.bf16.mxu0 0
  %3396 = vmatpush1.bf16.msra.mxu0 %v3362
  %3397 = vmatprep.subr.bf16.mxu0 0
  %3398 = vmatpush2.bf16.msra.mxu0 0
  %3399 = vmatprep.subr.bf16.mxu0 0
  %3400 = vmatpush2.bf16.msra.mxu0 0
  %3401 = vmatprep.subr.bf16.mxu0 0
  %3402 = vmatpush2.bf16.msra.mxu0 0
  %3403 = vmatprep.subr.bf16.mxu0 0
  %3404 = vmatpush2.bf16.msra.mxu0 0
  %3405 = vmatprep.subr.bf16.mxu0 0
  %3406 = vmatpush2.bf16.msra.mxu0 0
  %3407 = vmatprep.subr.bf16.mxu0 0
  %3408 = vmatpush2.bf16.msra.mxu0 0
  %3409 = vmatprep.subr.bf16.mxu0 0
  %3410 = vmatpush2.bf16.msra.mxu0 0
  %3411 = vmatprep.subr.bf16.mxu0 0
  %3412 = vmatpush2.bf16.msra.mxu0 0
  %3413 = vmatprep.mubr.bf16.mxu0 0
  %3414 = vmatmul.mubr.bf16.gmra.mxu0 %v3370
  %v3415 = vpop.f32.mrf.mxu0
  %v3416 = vadd.f32 0.0, %v3415
  %v3417 = vpop.f32.mrf.mxu0
  %v3418 = vpop.f32.mrf.mxu0
  %v3419 = vadd.f32 0.0, %v3418
  %v3420 = vpop.f32.mrf.mxu0
  %3421 = vmatprep.mubr.bf16.mxu0 0
  %3422 = vmatmul.mubr.bf16.gmra.mxu0 %v3373
  %v3423 = vpop.f32.mrf.mxu0
  %v3424 = vadd.f32 0.0, %v3423
  %v3425 = vpop.f32.mrf.mxu0
  %v3426 = vpop.f32.mrf.mxu0
  %v3427 = vadd.f32 0.0, %v3426
  %v3428 = vpop.f32.mrf.mxu0
  %3429 = vmatprep.mubr.bf16.mxu0 0
  %3430 = vmatmul.mubr.bf16.gmra.mxu0 %v3376
  %v3431 = vpop.f32.mrf.mxu0
  %v3432 = vadd.f32 0.0, %v3431
  %v3433 = vpop.f32.mrf.mxu0
  %v3434 = vpop.f32.mrf.mxu0
  %v3435 = vpop.f32.mrf.mxu0
  %3436 = vdwg.mxu0
  %v3437 = vpack.c.bf16 %v3419, %v3416
  %v3438 = vpack.c.bf16 %v3427, %v3424
  %v3439 = vpack.c.bf16 %v3432, %v3432
  %v3441 = vsel %vm358, %v3437, 0
  %v3444 = vsel %vm358, %v3438, 0
  %v3447 = vsel %vm358, %v3439, 0
  %3449 = vmatprep.subr.bf16.mxu0 0
  %3450 = vmatpush1.bf16.msra.mxu0 0
  %3451 = vmatprep.subr.bf16.mxu0 0
  %3452 = vmatpush1.bf16.msra.mxu0 0
  %3453 = vmatprep.subr.bf16.mxu0 0
  %3454 = vmatpush1.bf16.msra.mxu0 0
  %3455 = vmatprep.subr.bf16.mxu0 0
  %3456 = vmatpush1.bf16.msra.mxu0 0
  %3457 = vmatprep.subr.bf16.mxu0 0
  %3458 = vmatpush1.bf16.msra.mxu0 0
  %3459 = vmatprep.subr.bf16.mxu0 0
  %3460 = vmatpush1.bf16.msra.mxu0 0
  %3461 = vmatprep.subr.bf16.mxu0 0
  %3462 = vmatpush1.bf16.msra.mxu0 0
  %3463 = vmatprep.subr.bf16.mxu0 0
  %3464 = vmatpush1.bf16.msra.mxu0 %v2839
  %3465 = vmatprep.subr.bf16.mxu0 0
  %3466 = vmatpush2.bf16.msra.mxu0 0
  %3467 = vmatprep.subr.bf16.mxu0 0
  %3468 = vmatpush2.bf16.msra.mxu0 0
  %3469 = vmatprep.subr.bf16.mxu0 0
  %3470 = vmatpush2.bf16.msra.mxu0 0
  %3471 = vmatprep.subr.bf16.mxu0 0
  %3472 = vmatpush2.bf16.msra.mxu0 0
  %3473 = vmatprep.subr.bf16.mxu0 0
  %3474 = vmatpush2.bf16.msra.mxu0 0
  %3475 = vmatprep.subr.bf16.mxu0 0
  %3476 = vmatpush2.bf16.msra.mxu0 0
  %3477 = vmatprep.subr.bf16.mxu0 0
  %3478 = vmatpush2.bf16.msra.mxu0 0
  %3479 = vmatprep.subr.bf16.mxu0 0
  %3480 = vmatpush2.bf16.msra.mxu0 0
  %3481 = vmatprep.mubr.bf16.mxu0 0
  %3482 = vmatmul.mubr.bf16.gmra.mxu0 %v3441
  %v3483 = vpop.f32.mrf.mxu0
  %v3484 = vadd.f32 0.0, %v3483
  %v3485 = vpop.f32.mrf.mxu0
  %v3486 = vpop.f32.mrf.mxu0
  %v3487 = vadd.f32 0.0, %v3486
  %v3488 = vpop.f32.mrf.mxu0
  %3489 = vmatprep.mubr.bf16.mxu0 0
  %3490 = vmatmul.mubr.bf16.gmra.mxu0 %v3444
  %v3491 = vpop.f32.mrf.mxu0
  %v3492 = vadd.f32 0.0, %v3491
  %v3493 = vpop.f32.mrf.mxu0
  %v3494 = vpop.f32.mrf.mxu0
  %v3495 = vadd.f32 0.0, %v3494
  %v3496 = vpop.f32.mrf.mxu0
  %3497 = vmatprep.mubr.bf16.mxu0 0
  %3498 = vmatmul.mubr.bf16.gmra.mxu0 %v3447
  %v3499 = vpop.f32.mrf.mxu0
  %v3500 = vadd.f32 0.0, %v3499
  %v3501 = vpop.f32.mrf.mxu0
  %v3502 = vpop.f32.mrf.mxu0
  %v3503 = vpop.f32.mrf.mxu0
  %3504 = vdwg.mxu0
  %v3506 = vsel %vm358, %v3204, 0
  %v3509 = vsel %vm358, %v3205, 0
  %v3512 = vsel %vm358, %v3206, 0
  %3514 = vmatprep.subr.bf16.mxu0 0
  %3515 = vmatpush1.bf16.msra.mxu0 0
  %3516 = vmatprep.subr.bf16.mxu0 0
  %3517 = vmatpush1.bf16.msra.mxu0 0
  %3518 = vmatprep.subr.bf16.mxu0 0
  %3519 = vmatpush1.bf16.msra.mxu0 0
  %3520 = vmatprep.subr.bf16.mxu0 0
  %3521 = vmatpush1.bf16.msra.mxu0 0
  %3522 = vmatprep.subr.bf16.mxu0 0
  %3523 = vmatpush1.bf16.msra.mxu0 0
  %3524 = vmatprep.subr.bf16.mxu0 0
  %3525 = vmatpush1.bf16.msra.mxu0 0
  %3526 = vmatprep.subr.bf16.mxu0 0
  %3527 = vmatpush1.bf16.msra.mxu0 0
  %3528 = vmatprep.subr.bf16.mxu0 0
  %3529 = vmatpush1.bf16.msra.mxu0 %v2907
  %3530 = vmatprep.subr.bf16.mxu0 0
  %3531 = vmatpush2.bf16.msra.mxu0 0
  %3532 = vmatprep.subr.bf16.mxu0 0
  %3533 = vmatpush2.bf16.msra.mxu0 0
  %3534 = vmatprep.subr.bf16.mxu0 0
  %3535 = vmatpush2.bf16.msra.mxu0 0
  %3536 = vmatprep.subr.bf16.mxu0 0
  %3537 = vmatpush2.bf16.msra.mxu0 0
  %3538 = vmatprep.subr.bf16.mxu0 0
  %3539 = vmatpush2.bf16.msra.mxu0 0
  %3540 = vmatprep.subr.bf16.mxu0 0
  %3541 = vmatpush2.bf16.msra.mxu0 0
  %3542 = vmatprep.subr.bf16.mxu0 0
  %3543 = vmatpush2.bf16.msra.mxu0 0
  %3544 = vmatprep.subr.bf16.mxu0 0
  %3545 = vmatpush2.bf16.msra.mxu0 0
  %3546 = vmatprep.mubr.bf16.mxu0 0
  %3547 = vmatmul.mubr.bf16.gmra.mxu0 %v3506
  %v3548 = vpop.f32.mrf.mxu0
  %v3549 = vadd.f32 %v3484, %v3548
  %v3550 = vpop.f32.mrf.mxu0
  %v3551 = vpop.f32.mrf.mxu0
  %v3552 = vadd.f32 %v3487, %v3551
  %v3553 = vpop.f32.mrf.mxu0
  %3554 = vmatprep.mubr.bf16.mxu0 0
  %3555 = vmatmul.mubr.bf16.gmra.mxu0 %v3509
  %v3556 = vpop.f32.mrf.mxu0
  %v3557 = vadd.f32 %v3492, %v3556
  %v3558 = vpop.f32.mrf.mxu0
  %v3559 = vpop.f32.mrf.mxu0
  %v3560 = vadd.f32 %v3495, %v3559
  %v3561 = vpop.f32.mrf.mxu0
  %3562 = vmatprep.mubr.bf16.mxu0 0
  %3563 = vmatmul.mubr.bf16.gmra.mxu0 %v3512
  %v3564 = vpop.f32.mrf.mxu0
  %v3565 = vadd.f32 %v3500, %v3564
  %v3566 = vpop.f32.mrf.mxu0
  %v3567 = vpop.f32.mrf.mxu0
  %v3568 = vpop.f32.mrf.mxu0
  %3569 = vdwg.mxu0
  %3571 = vrot.lane.b32.xlu0 %v2271, 32
  %v3572 = vpop.permute.xlu0 %3571
  %v3574 = vadd.f32 %v2953, %v3572
  %v3575 = vadd.f32 %v2956, %v3572
  %v3576 = vadd.f32 %v2961, %v3572
  %v3577 = vadd.f32 %v2964, %v3572
  %v3578 = vadd.f32 %v2969, %v3572
  %v3579 = vadd.f32 %v3549, %v3572
  %v3580 = vadd.f32 %v3552, %v3572
  %v3581 = vadd.f32 %v3557, %v3572
  %v3582 = vadd.f32 %v3560, %v3572
  %v3583 = vadd.f32 %v3565, %v3572
  %v3584 = vadd.f32 %v2064, %v3574
  %v3585 = vadd.f32 %v2065, %v3575
  %v3586 = vadd.f32 %v2066, %v3576
  %v3587 = vadd.f32 %v2067, %v3577
  %v3588 = vadd.f32 %v2068, %v3578
  %v3589 = vadd.f32 %v2069, %v3579
  %v3590 = vadd.f32 %v2070, %v3580
  %v3591 = vadd.f32 %v2071, %v3581
  %v3592 = vadd.f32 %v2072, %v3582
  %v3593 = vadd.f32 %v2073, %v3583
  %v3594 = vsel %vm72, %v3584, 0.0
  %3595 = vadd.xlane.f32.xlu0 %v3594
  %v3596 = vpop.xlane.xlu0 %3595
  %v3597 = vsel %vm72, %v3585, 0.0
  %3598 = vadd.xlane.f32.xlu0 %v3597
  %v3599 = vpop.xlane.xlu0 %3598
  %v3600 = vsel %vm72, %v3586, 0.0
  %3601 = vadd.xlane.f32.xlu0 %v3600
  %v3602 = vpop.xlane.xlu0 %3601
  %v3603 = vsel %vm72, %v3587, 0.0
  %3604 = vadd.xlane.f32.xlu0 %v3603
  %v3605 = vpop.xlane.xlu0 %3604
  %v3606 = vsel %vm72, %v3588, 0.0
  %3607 = vadd.xlane.f32.xlu0 %v3606
  %v3608 = vpop.xlane.xlu0 %3607
  %v3609 = vsel %vm72, %v3589, 0.0
  %3610 = vadd.xlane.f32.xlu0 %v3609
  %v3611 = vpop.xlane.xlu0 %3610
  %v3612 = vsel %vm72, %v3590, 0.0
  %3613 = vadd.xlane.f32.xlu0 %v3612
  %v3614 = vpop.xlane.xlu0 %3613
  %v3615 = vsel %vm72, %v3591, 0.0
  %3616 = vadd.xlane.f32.xlu0 %v3615
  %v3617 = vpop.xlane.xlu0 %3616
  %v3618 = vsel %vm72, %v3592, 0.0
  %3619 = vadd.xlane.f32.xlu0 %v3618
  %v3620 = vpop.xlane.xlu0 %3619
  %v3621 = vsel %vm72, %v3593, 0.0
  %3622 = vadd.xlane.f32.xlu0 %v3621
  %v3623 = vpop.xlane.xlu0 %3622
  %v3624 = vmul.f32 %v3596, %v103
  %v3625 = vmul.f32 %v3599, %v103
  %v3626 = vmul.f32 %v3602, %v103
  %v3627 = vmul.f32 %v3605, %v103
  %v3628 = vmul.f32 %v3608, %v103
  %v3629 = vmul.f32 %v3611, %v103
  %v3630 = vmul.f32 %v3614, %v103
  %v3631 = vmul.f32 %v3617, %v103
  %v3632 = vmul.f32 %v3620, %v103
  %v3633 = vmul.f32 %v3623, %v103
  %v3634 = vsub.f32 %v3584, %v3624
  %v3635 = vsub.f32 %v3585, %v3625
  %v3636 = vsub.f32 %v3586, %v3626
  %v3637 = vsub.f32 %v3587, %v3627
  %v3638 = vsub.f32 %v3588, %v3628
  %v3639 = vsub.f32 %v3589, %v3629
  %v3640 = vsub.f32 %v3590, %v3630
  %v3641 = vsub.f32 %v3591, %v3631
  %v3642 = vsub.f32 %v3592, %v3632
  %v3643 = vsub.f32 %v3593, %v3633
  %v3644 = vmul.f32 %v3634, %v3634
  %v3645 = vmul.f32 %v3635, %v3635
  %v3646 = vmul.f32 %v3636, %v3636
  %v3647 = vmul.f32 %v3637, %v3637
  %v3648 = vmul.f32 %v3638, %v3638
  %v3649 = vmul.f32 %v3639, %v3639
  %v3650 = vmul.f32 %v3640, %v3640
  %v3651 = vmul.f32 %v3641, %v3641
  %v3652 = vmul.f32 %v3642, %v3642
  %v3653 = vmul.f32 %v3643, %v3643
  %v3654 = vsel %vm72, %v3644, 0.0
  %3655 = vadd.xlane.f32.xlu0 %v3654
  %v3656 = vpop.xlane.xlu0 %3655
  %v3657 = vsel %vm72, %v3645, 0.0
  %3658 = vadd.xlane.f32.xlu0 %v3657
  %v3659 = vpop.xlane.xlu0 %3658
  %v3660 = vsel %vm72, %v3646, 0.0
  %3661 = vadd.xlane.f32.xlu0 %v3660
  %v3662 = vpop.xlane.xlu0 %3661
  %v3663 = vsel %vm72, %v3647, 0.0
  %3664 = vadd.xlane.f32.xlu0 %v3663
  %v3665 = vpop.xlane.xlu0 %3664
  %v3666 = vsel %vm72, %v3648, 0.0
  %3667 = vadd.xlane.f32.xlu0 %v3666
  %v3668 = vpop.xlane.xlu0 %3667
  %v3669 = vsel %vm72, %v3649, 0.0
  %3670 = vadd.xlane.f32.xlu0 %v3669
  %v3671 = vpop.xlane.xlu0 %3670
  %v3672 = vsel %vm72, %v3650, 0.0
  %3673 = vadd.xlane.f32.xlu0 %v3672
  %v3674 = vpop.xlane.xlu0 %3673
  %v3675 = vsel %vm72, %v3651, 0.0
  %3676 = vadd.xlane.f32.xlu0 %v3675
  %v3677 = vpop.xlane.xlu0 %3676
  %v3678 = vsel %vm72, %v3652, 0.0
  %3679 = vadd.xlane.f32.xlu0 %v3678
  %v3680 = vpop.xlane.xlu0 %3679
  %v3681 = vsel %vm72, %v3653, 0.0
  %3682 = vadd.xlane.f32.xlu0 %v3681
  %v3683 = vpop.xlane.xlu0 %3682
  %v3684 = vmul.f32 %v3656, %v103
  %v3685 = vmul.f32 %v3659, %v103
  %v3686 = vmul.f32 %v3662, %v103
  %v3687 = vmul.f32 %v3665, %v103
  %v3688 = vmul.f32 %v3668, %v103
  %v3689 = vmul.f32 %v3671, %v103
  %v3690 = vmul.f32 %v3674, %v103
  %v3691 = vmul.f32 %v3677, %v103
  %v3692 = vmul.f32 %v3680, %v103
  %v3693 = vmul.f32 %v3683, %v103
  %v3694 = vadd.f32 %v3684, 1e-05
  %v3695 = vadd.f32 %v3685, 1e-05
  %v3696 = vadd.f32 %v3686, 1e-05
  %v3697 = vadd.f32 %v3687, 1e-05
  %v3698 = vadd.f32 %v3688, 1e-05
  %v3699 = vadd.f32 %v3689, 1e-05
  %v3700 = vadd.f32 %v3690, 1e-05
  %v3701 = vadd.f32 %v3691, 1e-05
  %v3702 = vadd.f32 %v3692, 1e-05
  %v3703 = vadd.f32 %v3693, 1e-05
  %v3704 = vrsqrt.pop %v3694
  %v3705 = vrsqrt.pop %v3695
  %v3706 = vrsqrt.pop %v3696
  %v3707 = vrsqrt.pop %v3697
  %v3708 = vrsqrt.pop %v3698
  %v3709 = vrsqrt.pop %v3699
  %v3710 = vrsqrt.pop %v3700
  %v3711 = vrsqrt.pop %v3701
  %v3712 = vrsqrt.pop %v3702
  %v3713 = vrsqrt.pop %v3703
  %v3714 = vmul.f32 %v3634, %v3704
  %v3715 = vmul.f32 %v3635, %v3705
  %v3716 = vmul.f32 %v3636, %v3706
  %v3717 = vmul.f32 %v3637, %v3707
  %v3718 = vmul.f32 %v3638, %v3708
  %v3719 = vmul.f32 %v3639, %v3709
  %v3720 = vmul.f32 %v3640, %v3710
  %v3721 = vmul.f32 %v3641, %v3711
  %v3722 = vmul.f32 %v3642, %v3712
  %v3723 = vmul.f32 %v3643, %v3713
  %v3724 = vlaneseq
  %v3725 = vshrl.u32 %v3724, 7
  %v3726 = vsub.s32 2, %v3725
  %v3727 = vrot.slane %v2104, %v3726
  %v3728 = vmul.f32 %v3714, %v3727
  %v3729 = vmul.f32 %v3715, %v3727
  %v3730 = vmul.f32 %v3716, %v3727
  %v3731 = vmul.f32 %v3717, %v3727
  %v3732 = vmul.f32 %v3718, %v3727
  %v3733 = vmul.f32 %v3719, %v3727
  %v3734 = vmul.f32 %v3720, %v3727
  %v3735 = vmul.f32 %v3721, %v3727
  %v3736 = vmul.f32 %v3722, %v3727
  %v3737 = vmul.f32 %v3723, %v3727
  %v3738 = vlaneseq
  %v3739 = vshrl.u32 %v3738, 7
  %v3740 = vsub.s32 3, %v3739
  %v3741 = vrot.slane %v2104, %v3740
  %v3742 = vadd.f32 %v3728, %v3741
  %v3743 = vadd.f32 %v3729, %v3741
  %v3744 = vadd.f32 %v3730, %v3741
  %v3745 = vadd.f32 %v3731, %v3741
  %v3746 = vadd.f32 %v3732, %v3741
  %v3747 = vadd.f32 %v3733, %v3741
  %v3748 = vadd.f32 %v3734, %v3741
  %v3749 = vadd.f32 %v3735, %v3741
  %v3750 = vadd.f32 %v3736, %v3741
  %v3751 = vadd.f32 %v3737, %v3741
  %v3752 = vpack.c.bf16 %v3743, %v3742
  %v3753 = vpack.c.bf16 %v3745, %v3744
  %v3754 = vpack.c.bf16 %v3747, %v3746
  %v3755 = vpack.c.bf16 %v3749, %v3748
  %v3756 = vpack.c.bf16 %v3751, %v3750
  %v3757 = vlaneseq
  %v3758 = vshrl.u32 %v3757, 7
  %v3759 = vsub.s32 1, %v3758
  %v3760 = vrot.slane %v2102, %v3759
  %v3765 = vunpack.c.l.b16 %v2080
  %v3766 = vunpack.c.l.b16 %v2081
  %v3767 = vunpack.c.l.b16 %v2082
  %v3768 = vunpack.c.l.b16 %v2083
  %v3769 = vpack.c.b16 %v3766, %v3765
  %v3770 = vpack.c.b16 %v3768, %v3767
  %v3774 = vsel %vm72, %v3752, 0
  %v3777 = vsel %vm72, %v3753, 0
  %v3780 = vsel %vm72, %v3754, 0
  %v3783 = vsel %vm72, %v3755, 0
  %v3786 = vsel %vm72, %v3756, 0
  %3788 = vmatprep.subr.bf16.mxu0 0
  %3789 = vmatpush1.bf16.msra.mxu0 0
  %3790 = vmatprep.subr.bf16.mxu0 0
  %3791 = vmatpush1.bf16.msra.mxu0 0
  %3792 = vmatprep.subr.bf16.mxu0 0
  %3793 = vmatpush1.bf16.msra.mxu0 0
  %3794 = vmatprep.subr.bf16.mxu0 0
  %3795 = vmatpush1.bf16.msra.mxu0 0
  %3796 = vmatprep.subr.bf16.mxu0 0
  %3797 = vmatpush1.bf16.msra.mxu0 0
  %3798 = vmatprep.subr.bf16.mxu0 0
  %3799 = vmatpush1.bf16.msra.mxu0 0
  %3800 = vmatprep.subr.bf16.mxu0 0
  %3801 = vmatpush1.bf16.msra.mxu0 %v3770
  %3802 = vmatprep.subr.bf16.mxu0 0
  %3803 = vmatpush1.bf16.msra.mxu0 %v3769
  %3804 = vmatprep.subr.bf16.mxu0 0
  %3805 = vmatpush2.bf16.msra.mxu0 0
  %3806 = vmatprep.subr.bf16.mxu0 0
  %3807 = vmatpush2.bf16.msra.mxu0 0
  %3808 = vmatprep.subr.bf16.mxu0 0
  %3809 = vmatpush2.bf16.msra.mxu0 0
  %3810 = vmatprep.subr.bf16.mxu0 0
  %3811 = vmatpush2.bf16.msra.mxu0 0
  %3812 = vmatprep.subr.bf16.mxu0 0
  %3813 = vmatpush2.bf16.msra.mxu0 0
  %3814 = vmatprep.subr.bf16.mxu0 0
  %3815 = vmatpush2.bf16.msra.mxu0 0
  %3816 = vmatprep.subr.bf16.mxu0 0
  %3817 = vmatpush2.bf16.msra.mxu0 0
  %3818 = vmatprep.subr.bf16.mxu0 0
  %3819 = vmatpush2.bf16.msra.mxu0 0
  %3820 = vmatprep.mubr.bf16.mxu0 0
  %3821 = vmatmul.mubr.bf16.gmra.mxu0 %v3774
  %v3822 = vpop.f32.mrf.mxu0
  %v3823 = vadd.f32 %v3760, %v3822
  %v3824 = vpop.f32.mrf.mxu0
  %v3825 = vpop.f32.mrf.mxu0
  %v3826 = vadd.f32 %v3760, %v3825
  %v3827 = vpop.f32.mrf.mxu0
  %3828 = vmatprep.mubr.bf16.mxu0 0
  %3829 = vmatmul.mubr.bf16.gmra.mxu0 %v3777
  %v3830 = vpop.f32.mrf.mxu0
  %v3831 = vadd.f32 %v3760, %v3830
  %v3832 = vpop.f32.mrf.mxu0
  %v3833 = vpop.f32.mrf.mxu0
  %v3834 = vadd.f32 %v3760, %v3833
  %v3835 = vpop.f32.mrf.mxu0
  %3836 = vmatprep.mubr.bf16.mxu0 0
  %3837 = vmatmul.mubr.bf16.gmra.mxu0 %v3780
  %v3838 = vpop.f32.mrf.mxu0
  %v3839 = vadd.f32 %v3760, %v3838
  %v3840 = vpop.f32.mrf.mxu0
  %v3841 = vpop.f32.mrf.mxu0
  %v3842 = vadd.f32 %v3760, %v3841
  %v3843 = vpop.f32.mrf.mxu0
  %3844 = vmatprep.mubr.bf16.mxu0 0
  %3845 = vmatmul.mubr.bf16.gmra.mxu0 %v3783
  %v3846 = vpop.f32.mrf.mxu0
  %v3847 = vadd.f32 %v3760, %v3846
  %v3848 = vpop.f32.mrf.mxu0
  %v3849 = vpop.f32.mrf.mxu0
  %v3850 = vadd.f32 %v3760, %v3849
  %v3851 = vpop.f32.mrf.mxu0
  %3852 = vmatprep.mubr.bf16.mxu0 0
  %3853 = vmatmul.mubr.bf16.gmra.mxu0 %v3786
  %v3854 = vpop.f32.mrf.mxu0
  %v3855 = vadd.f32 %v3760, %v3854
  %v3856 = vpop.f32.mrf.mxu0
  %v3857 = vpop.f32.mrf.mxu0
  %v3858 = vadd.f32 %v3760, %v3857
  %v3859 = vpop.f32.mrf.mxu0
  %3860 = vdwg.mxu0
  %v3861 = vmul.f32 %v3823, 0.5
  %v3862 = vmul.f32 %v3826, 0.5
  %v3863 = vmul.f32 %v3831, 0.5
  %v3864 = vmul.f32 %v3834, 0.5
  %v3865 = vmul.f32 %v3839, 0.5
  %v3866 = vmul.f32 %v3842, 0.5
  %v3867 = vmul.f32 %v3847, 0.5
  %v3868 = vmul.f32 %v3850, 0.5
  %v3869 = vmul.f32 %v3855, 0.5
  %v3870 = vmul.f32 %v3858, 0.5
  %v3871 = vmul.f32 %v3823, 0.044715
  %v3872 = vmul.f32 %v3826, 0.044715
  %v3873 = vmul.f32 %v3831, 0.044715
  %v3874 = vmul.f32 %v3834, 0.044715
  %v3875 = vmul.f32 %v3839, 0.044715
  %v3876 = vmul.f32 %v3842, 0.044715
  %v3877 = vmul.f32 %v3847, 0.044715
  %v3878 = vmul.f32 %v3850, 0.044715
  %v3879 = vmul.f32 %v3855, 0.044715
  %v3880 = vmul.f32 %v3858, 0.044715
  %v3881 = vmul.f32 %v3871, %v3823
  %v3882 = vmul.f32 %v3872, %v3826
  %v3883 = vmul.f32 %v3873, %v3831
  %v3884 = vmul.f32 %v3874, %v3834
  %v3885 = vmul.f32 %v3875, %v3839
  %v3886 = vmul.f32 %v3876, %v3842
  %v3887 = vmul.f32 %v3877, %v3847
  %v3888 = vmul.f32 %v3878, %v3850
  %v3889 = vmul.f32 %v3879, %v3855
  %v3890 = vmul.f32 %v3880, %v3858
  %v3891 = vmul.f32 %v3881, %v3823
  %v3892 = vmul.f32 %v3882, %v3826
  %v3893 = vmul.f32 %v3883, %v3831
  %v3894 = vmul.f32 %v3884, %v3834
  %v3895 = vmul.f32 %v3885, %v3839
  %v3896 = vmul.f32 %v3886, %v3842
  %v3897 = vmul.f32 %v3887, %v3847
  %v3898 = vmul.f32 %v3888, %v3850
  %v3899 = vmul.f32 %v3889, %v3855
  %v3900 = vmul.f32 %v3890, %v3858
  %v3901 = vadd.f32 %v3823, %v3891
  %v3902 = vadd.f32 %v3826, %v3892
  %v3903 = vadd.f32 %v3831, %v3893
  %v3904 = vadd.f32 %v3834, %v3894
  %v3905 = vadd.f32 %v3839, %v3895
  %v3906 = vadd.f32 %v3842, %v3896
  %v3907 = vadd.f32 %v3847, %v3897
  %v3908 = vadd.f32 %v3850, %v3898
  %v3909 = vadd.f32 %v3855, %v3899
  %v3910 = vadd.f32 %v3858, %v3900
  %v3911 = vmul.f32 %v3901, 0.7978846
  %v3912 = vmul.f32 %v3902, 0.7978846
  %v3913 = vmul.f32 %v3903, 0.7978846
  %v3914 = vmul.f32 %v3904, 0.7978846
  %v3915 = vmul.f32 %v3905, 0.7978846
  %v3916 = vmul.f32 %v3906, 0.7978846
  %v3917 = vmul.f32 %v3907, 0.7978846
  %v3918 = vmul.f32 %v3908, 0.7978846
  %v3919 = vmul.f32 %v3909, 0.7978846
  %v3920 = vmul.f32 %v3910, 0.7978846
  %v3921 = vtanh.pop %v3911
  %v3922 = vtanh.pop %v3912
  %v3923 = vtanh.pop %v3913
  %v3924 = vtanh.pop %v3914
  %v3925 = vtanh.pop %v3915
  %v3926 = vtanh.pop %v3916
  %v3927 = vtanh.pop %v3917
  %v3928 = vtanh.pop %v3918
  %v3929 = vtanh.pop %v3919
  %v3930 = vtanh.pop %v3920
  %v3931 = vadd.f32 %v3921, 1.0
  %v3932 = vadd.f32 %v3922, 1.0
  %v3933 = vadd.f32 %v3923, 1.0
  %v3934 = vadd.f32 %v3924, 1.0
  %v3935 = vadd.f32 %v3925, 1.0
  %v3936 = vadd.f32 %v3926, 1.0
  %v3937 = vadd.f32 %v3927, 1.0
  %v3938 = vadd.f32 %v3928, 1.0
  %v3939 = vadd.f32 %v3929, 1.0
  %v3940 = vadd.f32 %v3930, 1.0
  %v3941 = vmul.f32 %v3861, %v3931
  %v3942 = vmul.f32 %v3862, %v3932
  %v3943 = vmul.f32 %v3863, %v3933
  %v3944 = vmul.f32 %v3864, %v3934
  %v3945 = vmul.f32 %v3865, %v3935
  %v3946 = vmul.f32 %v3866, %v3936
  %v3947 = vmul.f32 %v3867, %v3937
  %v3948 = vmul.f32 %v3868, %v3938
  %v3949 = vmul.f32 %v3869, %v3939
  %v3950 = vmul.f32 %v3870, %v3940
  %v3951 = vpack.c.bf16 %v3942, %v3941
  %v3952 = vpack.c.bf16 %v3944, %v3943
  %v3953 = vpack.c.bf16 %v3946, %v3945
  %v3954 = vpack.c.bf16 %v3948, %v3947
  %v3955 = vpack.c.bf16 %v3950, %v3949
  %v3956 = vlaneseq
  %v3957 = vshrl.u32 %v3956, 7
  %v3958 = vsub.s32 2, %v3957
  %v3959 = vrot.slane %v2102, %v3958
  %v3976 = vunpack.c.l.b16 %v2085
  %v3977 = vunpack.c.l.b16 %v2086
  %v3978 = vunpack.c.l.b16 %v2087
  %v3979 = vunpack.c.l.b16 %v2088
  %v3980 = vunpack.c.l.b16 %v2089
  %v3981 = vunpack.c.l.b16 %v2090
  %v3982 = vunpack.c.l.b16 %v2091
  %v3983 = vunpack.c.l.b16 %v2092
  %v3984 = vunpack.c.l.b16 %v2093
  %v3985 = vunpack.c.l.b16 %v2094
  %v3986 = vunpack.c.l.b16 %v2095
  %v3987 = vunpack.c.l.b16 %v2096
  %v3988 = vunpack.c.l.b16 %v2097
  %v3989 = vunpack.c.l.b16 %v2098
  %v3990 = vunpack.c.l.b16 %v2099
  %v3991 = vunpack.c.l.b16 %v2100
  %v3992 = vpack.c.b16 %v3977, %v3976
  %v3993 = vpack.c.b16 %v3979, %v3978
  %v3994 = vpack.c.b16 %v3981, %v3980
  %v3995 = vpack.c.b16 %v3983, %v3982
  %v3996 = vpack.c.b16 %v3985, %v3984
  %v3997 = vpack.c.b16 %v3987, %v3986
  %v3998 = vpack.c.b16 %v3989, %v3988
  %v3999 = vpack.c.b16 %v3991, %v3990
  %4008 = vmatprep.subr.bf16.mxu0 0
  %4009 = vmatpush1.bf16.msra.mxu0 %v3999
  %4010 = vmatprep.subr.bf16.mxu0 0
  %4011 = vmatpush1.bf16.msra.mxu0 %v3998
  %4012 = vmatprep.subr.bf16.mxu0 0
  %4013 = vmatpush1.bf16.msra.mxu0 %v3997
  %4014 = vmatprep.subr.bf16.mxu0 0
  %4015 = vmatpush1.bf16.msra.mxu0 %v3996
  %4016 = vmatprep.subr.bf16.mxu0 0
  %4017 = vmatpush1.bf16.msra.mxu0 %v3995
  %4018 = vmatprep.subr.bf16.mxu0 0
  %4019 = vmatpush1.bf16.msra.mxu0 %v3994
  %4020 = vmatprep.subr.bf16.mxu0 0
  %4021 = vmatpush1.bf16.msra.mxu0 %v3993
  %4022 = vmatprep.subr.bf16.mxu0 0
  %4023 = vmatpush1.bf16.msra.mxu0 %v3992
  %4024 = vmatprep.subr.bf16.mxu0 0
  %4025 = vmatpush2.bf16.msra.mxu0 0
  %4026 = vmatprep.subr.bf16.mxu0 0
  %4027 = vmatpush2.bf16.msra.mxu0 0
  %4028 = vmatprep.subr.bf16.mxu0 0
  %4029 = vmatpush2.bf16.msra.mxu0 0
  %4030 = vmatprep.subr.bf16.mxu0 0
  %4031 = vmatpush2.bf16.msra.mxu0 0
  %4032 = vmatprep.subr.bf16.mxu0 0
  %4033 = vmatpush2.bf16.msra.mxu0 0
  %4034 = vmatprep.subr.bf16.mxu0 0
  %4035 = vmatpush2.bf16.msra.mxu0 0
  %4036 = vmatprep.subr.bf16.mxu0 0
  %4037 = vmatpush2.bf16.msra.mxu0 0
  %4038 = vmatprep.subr.bf16.mxu0 0
  %4039 = vmatpush2.bf16.msra.mxu0 0
  %4040 = vmatprep.mubr.bf16.mxu0 0
  %4041 = vmatmul.mubr.bf16.gmra.mxu0 %v3951
  %v4042 = vpop.f32.mrf.mxu0
  %v4043 = vadd.f32 %v3959, %v4042
  %v4044 = vpop.f32.mrf.mxu0
  %v4045 = vpop.f32.mrf.mxu0
  %v4046 = vadd.f32 %v3959, %v4045
  %v4047 = vpop.f32.mrf.mxu0
  %4048 = vmatprep.mubr.bf16.mxu0 0
  %4049 = vmatmul.mubr.bf16.gmra.mxu0 %v3952
  %v4050 = vpop.f32.mrf.mxu0
  %v4051 = vadd.f32 %v3959, %v4050
  %v4052 = vpop.f32.mrf.mxu0
  %v4053 = vpop.f32.mrf.mxu0
  %v4054 = vadd.f32 %v3959, %v4053
  %v4055 = vpop.f32.mrf.mxu0
  %4056 = vmatprep.mubr.bf16.mxu0 0
  %4057 = vmatmul.mubr.bf16.gmra.mxu0 %v3953
  %v4058 = vpop.f32.mrf.mxu0
  %v4059 = vadd.f32 %v3959, %v4058
  %v4060 = vpop.f32.mrf.mxu0
  %v4061 = vpop.f32.mrf.mxu0
  %v4062 = vadd.f32 %v3959, %v4061
  %v4063 = vpop.f32.mrf.mxu0
  %4064 = vmatprep.mubr.bf16.mxu0 0
  %4065 = vmatmul.mubr.bf16.gmra.mxu0 %v3954
  %v4066 = vpop.f32.mrf.mxu0
  %v4067 = vadd.f32 %v3959, %v4066
  %v4068 = vpop.f32.mrf.mxu0
  %v4069 = vpop.f32.mrf.mxu0
  %v4070 = vadd.f32 %v3959, %v4069
  %v4071 = vpop.f32.mrf.mxu0
  %4072 = vmatprep.mubr.bf16.mxu0 0
  %4073 = vmatmul.mubr.bf16.gmra.mxu0 %v3955
  %v4074 = vpop.f32.mrf.mxu0
  %v4075 = vadd.f32 %v3959, %v4074
  %v4076 = vpop.f32.mrf.mxu0
  %v4077 = vpop.f32.mrf.mxu0
  %v4078 = vadd.f32 %v3959, %v4077
  %v4079 = vpop.f32.mrf.mxu0
  %4080 = vdwg.mxu0
  %v4081 = vadd.f32 %v3584, %v4043
  %v4082 = vadd.f32 %v3585, %v4046
  %v4083 = vadd.f32 %v3586, %v4051
  %v4084 = vadd.f32 %v3587, %v4054
  %v4085 = vadd.f32 %v3588, %v4059
  %v4086 = vadd.f32 %v3589, %v4062
  %v4087 = vadd.f32 %v3590, %v4067
  %v4088 = vadd.f32 %v3591, %v4070
  %v4089 = vadd.f32 %v3592, %v4075
  %v4090 = vadd.f32 %v3593, %v4078
  %v4091 = vld [vmem:[%s9] sm:$0x3]
  %v4092 = vsel %vm72, %v4081, 0.0
  %4093 = vadd.xlane.f32.xlu0 %v4092
  %v4094 = vpop.xlane.xlu0 %4093
  %v4095 = vsel %vm72, %v4082, 0.0
  %4096 = vadd.xlane.f32.xlu0 %v4095
  %v4097 = vpop.xlane.xlu0 %4096
  %v4098 = vsel %vm72, %v4083, 0.0
  %4099 = vadd.xlane.f32.xlu0 %v4098
  %v4100 = vpop.xlane.xlu0 %4099
  %v4101 = vsel %vm72, %v4084, 0.0
  %4102 = vadd.xlane.f32.xlu0 %v4101
  %v4103 = vpop.xlane.xlu0 %4102
  %v4104 = vsel %vm72, %v4085, 0.0
  %4105 = vadd.xlane.f32.xlu0 %v4104
  %v4106 = vpop.xlane.xlu0 %4105
  %v4107 = vsel %vm72, %v4086, 0.0
  %4108 = vadd.xlane.f32.xlu0 %v4107
  %v4109 = vpop.xlane.xlu0 %4108
  %v4110 = vsel %vm72, %v4087, 0.0
  %4111 = vadd.xlane.f32.xlu0 %v4110
  %v4112 = vpop.xlane.xlu0 %4111
  %v4113 = vsel %vm72, %v4088, 0.0
  %4114 = vadd.xlane.f32.xlu0 %v4113
  %v4115 = vpop.xlane.xlu0 %4114
  %v4116 = vsel %vm72, %v4089, 0.0
  %4117 = vadd.xlane.f32.xlu0 %v4116
  %v4118 = vpop.xlane.xlu0 %4117
  %v4119 = vsel %vm72, %v4090, 0.0
  %4120 = vadd.xlane.f32.xlu0 %v4119
  %v4121 = vpop.xlane.xlu0 %4120
  %v4122 = vmul.f32 %v4094, %v103
  %v4123 = vmul.f32 %v4097, %v103
  %v4124 = vmul.f32 %v4100, %v103
  %v4125 = vmul.f32 %v4103, %v103
  %v4126 = vmul.f32 %v4106, %v103
  %v4127 = vmul.f32 %v4109, %v103
  %v4128 = vmul.f32 %v4112, %v103
  %v4129 = vmul.f32 %v4115, %v103
  %v4130 = vmul.f32 %v4118, %v103
  %v4131 = vmul.f32 %v4121, %v103
  %v4132 = vsub.f32 %v4081, %v4122
  %v4133 = vsub.f32 %v4082, %v4123
  %v4134 = vsub.f32 %v4083, %v4124
  %v4135 = vsub.f32 %v4084, %v4125
  %v4136 = vsub.f32 %v4085, %v4126
  %v4137 = vsub.f32 %v4086, %v4127
  %v4138 = vsub.f32 %v4087, %v4128
  %v4139 = vsub.f32 %v4088, %v4129
  %v4140 = vsub.f32 %v4089, %v4130
  %v4141 = vsub.f32 %v4090, %v4131
  %v4142 = vmul.f32 %v4132, %v4132
  %v4143 = vmul.f32 %v4133, %v4133
  %v4144 = vmul.f32 %v4134, %v4134
  %v4145 = vmul.f32 %v4135, %v4135
  %v4146 = vmul.f32 %v4136, %v4136
  %v4147 = vmul.f32 %v4137, %v4137
  %v4148 = vmul.f32 %v4138, %v4138
  %v4149 = vmul.f32 %v4139, %v4139
  %v4150 = vmul.f32 %v4140, %v4140
  %v4151 = vmul.f32 %v4141, %v4141
  %v4152 = vsel %vm72, %v4142, 0.0
  %4153 = vadd.xlane.f32.xlu0 %v4152
  %v4154 = vpop.xlane.xlu0 %4153
  %v4155 = vsel %vm72, %v4143, 0.0
  %4156 = vadd.xlane.f32.xlu0 %v4155
  %v4157 = vpop.xlane.xlu0 %4156
  %v4158 = vsel %vm72, %v4144, 0.0
  %4159 = vadd.xlane.f32.xlu0 %v4158
  %v4160 = vpop.xlane.xlu0 %4159
  %v4161 = vsel %vm72, %v4145, 0.0
  %4162 = vadd.xlane.f32.xlu0 %v4161
  %v4163 = vpop.xlane.xlu0 %4162
  %v4164 = vsel %vm72, %v4146, 0.0
  %4165 = vadd.xlane.f32.xlu0 %v4164
  %v4166 = vpop.xlane.xlu0 %4165
  %v4167 = vsel %vm72, %v4147, 0.0
  %4168 = vadd.xlane.f32.xlu0 %v4167
  %v4169 = vpop.xlane.xlu0 %4168
  %v4170 = vsel %vm72, %v4148, 0.0
  %4171 = vadd.xlane.f32.xlu0 %v4170
  %v4172 = vpop.xlane.xlu0 %4171
  %v4173 = vsel %vm72, %v4149, 0.0
  %4174 = vadd.xlane.f32.xlu0 %v4173
  %v4175 = vpop.xlane.xlu0 %4174
  %v4176 = vsel %vm72, %v4150, 0.0
  %4177 = vadd.xlane.f32.xlu0 %v4176
  %v4178 = vpop.xlane.xlu0 %4177
  %v4179 = vsel %vm72, %v4151, 0.0
  %4180 = vadd.xlane.f32.xlu0 %v4179
  %v4181 = vpop.xlane.xlu0 %4180
  %v4182 = vmul.f32 %v4154, %v103
  %v4183 = vmul.f32 %v4157, %v103
  %v4184 = vmul.f32 %v4160, %v103
  %v4185 = vmul.f32 %v4163, %v103
  %v4186 = vmul.f32 %v4166, %v103
  %v4187 = vmul.f32 %v4169, %v103
  %v4188 = vmul.f32 %v4172, %v103
  %v4189 = vmul.f32 %v4175, %v103
  %v4190 = vmul.f32 %v4178, %v103
  %v4191 = vmul.f32 %v4181, %v103
  %v4192 = vadd.f32 %v4182, 1e-05
  %v4193 = vadd.f32 %v4183, 1e-05
  %v4194 = vadd.f32 %v4184, 1e-05
  %v4195 = vadd.f32 %v4185, 1e-05
  %v4196 = vadd.f32 %v4186, 1e-05
  %v4197 = vadd.f32 %v4187, 1e-05
  %v4198 = vadd.f32 %v4188, 1e-05
  %v4199 = vadd.f32 %v4189, 1e-05
  %v4200 = vadd.f32 %v4190, 1e-05
  %v4201 = vadd.f32 %v4191, 1e-05
  %v4202 = vrsqrt.pop %v4192
  %v4203 = vrsqrt.pop %v4193
  %v4204 = vrsqrt.pop %v4194
  %v4205 = vrsqrt.pop %v4195
  %v4206 = vrsqrt.pop %v4196
  %v4207 = vrsqrt.pop %v4197
  %v4208 = vrsqrt.pop %v4198
  %v4209 = vrsqrt.pop %v4199
  %v4210 = vrsqrt.pop %v4200
  %v4211 = vrsqrt.pop %v4201
  %v4212 = vmul.f32 %v4132, %v4202
  %v4213 = vmul.f32 %v4133, %v4203
  %v4214 = vmul.f32 %v4134, %v4204
  %v4215 = vmul.f32 %v4135, %v4205
  %v4216 = vmul.f32 %v4136, %v4206
  %v4217 = vmul.f32 %v4137, %v4207
  %v4218 = vmul.f32 %v4138, %v4208
  %v4219 = vmul.f32 %v4139, %v4209
  %v4220 = vmul.f32 %v4140, %v4210
  %v4221 = vmul.f32 %v4141, %v4211
  %v4222 = vlaneseq
  %v4223 = vshrl.u32 %v4222, 7
  %v4224 = vsub.s32 0, %v4223
  %v4225 = vrot.slane %v4091, %v4224
  %v4226 = vmul.f32 %v4212, %v4225
  %v4227 = vmul.f32 %v4213, %v4225
  %v4228 = vmul.f32 %v4214, %v4225
  %v4229 = vmul.f32 %v4215, %v4225
  %v4230 = vmul.f32 %v4216, %v4225
  %v4231 = vmul.f32 %v4217, %v4225
  %v4232 = vmul.f32 %v4218, %v4225
  %v4233 = vmul.f32 %v4219, %v4225
  %v4234 = vmul.f32 %v4220, %v4225
  %v4235 = vmul.f32 %v4221, %v4225
  %v4236 = vlaneseq
  %v4237 = vshrl.u32 %v4236, 7
  %v4238 = vsub.s32 1, %v4237
  %v4239 = vrot.slane %v4091, %v4238
  %v4240 = vadd.f32 %v4226, %v4239
  %v4241 = vadd.f32 %v4227, %v4239
  %v4242 = vadd.f32 %v4228, %v4239
  %v4243 = vadd.f32 %v4229, %v4239
  %v4244 = vadd.f32 %v4230, %v4239
  %v4245 = vadd.f32 %v4231, %v4239
  %v4246 = vadd.f32 %v4232, %v4239
  %v4247 = vadd.f32 %v4233, %v4239
  %v4248 = vadd.f32 %v4234, %v4239
  %v4249 = vadd.f32 %v4235, %v4239
  %v4250 = vpack.c.bf16 %v4241, %v4240
  %v4251 = vpack.c.bf16 %v4243, %v4242
  %v4252 = vpack.c.bf16 %v4245, %v4244
  %v4253 = vpack.c.bf16 %v4247, %v4246
  %v4254 = vpack.c.bf16 %v4249, %v4248
  %v4255 = vld [vmem:[%s7] sm:$0xf]
  %v4256 = vld [vmem:[%s7 + $0x4] sm:$0xf]
  %v4257 = vld [vmem:[%s7 + $0x8] sm:$0xf]
  %v4258 = vld [vmem:[%s7 + $0xc] sm:$0xf]
  %v4259 = vld [vmem:[%s8] sm:$0x1]
  %v4261 = vlaneseq
  %v4262 = vshrl.u32 %v4261, 7
  %v4263 = vsub.s32 0, %v4262
  %v4264 = vrot.slane %v4259, %v4263
  %v4270 = vunpack.c.l.b16 %v4255
  %v4271 = vunpack.c.l.b16 %v4256
  %v4272 = vunpack.c.l.b16 %v4257
  %v4273 = vunpack.c.l.b16 %v4258
  %v4274 = vpack.c.b16 %v4271, %v4270
  %v4275 = vpack.c.b16 %v4273, %v4272
  %v4279 = vsel %vm72, %v4250, 0
  %v4282 = vsel %vm72, %v4251, 0
  %v4285 = vsel %vm72, %v4252, 0
  %v4288 = vsel %vm72, %v4253, 0
  %v4291 = vsel %vm72, %v4254, 0
  %4293 = vmatprep.subr.bf16.mxu0 0
  %4294 = vmatpush1.bf16.msra.mxu0 0
  %4295 = vmatprep.subr.bf16.mxu0 0
  %4296 = vmatpush1.bf16.msra.mxu0 0
  %4297 = vmatprep.subr.bf16.mxu0 0
  %4298 = vmatpush1.bf16.msra.mxu0 0
  %4299 = vmatprep.subr.bf16.mxu0 0
  %4300 = vmatpush1.bf16.msra.mxu0 0
  %4301 = vmatprep.subr.bf16.mxu0 0
  %4302 = vmatpush1.bf16.msra.mxu0 0
  %4303 = vmatprep.subr.bf16.mxu0 0
  %4304 = vmatpush1.bf16.msra.mxu0 0
  %4305 = vmatprep.subr.bf16.mxu0 0
  %4306 = vmatpush1.bf16.msra.mxu0 %v4275
  %4307 = vmatprep.subr.bf16.mxu0 0
  %4308 = vmatpush1.bf16.msra.mxu0 %v4274
  %4309 = vmatprep.subr.bf16.mxu0 0
  %4310 = vmatpush2.bf16.msra.mxu0 0
  %4311 = vmatprep.subr.bf16.mxu0 0
  %4312 = vmatpush2.bf16.msra.mxu0 0
  %4313 = vmatprep.subr.bf16.mxu0 0
  %4314 = vmatpush2.bf16.msra.mxu0 0
  %4315 = vmatprep.subr.bf16.mxu0 0
  %4316 = vmatpush2.bf16.msra.mxu0 0
  %4317 = vmatprep.subr.bf16.mxu0 0
  %4318 = vmatpush2.bf16.msra.mxu0 0
  %4319 = vmatprep.subr.bf16.mxu0 0
  %4320 = vmatpush2.bf16.msra.mxu0 0
  %4321 = vmatprep.subr.bf16.mxu0 0
  %4322 = vmatpush2.bf16.msra.mxu0 0
  %4323 = vmatprep.subr.bf16.mxu0 0
  %4324 = vmatpush2.bf16.msra.mxu0 0
  %4325 = vmatprep.mubr.bf16.mxu0 0
  %4326 = vmatmul.mubr.bf16.gmra.mxu0 %v4279
  %v4327 = vpop.f32.mrf.mxu0
  %v4328 = vadd.f32 %v4264, %v4327
  %v4329 = vpop.f32.mrf.mxu0
  %v4330 = vpop.f32.mrf.mxu0
  %v4331 = vadd.f32 %v4264, %v4330
  %v4332 = vpop.f32.mrf.mxu0
  %4333 = vmatprep.mubr.bf16.mxu0 0
  %4334 = vmatmul.mubr.bf16.gmra.mxu0 %v4282
  %v4335 = vpop.f32.mrf.mxu0
  %v4336 = vadd.f32 %v4264, %v4335
  %v4337 = vpop.f32.mrf.mxu0
  %v4338 = vpop.f32.mrf.mxu0
  %v4339 = vadd.f32 %v4264, %v4338
  %v4340 = vpop.f32.mrf.mxu0
  %4341 = vmatprep.mubr.bf16.mxu0 0
  %4342 = vmatmul.mubr.bf16.gmra.mxu0 %v4285
  %v4343 = vpop.f32.mrf.mxu0
  %v4344 = vadd.f32 %v4264, %v4343
  %v4345 = vpop.f32.mrf.mxu0
  %v4346 = vpop.f32.mrf.mxu0
  %v4347 = vadd.f32 %v4264, %v4346
  %v4348 = vpop.f32.mrf.mxu0
  %4349 = vmatprep.mubr.bf16.mxu0 0
  %4350 = vmatmul.mubr.bf16.gmra.mxu0 %v4288
  %v4351 = vpop.f32.mrf.mxu0
  %v4352 = vadd.f32 %v4264, %v4351
  %v4353 = vpop.f32.mrf.mxu0
  %v4354 = vpop.f32.mrf.mxu0
  %v4355 = vadd.f32 %v4264, %v4354
  %v4356 = vpop.f32.mrf.mxu0
  %4357 = vmatprep.mubr.bf16.mxu0 0
  %4358 = vmatmul.mubr.bf16.gmra.mxu0 %v4291
  %v4359 = vpop.f32.mrf.mxu0
  %v4360 = vadd.f32 %v4264, %v4359
  %v4361 = vpop.f32.mrf.mxu0
  %v4362 = vpop.f32.mrf.mxu0
  %v4363 = vadd.f32 %v4264, %v4362
  %v4364 = vpop.f32.mrf.mxu0
  %4365 = vdwg.mxu0
  %4366 = vst [vmem:[%s10] sm:$0xff] %v4328
  %4367 = vst [vmem:[%s10 + $0x8] sm:$0xff] %v4331
  %4368 = vst [vmem:[%s10 + $0x10] sm:$0xff] %v4336
  %4369 = vst [vmem:[%s10 + $0x18] sm:$0xff] %v4339
  %4370 = vst [vmem:[%s10 + $0x20] sm:$0xff] %v4344
  %4371 = vst [vmem:[%s10 + $0x28] sm:$0xff] %v4347
  %4372 = vst [vmem:[%s10 + $0x30] sm:$0xff] %v4352
  %4373 = vst [vmem:[%s10 + $0x38] sm:$0xff] %v4355
  %4374 = vst [vmem:[%s10 + $0x40] sm:$0xff] %v4360
  %4375 = vst [vmem:[%s10 + $0x48] sm:$0xff] %v4363
  // Predicated region
  $region42: #{ge_transformer_forward.1} parent=0 // pred_check
    _
  $region43: #{ge_transformer_forward.1} parent=0 // pred_check_branch
    %4377 = sbr.rel (0) target = $region45
  $region44: #{ge_transformer_forward.1} parent=0 // pred_region
    _
  $region45: #{ge_transformer_forward.1} parent=0 // pred_fallthru
    _
  // Predicated region
  $region46: #{ge_transformer_forward.1} parent=0 // pred_check
    _
  $region47: #{ge_transformer_forward.1} parent=0 // pred_check_branch
    %4379 = sbr.rel (0) target = $region49
  $region48: #{ge_transformer_forward.1} parent=0 // pred_region
    _
  $region49: #{ge_transformer_forward.1} parent=0 // pred_fallthru
    _

</llo_original>
